<compile_context>
chip_gen: v6e
topology: v6e:2x2x1
jax: 0.10.0
libtpu: 0.0.40
codegen_flags: <defaults>
</compile_context>

<pallas_src>
import jax
import jax.numpy as jnp
import numpy as np
from jax import lax
from jax.experimental import pallas as pl
from jax.experimental.pallas import tpu as pltpu


# =============================================================================
# PPM: all dilation branches of one modality fused into a single grid step.
# =============================================================================
def _make_ppm_kernel(Nb, BHW):
    def ppm_kernel(xcol_ref, w_ref, b_ref, o_ref):
        # xcol_ref: (1, Nb, Cin*9, B*HWp) bf16   w_ref: (1, Nb, C, Cin*9) bf16
        # b_ref   : (1, Nb, C, 1) f32            o_ref: (1, C, Nb*B*HWp) f32
        for n in range(Nb):
            y = jnp.dot(w_ref[0, n], xcol_ref[0, n],
                        preferred_element_type=jnp.float32) + b_ref[0, n]
            o_ref[0, :, n * BHW:(n + 1) * BHW] = jnp.maximum(y, 0.0).astype(o_ref.dtype)
    return ppm_kernel


def ppm_all(xcol_all, w_all, b_all):
    """xcol_all: (2, Nb, Cin*9, B*HWp) -> (2, C, Nb*B*HWp) graph-ready layout."""
    M, Nb, K, BHW = xcol_all.shape
    C = w_all.shape[2]
    return pl.pallas_call(
        _make_ppm_kernel(Nb, BHW),
        out_shape=jax.ShapeDtypeStruct((M, C, Nb * BHW), jnp.float32),
        grid_spec=pltpu.PrefetchScalarGridSpec(
            num_scalar_prefetch=0,
            grid=(M,),
            in_specs=[
                pl.BlockSpec((1, Nb, K, BHW), lambda m: (m, 0, 0, 0)),
                pl.BlockSpec((1, Nb, C, K), lambda m: (m, 0, 0, 0)),
                pl.BlockSpec((1, Nb, C, 1), lambda m: (m, 0, 0, 0)),
            ],
            out_specs=pl.BlockSpec((1, C, Nb * BHW), lambda m: (m, 0, 0)),
        ),
        compiler_params=pltpu.CompilerParams(
            dimension_semantics=("parallel",)),
    )(xcol_all, w_all, b_all)


def _build_xcol(x, d):
    """x: (B, Cin, H, W) -> (Cin*9, B, H*W) im2col for a 3x3 conv, pad=dilation=d."""
    B, Cin, H, W = x.shape
    xp = jnp.pad(x, ((0, 0), (0, 0), (d, d), (d, d)))
    taps = [xp[:, :, ky * d:ky * d + H, kx * d:kx * d + W]
            for ky in range(3) for kx in range(3)]
    xcol = jnp.stack(taps, axis=2).reshape(B, Cin * 9, H * W)   # rows: (Cin, ky, kx)
    return jnp.transpose(xcol, (1, 0, 2))                       # (Cin*9, B, HW)


# =============================================================================
# GraphModel: both modalities (grid axis), all batches (folded onto lanes) and
# ALL n_iter iterations fused into a single pallas_call.
# =============================================================================
def _make_graph_kernel(N, C, BHW, n_iter):
    G = N - 1
    others = [[j for j in range(N) if j != i] for i in range(N)]
    fast = (C % G == 0)   # PyTorch gate index (g*C + c) % G collapses to c % G

    def graph_kernel(f_ref, cw_ref, w1_ref, wqh_ref, bzr_ref, bq_ref, gamma_ref,
                     sel_ref, o_ref, partner_ref):
        cw = cw_ref[0]        # (G, C)    bf16  grouped-1x1 gate conv (C_wgt)
        w1 = w1_ref[0]        # (3C, 2C)  bf16  [[Wz_m Wz_h];[Wr_m Wr_h];[Wq_m 0]]
        wqh = wqh_ref[0]      # (C, C)    bf16  Wq_h (applied to r*h)
        bzr = bzr_ref[0]      # (2C, 1)   f32
        bq = bq_ref[0]        # (C, 1)    f32
        gamma = gamma_ref[pl.program_id(0)]   # scalar f32 from SMEM

        def one_iter(_, cur):
            cur_bf = cur.astype(jnp.bfloat16)
            # Gate logits for all nodes / batches in ONE matmul (grouped 1x1 conv).
            p = jnp.dot(cw, cur_bf, preferred_element_type=jnp.float32)  # (G, N*B*HWp)
            # partner[g, i-block] = p[g, others[i][g]-block]  (lane-block copies)
            for i in range(N):
                for g in range(G):
                    j = others[i][g]
                    partner_ref[g:g + 1, i * BHW:(i + 1) * BHW] = (
                        p[g:g + 1, j * BHW:(j + 1) * BHW])
            # One full-width subtract + sigmoid (VPU + EUP), no per-row slices/concats.
            sig = jax.nn.sigmoid(p - partner_ref[...])                   # (G, N*B*HWp)

            if fast:
                # gate row c == sig[c % G] (independent of the partner index), so the
                # message collapses to (sum of the other nodes) * tiled sigmoid.
                gates = jnp.concatenate([sig] * (C // G), axis=0)        # (C, N*B*HWp)
                total = cur[:, 0:BHW]
                for j in range(1, N):
                    total = total + cur[:, j * BHW:(j + 1) * BHW]
                total_t = jnp.concatenate([total] * N, axis=1)           # (C, N*B*HWp)
                m = (total_t - cur) * gates
            else:
                # General channel interleave via ONE stacked one-hot selection matmul.
                gates_all = jnp.dot(sel_ref[...], sig,
                                    preferred_element_type=jnp.float32)  # (G*C, N*B*HWp)
                parts = []
                for i in range(N):
                    mi = None
                    for g in range(G):
                        j = others[i][g]
                        t = (cur[:, j * BHW:(j + 1) * BHW]
                             * gates_all[g * C:(g + 1) * C, i * BHW:(i + 1) * BHW])
                        mi = t if mi is None else mi + t
                    parts.append(mi)
                m = jnp.concatenate(parts, axis=1)

            # ConvGRU (kernel_size=1), all N nodes and B batches on the lane axis.
            x = jnp.concatenate([m.astype(jnp.bfloat16), cur_bf], axis=0)  # (2C, .)
            a = jnp.dot(w1, x, preferred_element_type=jnp.float32)          # (3C, .)
            zr = jax.nn.sigmoid(a[:2 * C] + bzr)
            z = zr[:C]
            r = zr[C:2 * C]
            q = jnp.tanh(a[2 * C:]
                         + jnp.dot(wqh, (r * cur).astype(jnp.bfloat16),
                                   preferred_element_type=jnp.float32)
                         + bq)
            h_new = (1.0 - z) * cur + z * q
            return h_new * gamma + cur          # pred = GRU(m, h) * gamma + base

        cur = f_ref[0]
        if n_iter <= 4:                         # small static count: unrolled
            for _ in range(n_iter):
                cur = one_iter(0, cur)
        else:                                   # large count: bound live ranges
            cur = lax.fori_loop(0, n_iter, one_iter, cur)
        o_ref[0] = cur.astype(o_ref.dtype)

    return graph_kernel


def graph_all(feat, gp, N, n_iter):
    """feat: (2, C, N*B*HWp) -> (2, C, N*B*HWp); n_iter GraphModel steps in-kernel."""
    M, C, NBHW = feat.shape
    BHW = NBHW // N
    G = N - 1
    return pl.pallas_call(
        _make_graph_kernel(N, C, BHW, n_iter),
        out_shape=jax.ShapeDtypeStruct((M, C, NBHW), jnp.float32),
        grid_spec=pltpu.PrefetchScalarGridSpec(
            num_scalar_prefetch=0,
            grid=(M,),
            in_specs=[
                pl.BlockSpec((1, C, NBHW), lambda m: (m, 0, 0)),
                pl.BlockSpec((1, G, C), lambda m: (m, 0, 0)),
                pl.BlockSpec((1, 3 * C, 2 * C), lambda m: (m, 0, 0)),
                pl.BlockSpec((1, C, C), lambda m: (m, 0, 0)),
                pl.BlockSpec((1, 2 * C, 1), lambda m: (m, 0, 0)),
                pl.BlockSpec((1, C, 1), lambda m: (m, 0, 0)),
                pl.BlockSpec(memory_space=pltpu.MemorySpace.SMEM),   # gamma (2,)
                pl.BlockSpec((G * C, G), lambda m: (0, 0)),          # fallback one-hot
            ],
            out_specs=pl.BlockSpec((1, C, NBHW), lambda m: (m, 0, 0)),
            scratch_shapes=[pltpu.VMEM((G, NBHW), jnp.float32)],      # partner logits
        ),
        compiler_params=pltpu.CompilerParams(
            dimension_semantics=("parallel",)),
    )(feat, gp["cw"], gp["w1"], gp["wqh"], gp["bzr"], gp["bq"],
      gp["gamma"], gp["sel"])


# =============================================================================
# Parameter packing (trace-time glue): BN fold, fused GRU weight stack, bf16 cast.
# =============================================================================
def prepare_params(raw, dila, eps=1e-5):
    N = len(dila)
    G = N - 1

    def fold_bn(br):
        Cout = br["w"].shape[0]
        scale = br["bn_gamma"] / jnp.sqrt(br["bn_var"] + eps)
        w_eff = br["w"].reshape(Cout, -1) * scale[:, None]
        b_eff = (br["bn_beta"] - br["bn_mean"] * scale)[:, None]
        return w_eff, b_eff

    ppm_w, ppm_b = [], []
    for mod in ("ppm_rgb", "ppm_dep"):
        ws, bs = zip(*[fold_bn(br) for br in raw[mod]])
        ppm_w.append(jnp.stack(list(ws)))
        ppm_b.append(jnp.stack(list(bs)))
    ppm_w = jnp.stack(ppm_w).astype(jnp.bfloat16)   # (2, N, C, Cin*9)
    ppm_b = jnp.stack(ppm_b).astype(jnp.float32)    # (2, N, C, 1)

    C = raw["graph_rgb"]["wz"].shape[0]

    def pack_graph(g):
        # ConvGRU input order is [message, hidden]; z/r/q(message) rows fused into
        # one (3C, 2C) matrix (q hidden-side block zeroed; Wq_h stays separate
        # because the candidate uses r*h).
        wq_m = g["wq"][:, :C]
        w1 = jnp.concatenate(
            [g["wz"], g["wr"],
             jnp.concatenate([wq_m, jnp.zeros((C, C), jnp.float32)], axis=1)], axis=0)
        wqh = g["wq"][:, C:]
        bzr = jnp.concatenate([g["bz"], g["br"]], axis=0)
        return g["cw"], w1, wqh, bzr, g["bq"], g["gamma"].reshape(())

    packed = [pack_graph(raw[m]) for m in ("graph_rgb", "graph_dep")]
    cw, w1, wqh, bzr, bq, gamma = (jnp.stack([pk[i] for pk in packed])
                                   for i in range(6))

    # Static one-hot map for the general (C % G != 0) interleave fallback.
    sel = np.zeros((G * C, G), np.float32)
    for g in range(G):
        for c in range(C):
            sel[g * C + c, (g * C + c) % G] = 1.0

    graph = dict(cw=cw.astype(jnp.bfloat16), w1=w1.astype(jnp.bfloat16),
                 wqh=wqh.astype(jnp.bfloat16),
                 bzr=bzr.astype(jnp.float32), bq=bq.astype(jnp.float32),
                 gamma=gamma.astype(jnp.float32), sel=jnp.asarray(sel))
    return dict(ppm_w=ppm_w, ppm_b=ppm_b, graph=graph)


# =============================================================================
# GraphReasoning forward (node=False / is_use_ca=False path)
# =============================================================================
def graph_reasoning_forward(feat_rgb, feat_dep, params, dila, n_iter):
    B, _, H, W = feat_rgb.shape
    N = len(dila)
    HW = H * W
    # Pad each (node, batch) spatial block to a lane-aligned width so every lane-block
    # slice / store in both kernels stays unmasked.
    HWp = ((HW + 127) // 128) * 128
    BHW = B * HWp
    p = prepare_params(params, dila)
    C = p["ppm_w"].shape[2]

    # im2col for every (modality, branch) -- XLA glue feeding the fused PPM kernel.
    xcols = []
    for x in (feat_rgb, feat_dep):
        branches = []
        for d in dila:
            xc = _build_xcol(x, int(d))                          # (Cin*9, B, HW)
            xc = jnp.pad(xc, ((0, 0), (0, 0), (0, HWp - HW)))    # lane pad
            branches.append(xc.reshape(-1, BHW))
        xcols.append(jnp.stack(branches, axis=0))
    xcol_all = jnp.stack(xcols, axis=0).astype(jnp.bfloat16)     # (2, N, Cin*9, B*HWp)

    # pallas_call #1: all 2*N PPM branches -> graph-ready (2, C, N*B*HWp) layout.
    feat_nodes = ppm_all(xcol_all, p["ppm_w"], p["ppm_b"])

    # TODO(synk): common.IAM (self.edge) source not provided; identity pass-through.

    # pallas_call #2: both GraphModels, all batches, all n_iter iterations.
    out = graph_all(feat_nodes, p["graph"], N, n_iter)

    def unpack(m):
        res = []
        for n in range(N):
            blk = out[m, :, n * BHW:(n + 1) * BHW].reshape(C, B, HWp)[:, :, :HW]
            res.append(jnp.transpose(blk, (1, 0, 2)).reshape(B, C, H, W))
        return res

    return unpack(0), unpack(1)


# =============================================================================
# Deterministic parameter initialization (shapes follow the PyTorch __init__)
# =============================================================================
def init_params(key, chnn_in, rd_sc, dila):
    chnn = chnn_in // rd_sc
    N = len(dila)
    G = N - 1

    def ppm_params(key):
        branches = []
        for _ in range(N):
            key, k1, k2, k3, k4, k5 = jax.random.split(key, 6)
            branches.append(dict(
                w=0.1 * jax.random.normal(k1, (chnn, chnn_in, 3, 3), jnp.float32),
                bn_gamma=1.0 + 0.1 * jax.random.normal(k2, (chnn,), jnp.float32),
                bn_beta=0.1 * jax.random.normal(k3, (chnn,), jnp.float32),
                bn_mean=0.1 * jax.random.normal(k4, (chnn,), jnp.float32),
                bn_var=1.0 + 0.5 * jax.random.uniform(k5, (chnn,), jnp.float32),
            ))
        return branches, key

    def graph_params(key):
        key, k1, k2, k3, k4, k5, k6, k7 = jax.random.split(key, 8)
        return dict(
            cw=0.1 * jax.random.normal(k1, (G, chnn), jnp.float32),          # C_wgt
            wz=0.1 * jax.random.normal(k2, (chnn, 2 * chnn), jnp.float32),   # GRU update
            wr=0.1 * jax.random.normal(k3, (chnn, 2 * chnn), jnp.float32),   # GRU reset
            wq=0.1 * jax.random.normal(k4, (chnn, 2 * chnn), jnp.float32),   # GRU cand.
            bz=0.1 * jax.random.normal(k5, (chnn, 1), jnp.float32),
            br=0.1 * jax.random.normal(k6, (chnn, 1), jnp.float32),
            bq=0.1 * jax.random.normal(k7, (chnn, 1), jnp.float32),
            # PyTorch init is torch.zeros(1); nonzero so the GRU path is exercised.
            gamma=jnp.full((1, 1), 0.5, jnp.float32),
        ), key

    ppm_rgb, key = ppm_params(key)
    ppm_dep, key = ppm_params(key)
    graph_rgb, key = graph_params(key)
    graph_dep, key = graph_params(key)
    return dict(ppm_rgb=ppm_rgb, ppm_dep=ppm_dep,
                graph_rgb=graph_rgb, graph_dep=graph_dep)


if __name__ == "__main__":
    # Small shapes consistent with the module: chnn_in=8, rd_sc=2 -> chnn=4 per node.
    B, chnn_in, H, W = 2, 8, 16, 16
    rd_sc = 2
    dila = (1, 2, 3)   # n_node = 3
    n_iter = 2

    key = jax.random.PRNGKey(0)
    key, kr, kd = jax.random.split(key, 3)
    feat_rgb = jax.random.normal(kr, (B, chnn_in, H, W), jnp.float32)
    feat_dep = jax.random.normal(kd, (B, chnn_in, H, W), jnp.float32)
    # nd_rgb / nd_dep are only used when node=True; forward here uses node=False.
    params = init_params(key, chnn_in, rd_sc, dila)

    fwd = jax.jit(graph_reasoning_forward, static_argnums=(3, 4))
    out_rgb, out_dep = fwd(feat_rgb, feat_dep, params, dila, n_iter)
    jax.block_until_ready((out_rgb, out_dep))

    chnn = chnn_in // rd_sc
    assert len(out_rgb) == len(dila) and len(out_dep) == len(dila)
    assert all(fm.shape == (B, chnn, H, W) for fm in out_rgb + out_dep)
    assert all(bool(jnp.all(jnp.isfinite(fm))) for fm in out_rgb + out_dep)
    print("KERNEL_OK")
</pallas_src>

<mosaic_0001>
module attributes {stable_mosaic.version = 11 : i64} {
  func.func @ppm_kernel(%arg0: i32, %arg1: memref<1x3x72x512xbf16, #tpu.memory_space<vmem>>, %arg2: memref<1x3x4x72xbf16, #tpu.memory_space<vmem>>, %arg3: memref<1x3x4x1xf32, #tpu.memory_space<vmem>>, %arg4: memref<1x4x1536xf32, #tpu.memory_space<vmem>>) attributes {dimension_semantics = [#tpu.dimension_semantics<parallel>], iteration_bounds = array<i64: 2>, scalar_prefetch = 0 : i64, scratch_operands = 0 : i64, tpu.core_type = #tpu.core_type<tc>, window_params = [{transform_indices = @transform_0, window_bounds = array<i64: 1, 3, 72, 512>}, {transform_indices = @transform_1, window_bounds = array<i64: 1, 3, 4, 72>}, {transform_indices = @transform_2, window_bounds = array<i64: 1, 3, 4, 1>}, {transform_indices = @transform_3, window_bounds = array<i64: 1, 4, 1536>}]} {
    %c0 = arith.constant 0 : index
    %c0_0 = arith.constant 0 : index
    %c0_1 = arith.constant 0 : index
    %c0_2 = arith.constant 0 : index
    %0 = vector.load %arg2[%c0, %c0_0, %c0_1, %c0_2] : memref<1x3x4x72xbf16, #tpu.memory_space<vmem>>, vector<1x1x4x72xbf16>
    %1 = vector.shape_cast %0 : vector<1x1x4x72xbf16> to vector<4x72xbf16>
    %c0_3 = arith.constant 0 : index
    %c0_4 = arith.constant 0 : index
    %c0_5 = arith.constant 0 : index
    %c0_6 = arith.constant 0 : index
    %2 = vector.load %arg1[%c0_3, %c0_4, %c0_5, %c0_6] : memref<1x3x72x512xbf16, #tpu.memory_space<vmem>>, vector<1x1x72x512xbf16>
    %3 = vector.shape_cast %2 : vector<1x1x72x512xbf16> to vector<72x512xbf16>
    %cst = arith.constant dense<0.000000e+00> : vector<4x512xf32>
    %4 = tpu.matmul %1, %3, %cst {dimension_numbers = #tpu.dot_dimension_numbers<[1], [0], [0], [1], [0, 0, 1, 1], [], []>} : vector<4x72xbf16>, vector<72x512xbf16>, vector<4x512xf32> -> vector<4x512xf32>
    %c0_7 = arith.constant 0 : index
    %c0_8 = arith.constant 0 : index
    %c0_9 = arith.constant 0 : index
    %c0_10 = arith.constant 0 : index
    %5 = vector.load %arg3[%c0_7, %c0_8, %c0_9, %c0_10] : memref<1x3x4x1xf32, #tpu.memory_space<vmem>>, vector<1x1x4x1xf32>
    %6 = vector.shape_cast %5 : vector<1x1x4x1xf32> to vector<4x1xf32>
    %7 = vector.broadcast %6 : vector<4x1xf32> to vector<4x512xf32>
    %8 = arith.addf %4, %7 : vector<4x512xf32>
    %cst_11 = arith.constant 0.000000e+00 : f32
    %9 = vector.broadcast %cst_11 : f32 to vector<4x512xf32>
    %10 = arith.maximumf %8, %9 : vector<4x512xf32>
    %c0_12 = arith.constant 0 : index
    %c0_13 = arith.constant 0 : index
    %c0_14 = arith.constant 0 : index
    %11 = vector.load %arg4[%c0_12, %c0_13, %c0_14] : memref<1x4x1536xf32, #tpu.memory_space<vmem>>, vector<1x4x512xf32>
    %12 = vector.shape_cast %11 : vector<1x4x512xf32> to vector<4x512xf32>
    %13 = vector.shape_cast %10 : vector<4x512xf32> to vector<1x4x512xf32>
    tpu.vector_store %arg4[%c0_12, %c0_13, %c0_14], %13 {strides = array<i32>} : memref<1x4x1536xf32, #tpu.memory_space<vmem>>, vector<1x4x512xf32>,
    %c0_15 = arith.constant 0 : index
    %c1 = arith.constant 1 : index
    %c0_16 = arith.constant 0 : index
    %c0_17 = arith.constant 0 : index
    %14 = vector.load %arg2[%c0_15, %c1, %c0_16, %c0_17] : memref<1x3x4x72xbf16, #tpu.memory_space<vmem>>, vector<1x1x4x72xbf16>
    %15 = vector.shape_cast %14 : vector<1x1x4x72xbf16> to vector<4x72xbf16>
    %c0_18 = arith.constant 0 : index
    %c1_19 = arith.constant 1 : index
    %c0_20 = arith.constant 0 : index
    %c0_21 = arith.constant 0 : index
    %16 = vector.load %arg1[%c0_18, %c1_19, %c0_20, %c0_21] : memref<1x3x72x512xbf16, #tpu.memory_space<vmem>>, vector<1x1x72x512xbf16>
    %17 = vector.shape_cast %16 : vector<1x1x72x512xbf16> to vector<72x512xbf16>
    %cst_22 = arith.constant dense<0.000000e+00> : vector<4x512xf32>
    %18 = tpu.matmul %15, %17, %cst_22 {dimension_numbers = #tpu.dot_dimension_numbers<[1], [0], [0], [1], [0, 0, 1, 1], [], []>} : vector<4x72xbf16>, vector<72x512xbf16>, vector<4x512xf32> -> vector<4x512xf32>
    %c0_23 = arith.constant 0 : index
    %c1_24 = arith.constant 1 : index
    %c0_25 = arith.constant 0 : index
    %c0_26 = arith.constant 0 : index
    %19 = vector.load %arg3[%c0_23, %c1_24, %c0_25, %c0_26] : memref<1x3x4x1xf32, #tpu.memory_space<vmem>>, vector<1x1x4x1xf32>
    %20 = vector.shape_cast %19 : vector<1x1x4x1xf32> to vector<4x1xf32>
    %21 = vector.broadcast %20 : vector<4x1xf32> to vector<4x512xf32>
    %22 = arith.addf %18, %21 : vector<4x512xf32>
    %cst_27 = arith.constant 0.000000e+00 : f32
    %23 = vector.broadcast %cst_27 : f32 to vector<4x512xf32>
    %24 = arith.maximumf %22, %23 : vector<4x512xf32>
    %c0_28 = arith.constant 0 : index
    %c0_29 = arith.constant 0 : index
    %c512 = arith.constant 512 : index
    %25 = vector.load %arg4[%c0_28, %c0_29, %c512] : memref<1x4x1536xf32, #tpu.memory_space<vmem>>, vector<1x4x512xf32>
    %26 = vector.shape_cast %25 : vector<1x4x512xf32> to vector<4x512xf32>
    %27 = vector.shape_cast %24 : vector<4x512xf32> to vector<1x4x512xf32>
    tpu.vector_store %arg4[%c0_28, %c0_29, %c512], %27 {strides = array<i32>} : memref<1x4x1536xf32, #tpu.memory_space<vmem>>, vector<1x4x512xf32>,
    %c0_30 = arith.constant 0 : index
    %c2 = arith.constant 2 : index
    %c0_31 = arith.constant 0 : index
    %c0_32 = arith.constant 0 : index
    %28 = vector.load %arg2[%c0_30, %c2, %c0_31, %c0_32] : memref<1x3x4x72xbf16, #tpu.memory_space<vmem>>, vector<1x1x4x72xbf16>
    %29 = vector.shape_cast %28 : vector<1x1x4x72xbf16> to vector<4x72xbf16>
    %c0_33 = arith.constant 0 : index
    %c2_34 = arith.constant 2 : index
    %c0_35 = arith.constant 0 : index
    %c0_36 = arith.constant 0 : index
    %30 = vector.load %arg1[%c0_33, %c2_34, %c0_35, %c0_36] : memref<1x3x72x512xbf16, #tpu.memory_space<vmem>>, vector<1x1x72x512xbf16>
    %31 = vector.shape_cast %30 : vector<1x1x72x512xbf16> to vector<72x512xbf16>
    %cst_37 = arith.constant dense<0.000000e+00> : vector<4x512xf32>
    %32 = tpu.matmul %29, %31, %cst_37 {dimension_numbers = #tpu.dot_dimension_numbers<[1], [0], [0], [1], [0, 0, 1, 1], [], []>} : vector<4x72xbf16>, vector<72x512xbf16>, vector<4x512xf32> -> vector<4x512xf32>
    %c0_38 = arith.constant 0 : index
    %c2_39 = arith.constant 2 : index
    %c0_40 = arith.constant 0 : index
    %c0_41 = arith.constant 0 : index
    %33 = vector.load %arg3[%c0_38, %c2_39, %c0_40, %c0_41] : memref<1x3x4x1xf32, #tpu.memory_space<vmem>>, vector<1x1x4x1xf32>
    %34 = vector.shape_cast %33 : vector<1x1x4x1xf32> to vector<4x1xf32>
    %35 = vector.broadcast %34 : vector<4x1xf32> to vector<4x512xf32>
    %36 = arith.addf %32, %35 : vector<4x512xf32>
    %cst_42 = arith.constant 0.000000e+00 : f32
    %37 = vector.broadcast %cst_42 : f32 to vector<4x512xf32>
    %38 = arith.maximumf %36, %37 : vector<4x512xf32>
    %c0_43 = arith.constant 0 : index
    %c0_44 = arith.constant 0 : index
    %c1024 = arith.constant 1024 : index
    %39 = vector.load %arg4[%c0_43, %c0_44, %c1024] : memref<1x4x1536xf32, #tpu.memory_space<vmem>>, vector<1x4x512xf32>
    %40 = vector.shape_cast %39 : vector<1x4x512xf32> to vector<4x512xf32>
    %41 = vector.shape_cast %38 : vector<4x512xf32> to vector<1x4x512xf32>
    tpu.vector_store %arg4[%c0_43, %c0_44, %c1024], %41 {strides = array<i32>} : memref<1x4x1536xf32, #tpu.memory_space<vmem>>, vector<1x4x512xf32>,
    return
  }
  func.func @transform_0(%arg0: i32) -> (i32, i32, i32, i32) {
    %c0_i32 = arith.constant 0 : i32
    %c0_i32_0 = arith.constant 0 : i32
    %c0_i32_1 = arith.constant 0 : i32
    %c0_i32_2 = arith.constant 0 : i32
    return %arg0, %c0_i32, %c0_i32_0, %c0_i32_1 : i32, i32, i32, i32
  }
  func.func @transform_1(%arg0: i32) -> (i32, i32, i32, i32) {
    %c0_i32 = arith.constant 0 : i32
    %c0_i32_0 = arith.constant 0 : i32
    %c0_i32_1 = arith.constant 0 : i32
    %c0_i32_2 = arith.constant 0 : i32
    return %arg0, %c0_i32, %c0_i32_0, %c0_i32_1 : i32, i32, i32, i32
  }
  func.func @transform_2(%arg0: i32) -> (i32, i32, i32, i32) {
    %c0_i32 = arith.constant 0 : i32
    %c0_i32_0 = arith.constant 0 : i32
    %c0_i32_1 = arith.constant 0 : i32
    %c0_i32_2 = arith.constant 0 : i32
    return %arg0, %c0_i32, %c0_i32_0, %c0_i32_1 : i32, i32, i32, i32
  }
  func.func @transform_3(%arg0: i32) -> (i32, i32, i32) {
    %c0_i32 = arith.constant 0 : i32
    %c0_i32_0 = arith.constant 0 : i32
    %c0_i32_1 = arith.constant 0 : i32
    return %arg0, %c0_i32, %c0_i32_0 : i32, i32, i32
  }
}

module attributes {stable_mosaic.version = 11 : i64} {
  func.func @graph_kernel(%arg0: i32, %arg1: memref<1x4x1536xf32, #tpu.memory_space<vmem>>, %arg2: memref<1x2x4xbf16, #tpu.memory_space<vmem>>, %arg3: memref<1x12x8xbf16, #tpu.memory_space<vmem>>, %arg4: memref<1x4x4xbf16, #tpu.memory_space<vmem>>, %arg5: memref<1x8x1xf32, #tpu.memory_space<vmem>>, %arg6: memref<1x4x1xf32, #tpu.memory_space<vmem>>, %arg7: memref<2xf32, #tpu.memory_space<smem>>, %arg8: memref<8x2xf32, #tpu.memory_space<vmem>>, %arg9: memref<1x4x1536xf32, #tpu.memory_space<vmem>>, %arg10: memref<2x1536xf32, #tpu.memory_space<vmem>>) attributes {dimension_semantics = [#tpu.dimension_semantics<parallel>], iteration_bounds = array<i64: 2>, scalar_prefetch = 0 : i64, scratch_operands = 1 : i64, tpu.core_type = #tpu.core_type<tc>, window_params = [{transform_indices = @transform_0, window_bounds = array<i64: 1, 4, 1536>}, {transform_indices = @transform_1, window_bounds = array<i64: 1, 2, 4>}, {transform_indices = @transform_2, window_bounds = array<i64: 1, 12, 8>}, {transform_indices = @transform_3, window_bounds = array<i64: 1, 4, 4>}, {transform_indices = @transform_4, window_bounds = array<i64: 1, 8, 1>}, {transform_indices = @transform_5, window_bounds = array<i64: 1, 4, 1>}, {transform_indices = @transform_6, window_bounds = array<i64: 2>}, {pipeline_mode = #tpu.pipeline_mode<synchronous>, transform_indices = @transform_7, window_bounds = array<i64: 8, 2>}, {transform_indices = @transform_8, window_bounds = array<i64: 1, 4, 1536>}]} {
    %c0 = arith.constant 0 : index
    %c0_0 = arith.constant 0 : index
    %c0_1 = arith.constant 0 : index
    %0 = vector.load %arg2[%c0, %c0_0, %c0_1] : memref<1x2x4xbf16, #tpu.memory_space<vmem>>, vector<1x2x4xbf16>
    %1 = vector.shape_cast %0 : vector<1x2x4xbf16> to vector<2x4xbf16>
    %c0_2 = arith.constant 0 : index
    %c0_3 = arith.constant 0 : index
    %c0_4 = arith.constant 0 : index
    %2 = vector.load %arg3[%c0_2, %c0_3, %c0_4] : memref<1x12x8xbf16, #tpu.memory_space<vmem>>, vector<1x12x8xbf16>
    %3 = vector.shape_cast %2 : vector<1x12x8xbf16> to vector<12x8xbf16>
    %c0_5 = arith.constant 0 : index
    %c0_6 = arith.constant 0 : index
    %c0_7 = arith.constant 0 : index
    %4 = vector.load %arg4[%c0_5, %c0_6, %c0_7] : memref<1x4x4xbf16, #tpu.memory_space<vmem>>, vector<1x4x4xbf16>
    %5 = vector.shape_cast %4 : vector<1x4x4xbf16> to vector<4x4xbf16>
    %c0_8 = arith.constant 0 : index
    %c0_9 = arith.constant 0 : index
    %c0_10 = arith.constant 0 : index
    %6 = vector.load %arg5[%c0_8, %c0_9, %c0_10] : memref<1x8x1xf32, #tpu.memory_space<vmem>>, vector<1x8x1xf32>
    %7 = vector.shape_cast %6 : vector<1x8x1xf32> to vector<8x1xf32>
    %c0_11 = arith.constant 0 : index
    %c0_12 = arith.constant 0 : index
    %c0_13 = arith.constant 0 : index
    %8 = vector.load %arg6[%c0_11, %c0_12, %c0_13] : memref<1x4x1xf32, #tpu.memory_space<vmem>>, vector<1x4x1xf32>
    %9 = vector.shape_cast %8 : vector<1x4x1xf32> to vector<4x1xf32>
    %10 = arith.index_cast %arg0 : i32 to index
    %11 = memref.load %arg7[%10] : memref<2xf32, #tpu.memory_space<smem>>
    %c0_14 = arith.constant 0 : index
    %c0_15 = arith.constant 0 : index
    %c0_16 = arith.constant 0 : index
    %12 = vector.load %arg1[%c0_14, %c0_15, %c0_16] : memref<1x4x1536xf32, #tpu.memory_space<vmem>>, vector<1x4x1536xf32>
    %13 = vector.shape_cast %12 : vector<1x4x1536xf32> to vector<4x1536xf32>
    %14 = arith.truncf %13 : vector<4x1536xf32> to vector<4x1536xbf16>
    %cst = arith.constant dense<0.000000e+00> : vector<2x1536xf32>
    %15 = tpu.matmul %1, %14, %cst {dimension_numbers = #tpu.dot_dimension_numbers<[1], [0], [0], [1], [0, 0, 1, 1], [], []>} : vector<2x4xbf16>, vector<4x1536xbf16>, vector<2x1536xf32> -> vector<2x1536xf32>
    %16 = vector.extract_strided_slice %15 {offsets = [0, 512], sizes = [1, 512], strides = [1, 1]} : vector<2x1536xf32> to vector<1x512xf32>
    %c0_17 = arith.constant 0 : index
    %c0_18 = arith.constant 0 : index
    %17 = vector.load %arg10[%c0_17, %c0_18] : memref<2x1536xf32, #tpu.memory_space<vmem>>, vector<1x512xf32>
    tpu.vector_store %arg10[%c0_17, %c0_18], %16 {strides = array<i32>} : memref<2x1536xf32, #tpu.memory_space<vmem>>, vector<1x512xf32>,
    %18 = vector.extract_strided_slice %15 {offsets = [1, 1024], sizes = [1, 512], strides = [1, 1]} : vector<2x1536xf32> to vector<1x512xf32>
    %c1 = arith.constant 1 : index
    %c0_19 = arith.constant 0 : index
    %19 = vector.load %arg10[%c1, %c0_19] : memref<2x1536xf32, #tpu.memory_space<vmem>>, vector<1x512xf32>
    tpu.vector_store %arg10[%c1, %c0_19], %18 {strides = array<i32>} : memref<2x1536xf32, #tpu.memory_space<vmem>>, vector<1x512xf32>,
    %20 = vector.extract_strided_slice %15 {offsets = [0, 0], sizes = [1, 512], strides = [1, 1]} : vector<2x1536xf32> to vector<1x512xf32>
    %c0_20 = arith.constant 0 : index
    %c512 = arith.constant 512 : index
    %21 = vector.load %arg10[%c0_20, %c512] : memref<2x1536xf32, #tpu.memory_space<vmem>>, vector<1x512xf32>
    tpu.vector_store %arg10[%c0_20, %c512], %20 {strides = array<i32>} : memref<2x1536xf32, #tpu.memory_space<vmem>>, vector<1x512xf32>,
    %22 = vector.extract_strided_slice %15 {offsets = [1, 1024], sizes = [1, 512], strides = [1, 1]} : vector<2x1536xf32> to vector<1x512xf32>
    %c1_21 = arith.constant 1 : index
    %c512_22 = arith.constant 512 : index
    %23 = vector.load %arg10[%c1_21, %c512_22] : memref<2x1536xf32, #tpu.memory_space<vmem>>, vector<1x512xf32>
    tpu.vector_store %arg10[%c1_21, %c512_22], %22 {strides = array<i32>} : memref<2x1536xf32, #tpu.memory_space<vmem>>, vector<1x512xf32>,
    %24 = vector.extract_strided_slice %15 {offsets = [0, 0], sizes = [1, 512], strides = [1, 1]} : vector<2x1536xf32> to vector<1x512xf32>
    %c0_23 = arith.constant 0 : index
    %c1024 = arith.constant 1024 : index
    %25 = vector.load %arg10[%c0_23, %c1024] : memref<2x1536xf32, #tpu.memory_space<vmem>>, vector<1x512xf32>
    tpu.vector_store %arg10[%c0_23, %c1024], %24 {strides = array<i32>} : memref<2x1536xf32, #tpu.memory_space<vmem>>, vector<1x512xf32>,
    %26 = vector.extract_strided_slice %15 {offsets = [1, 512], sizes = [1, 512], strides = [1, 1]} : vector<2x1536xf32> to vector<1x512xf32>
    %c1_24 = arith.constant 1 : index
    %c1024_25 = arith.constant 1024 : index
    %27 = vector.load %arg10[%c1_24, %c1024_25] : memref<2x1536xf32, #tpu.memory_space<vmem>>, vector<1x512xf32>
    tpu.vector_store %arg10[%c1_24, %c1024_25], %26 {strides = array<i32>} : memref<2x1536xf32, #tpu.memory_space<vmem>>, vector<1x512xf32>,
    %c0_26 = arith.constant 0 : index
    %c0_27 = arith.constant 0 : index
    %28 = vector.load %arg10[%c0_26, %c0_27] : memref<2x1536xf32, #tpu.memory_space<vmem>>, vector<2x1536xf32>
    %29 = arith.subf %15, %28 : vector<2x1536xf32>
    %30 = arith.negf %29 : vector<2x1536xf32>
    %31 = math.exp %30 : vector<2x1536xf32>
    %cst_28 = arith.constant 1.000000e+00 : f32
    %32 = vector.broadcast %cst_28 : f32 to vector<2x1536xf32>
    %33 = arith.addf %32, %31 : vector<2x1536xf32>
    %34 = arith.divf %32, %33 : vector<2x1536xf32>
    %35 = tpu.concatenate %34, %34 in 0 : vector<2x1536xf32>, vector<2x1536xf32> -> vector<4x1536xf32>
    %36 = vector.extract_strided_slice %13 {offsets = [0, 0], sizes = [4, 512], strides = [1, 1]} : vector<4x1536xf32> to vector<4x512xf32>
    %37 = vector.extract_strided_slice %13 {offsets = [0, 512], sizes = [4, 512], strides = [1, 1]} : vector<4x1536xf32> to vector<4x512xf32>
    %38 = arith.addf %36, %37 : vector<4x512xf32>
    %39 = vector.extract_strided_slice %13 {offsets = [0, 1024], sizes = [4, 512], strides = [1, 1]} : vector<4x1536xf32> to vector<4x512xf32>
    %40 = arith.addf %38, %39 : vector<4x512xf32>
    %41 = tpu.concatenate %40, %40, %40 in 1 : vector<4x512xf32>, vector<4x512xf32>, vector<4x512xf32> -> vector<4x1536xf32>
    %42 = arith.subf %41, %13 : vector<4x1536xf32>
    %43 = arith.mulf %42, %35 : vector<4x1536xf32>
    %44 = arith.truncf %43 : vector<4x1536xf32> to vector<4x1536xbf16>
    %45 = tpu.concatenate %44, %14 in 0 : vector<4x1536xbf16>, vector<4x1536xbf16> -> vector<8x1536xbf16>
    %cst_29 = arith.constant dense<0.000000e+00> : vector<12x1536xf32>
    %46 = tpu.matmul %3, %45, %cst_29 {dimension_numbers = #tpu.dot_dimension_numbers<[1], [0], [0], [1], [0, 0, 1, 1], [], []>} : vector<12x8xbf16>, vector<8x1536xbf16>, vector<12x1536xf32> -> vector<12x1536xf32>
    %47 = vector.extract_strided_slice %46 {offsets = [0, 0], sizes = [8, 1536], strides = [1, 1]} : vector<12x1536xf32> to vector<8x1536xf32>
    %48 = vector.broadcast %7 : vector<8x1xf32> to vector<8x1536xf32>
    %49 = arith.addf %47, %48 : vector<8x1536xf32>
    %50 = arith.negf %49 : vector<8x1536xf32>
    %51 = math.exp %50 : vector<8x1536xf32>
    %cst_30 = arith.constant 1.000000e+00 : f32
    %52 = vector.broadcast %cst_30 : f32 to vector<8x1536xf32>
    %53 = arith.addf %52, %51 : vector<8x1536xf32>
    %54 = arith.divf %52, %53 : vector<8x1536xf32>
    %55 = vector.extract_strided_slice %54 {offsets = [0, 0], sizes = [4, 1536], strides = [1, 1]} : vector<8x1536xf32> to vector<4x1536xf32>
    %56 = vector.extract_strided_slice %54 {offsets = [4, 0], sizes = [4, 1536], strides = [1, 1]} : vector<8x1536xf32> to vector<4x1536xf32>
    %57 = vector.extract_strided_slice %46 {offsets = [8, 0], sizes = [4, 1536], strides = [1, 1]} : vector<12x1536xf32> to vector<4x1536xf32>
    %58 = arith.mulf %56, %13 : vector<4x1536xf32>
    %59 = arith.truncf %58 : vector<4x1536xf32> to vector<4x1536xbf16>
    %cst_31 = arith.constant dense<0.000000e+00> : vector<4x1536xf32>
    %60 = tpu.matmul %5, %59, %cst_31 {dimension_numbers = #tpu.dot_dimension_numbers<[1], [0], [0], [1], [0, 0, 1, 1], [], []>} : vector<4x4xbf16>, vector<4x1536xbf16>, vector<4x1536xf32> -> vector<4x1536xf32>
    %61 = arith.addf %57, %60 : vector<4x1536xf32>
    %62 = vector.broadcast %9 : vector<4x1xf32> to vector<4x1536xf32>
    %63 = arith.addf %61, %62 : vector<4x1536xf32>
    %64 = math.tanh %63 : vector<4x1536xf32>
    %cst_32 = arith.constant 1.000000e+00 : f32
    %65 = vector.broadcast %cst_32 : f32 to vector<4x1536xf32>
    %66 = arith.subf %65, %55 : vector<4x1536xf32>
    %67 = arith.mulf %66, %13 : vector<4x1536xf32>
    %68 = arith.mulf %55, %64 : vector<4x1536xf32>
    %69 = arith.addf %67, %68 : vector<4x1536xf32>
    %70 = vector.broadcast %11 : f32 to vector<4x1536xf32>
    %71 = arith.mulf %69, %70 : vector<4x1536xf32>
    %72 = arith.addf %71, %13 : vector<4x1536xf32>
    %73 = arith.truncf %72 : vector<4x1536xf32> to vector<4x1536xbf16>
    %cst_33 = arith.constant dense<0.000000e+00> : vector<2x1536xf32>
    %74 = tpu.matmul %1, %73, %cst_33 {dimension_numbers = #tpu.dot_dimension_numbers<[1], [0], [0], [1], [0, 0, 1, 1], [], []>} : vector<2x4xbf16>, vector<4x1536xbf16>, vector<2x1536xf32> -> vector<2x1536xf32>
    %75 = vector.extract_strided_slice %74 {offsets = [0, 512], sizes = [1, 512], strides = [1, 1]} : vector<2x1536xf32> to vector<1x512xf32>
    %c0_34 = arith.constant 0 : index
    %c0_35 = arith.constant 0 : index
    %76 = vector.load %arg10[%c0_34, %c0_35] : memref<2x1536xf32, #tpu.memory_space<vmem>>, vector<1x512xf32>
    tpu.vector_store %arg10[%c0_34, %c0_35], %75 {strides = array<i32>} : memref<2x1536xf32, #tpu.memory_space<vmem>>, vector<1x512xf32>,
    %77 = vector.extract_strided_slice %74 {offsets = [1, 1024], sizes = [1, 512], strides = [1, 1]} : vector<2x1536xf32> to vector<1x512xf32>
    %c1_36 = arith.constant 1 : index
    %c0_37 = arith.constant 0 : index
    %78 = vector.load %arg10[%c1_36, %c0_37] : memref<2x1536xf32, #tpu.memory_space<vmem>>, vector<1x512xf32>
    tpu.vector_store %arg10[%c1_36, %c0_37], %77 {strides = array<i32>} : memref<2x1536xf32, #tpu.memory_space<vmem>>, vector<1x512xf32>,
    %79 = vector.extract_strided_slice %74 {offsets = [0, 0], sizes = [1, 512], strides = [1, 1]} : vector<2x1536xf32> to vector<1x512xf32>
    %c0_38 = arith.constant 0 : index
    %c512_39 = arith.constant 512 : index
    %80 = vector.load %arg10[%c0_38, %c512_39] : memref<2x1536xf32, #tpu.memory_space<vmem>>, vector<1x512xf32>
    tpu.vector_store %arg10[%c0_38, %c512_39], %79 {strides = array<i32>} : memref<2x1536xf32, #tpu.memory_space<vmem>>, vector<1x512xf32>,
    %81 = vector.extract_strided_slice %74 {offsets = [1, 1024], sizes = [1, 512], strides = [1, 1]} : vector<2x1536xf32> to vector<1x512xf32>
    %c1_40 = arith.constant 1 : index
    %c512_41 = arith.constant 512 : index
    %82 = vector.load %arg10[%c1_40, %c512_41] : memref<2x1536xf32, #tpu.memory_space<vmem>>, vector<1x512xf32>
    tpu.vector_store %arg10[%c1_40, %c512_41], %81 {strides = array<i32>} : memref<2x1536xf32, #tpu.memory_space<vmem>>, vector<1x512xf32>,
    %83 = vector.extract_strided_slice %74 {offsets = [0, 0], sizes = [1, 512], strides = [1, 1]} : vector<2x1536xf32> to vector<1x512xf32>
    %c0_42 = arith.constant 0 : index
    %c1024_43 = arith.constant 1024 : index
    %84 = vector.load %arg10[%c0_42, %c1024_43] : memref<2x1536xf32, #tpu.memory_space<vmem>>, vector<1x512xf32>
    tpu.vector_store %arg10[%c0_42, %c1024_43], %83 {strides = array<i32>} : memref<2x1536xf32, #tpu.memory_space<vmem>>, vector<1x512xf32>,
    %85 = vector.extract_strided_slice %74 {offsets = [1, 512], sizes = [1, 512], strides = [1, 1]} : vector<2x1536xf32> to vector<1x512xf32>
    %c1_44 = arith.constant 1 : index
    %c1024_45 = arith.constant 1024 : index
    %86 = vector.load %arg10[%c1_44, %c1024_45] : memref<2x1536xf32, #tpu.memory_space<vmem>>, vector<1x512xf32>
    tpu.vector_store %arg10[%c1_44, %c1024_45], %85 {strides = array<i32>} : memref<2x1536xf32, #tpu.memory_space<vmem>>, vector<1x512xf32>,
    %c0_46 = arith.constant 0 : index
    %c0_47 = arith.constant 0 : index
    %87 = vector.load %arg10[%c0_46, %c0_47] : memref<2x1536xf32, #tpu.memory_space<vmem>>, vector<2x1536xf32>
    %88 = arith.subf %74, %87 : vector<2x1536xf32>
    %89 = arith.negf %88 : vector<2x1536xf32>
    %90 = math.exp %89 : vector<2x1536xf32>
    %cst_48 = arith.constant 1.000000e+00 : f32
    %91 = vector.broadcast %cst_48 : f32 to vector<2x1536xf32>
    %92 = arith.addf %91, %90 : vector<2x1536xf32>
    %93 = arith.divf %91, %92 : vector<2x1536xf32>
    %94 = tpu.concatenate %93, %93 in 0 : vector<2x1536xf32>, vector<2x1536xf32> -> vector<4x1536xf32>
    %95 = vector.extract_strided_slice %72 {offsets = [0, 0], sizes = [4, 512], strides = [1, 1]} : vector<4x1536xf32> to vector<4x512xf32>
    %96 = vector.extract_strided_slice %72 {offsets = [0, 512], sizes = [4, 512], strides = [1, 1]} : vector<4x1536xf32> to vector<4x512xf32>
    %97 = arith.addf %95, %96 : vector<4x512xf32>
    %98 = vector.extract_strided_slice %72 {offsets = [0, 1024], sizes = [4, 512], strides = [1, 1]} : vector<4x1536xf32> to vector<4x512xf32>
    %99 = arith.addf %97, %98 : vector<4x512xf32>
    %100 = tpu.concatenate %99, %99, %99 in 1 : vector<4x512xf32>, vector<4x512xf32>, vector<4x512xf32> -> vector<4x1536xf32>
    %101 = arith.subf %100, %72 : vector<4x1536xf32>
    %102 = arith.mulf %101, %94 : vector<4x1536xf32>
    %103 = arith.truncf %102 : vector<4x1536xf32> to vector<4x1536xbf16>
    %104 = tpu.concatenate %103, %73 in 0 : vector<4x1536xbf16>, vector<4x1536xbf16> -> vector<8x1536xbf16>
    %cst_49 = arith.constant dense<0.000000e+00> : vector<12x1536xf32>
    %105 = tpu.matmul %3, %104, %cst_49 {dimension_numbers = #tpu.dot_dimension_numbers<[1], [0], [0], [1], [0, 0, 1, 1], [], []>} : vector<12x8xbf16>, vector<8x1536xbf16>, vector<12x1536xf32> -> vector<12x1536xf32>
    %106 = vector.extract_strided_slice %105 {offsets = [0, 0], sizes = [8, 1536], strides = [1, 1]} : vector<12x1536xf32> to vector<8x1536xf32>
    %107 = vector.broadcast %7 : vector<8x1xf32> to vector<8x1536xf32>
    %108 = arith.addf %106, %107 : vector<8x1536xf32>
    %109 = arith.negf %108 : vector<8x1536xf32>
    %110 = math.exp %109 : vector<8x1536xf32>
    %cst_50 = arith.constant 1.000000e+00 : f32
    %111 = vector.broadcast %cst_50 : f32 to vector<8x1536xf32>
    %112 = arith.addf %111, %110 : vector<8x1536xf32>
    %113 = arith.divf %111, %112 : vector<8x1536xf32>
    %114 = vector.extract_strided_slice %113 {offsets = [0, 0], sizes = [4, 1536], strides = [1, 1]} : vector<8x1536xf32> to vector<4x1536xf32>
    %115 = vector.extract_strided_slice %113 {offsets = [4, 0], sizes = [4, 1536], strides = [1, 1]} : vector<8x1536xf32> to vector<4x1536xf32>
    %116 = vector.extract_strided_slice %105 {offsets = [8, 0], sizes = [4, 1536], strides = [1, 1]} : vector<12x1536xf32> to vector<4x1536xf32>
    %117 = arith.mulf %115, %72 : vector<4x1536xf32>
    %118 = arith.truncf %117 : vector<4x1536xf32> to vector<4x1536xbf16>
    %cst_51 = arith.constant dense<0.000000e+00> : vector<4x1536xf32>
    %119 = tpu.matmul %5, %118, %cst_51 {dimension_numbers = #tpu.dot_dimension_numbers<[1], [0], [0], [1], [0, 0, 1, 1], [], []>} : vector<4x4xbf16>, vector<4x1536xbf16>, vector<4x1536xf32> -> vector<4x1536xf32>
    %120 = arith.addf %116, %119 : vector<4x1536xf32>
    %121 = vector.broadcast %9 : vector<4x1xf32> to vector<4x1536xf32>
    %122 = arith.addf %120, %121 : vector<4x1536xf32>
    %123 = math.tanh %122 : vector<4x1536xf32>
    %cst_52 = arith.constant 1.000000e+00 : f32
    %124 = vector.broadcast %cst_52 : f32 to vector<4x1536xf32>
    %125 = arith.subf %124, %114 : vector<4x1536xf32>
    %126 = arith.mulf %125, %72 : vector<4x1536xf32>
    %127 = arith.mulf %114, %123 : vector<4x1536xf32>
    %128 = arith.addf %126, %127 : vector<4x1536xf32>
    %129 = vector.broadcast %11 : f32 to vector<4x1536xf32>
    %130 = arith.mulf %128, %129 : vector<4x1536xf32>
    %131 = arith.addf %130, %72 : vector<4x1536xf32>
    %c0_53 = arith.constant 0 : index
    %c0_54 = arith.constant 0 : index
    %c0_55 = arith.constant 0 : index
    %132 = vector.load %arg9[%c0_53, %c0_54, %c0_55] : memref<1x4x1536xf32, #tpu.memory_space<vmem>>, vector<1x4x1536xf32>
    %133 = vector.shape_cast %132 : vector<1x4x1536xf32> to vector<4x1536xf32>
    %134 = vector.shape_cast %131 : vector<4x1536xf32> to vector<1x4x1536xf32>
    tpu.vector_store %arg9[%c0_53, %c0_54, %c0_55], %134 {strides = array<i32>} : memref<1x4x1536xf32, #tpu.memory_space<vmem>>, vector<1x4x1536xf32>,
    return
  }
  func.func @transform_0(%arg0: i32) -> (i32, i32, i32) {
    %c0_i32 = arith.constant 0 : i32
    %c0_i32_0 = arith.constant 0 : i32
    %c0_i32_1 = arith.constant 0 : i32
    return %arg0, %c0_i32, %c0_i32_0 : i32, i32, i32
  }
  func.func @transform_1(%arg0: i32) -> (i32, i32, i32) {
    %c0_i32 = arith.constant 0 : i32
    %c0_i32_0 = arith.constant 0 : i32
    %c0_i32_1 = arith.constant 0 : i32
    return %arg0, %c0_i32, %c0_i32_0 : i32, i32, i32
  }
  func.func @transform_2(%arg0: i32) -> (i32, i32, i32) {
    %c0_i32 = arith.constant 0 : i32
    %c0_i32_0 = arith.constant 0 : i32
    %c0_i32_1 = arith.constant 0 : i32
    return %arg0, %c0_i32, %c0_i32_0 : i32, i32, i32
  }
  func.func @transform_3(%arg0: i32) -> (i32, i32, i32) {
    %c0_i32 = arith.constant 0 : i32
    %c0_i32_0 = arith.constant 0 : i32
    %c0_i32_1 = arith.constant 0 : i32
    return %arg0, %c0_i32, %c0_i32_0 : i32, i32, i32
  }
  func.func @transform_4(%arg0: i32) -> (i32, i32, i32) {
    %c0_i32 = arith.constant 0 : i32
    %c0_i32_0 = arith.constant 0 : i32
    %c0_i32_1 = arith.constant 0 : i32
    return %arg0, %c0_i32, %c0_i32_0 : i32, i32, i32
  }
  func.func @transform_5(%arg0: i32) -> (i32, i32, i32) {
    %c0_i32 = arith.constant 0 : i32
    %c0_i32_0 = arith.constant 0 : i32
    %c0_i32_1 = arith.constant 0 : i32
    return %arg0, %c0_i32, %c0_i32_0 : i32, i32, i32
  }
  func.func @transform_6(%arg0: i32) -> i32 {
    %c0_i32 = arith.constant 0 : i32
    %c0_i32_0 = arith.constant 0 : i32
    return %c0_i32 : i32
  }
  func.func @transform_7(%arg0: i32) -> (i32, i32) {
    %c0_i32 = arith.constant 0 : i32
    %c0_i32_0 = arith.constant 0 : i32
    %c0_i32_1 = arith.constant 0 : i32
    return %c0_i32, %c0_i32_0 : i32, i32
  }
  func.func @transform_8(%arg0: i32) -> (i32, i32, i32) {
    %c0_i32 = arith.constant 0 : i32
    %c0_i32_0 = arith.constant 0 : i32
    %c0_i32_1 = arith.constant 0 : i32
    return %arg0, %c0_i32, %c0_i32_0 : i32, i32, i32
  }
}

</mosaic_0001>

<llo_original>
// kernel: squeeze.6
$region0: #{squeeze.6}
  %s0 = inlined_call_operand.vmem [shape: f32[1,4,512], index: 0, kind: input, shape index: {}]
  %s1 = inlined_call_operand.vmem [shape: f32[4,2,256], index: 1, kind: output, shape index: {}]
  $region1: #{squeeze.6} parent=0
    #allocation0 [shape = 'u8[32768]{0}', space=vmem, size = 0x8000, scoped, tag = 'scoped mem for output reshape']
    #allocation1 [shape = 'u8[16384]{0}', space=vmem, size = 0x4000, scoped, tag = 'scoped mem for input reshape']
    %s3 = sshll.u32 1, 4
    %s4 = ssub.s32 %s3, 1
    %s5 = smul.addr 4, 3
    %s6 = scalar_lea.vmem %s0, %s5
    %v7 = vld [vmem:[%s6] sm:%s4]
    %s8 = scalar_lea.vmem [#allocation1], 24
    %9 = vst [vmem:[%s8] sm:%s4] %v7
    %s10 = smul.addr 4, 2
    %s11 = scalar_lea.vmem %s0, %s10
    %v12 = vld [vmem:[%s11] sm:%s4]
    %s13 = scalar_lea.vmem [#allocation1], 16
    %14 = vst [vmem:[%s13] sm:%s4] %v12
    %s15 = scalar_lea.vmem %s0, 4
    %v16 = vld [vmem:[%s15] sm:%s4]
    %s17 = scalar_lea.vmem [#allocation1], 8
    %18 = vst [vmem:[%s17] sm:%s4] %v16
    %v19 = vld [vmem:[%s0] sm:%s4]
    %20 = vst [vmem:[#allocation1] sm:%s4] %v19
    %v21 = vld [vmem:[#allocation1] sm:$0xf]
    %22 = vst [vmem:[#allocation0] ss:$16 sm:$0x3] %v21
    %23 = vst [vmem:[#allocation0] ss:$16 sm:$0xc] %v21
    %s24 = scalar_lea.vmem [#allocation1], 8
    %v25 = vld [vmem:[%s24] sm:$0xf]
    %s26 = scalar_lea.vmem [#allocation0], 8
    %27 = vst [vmem:[%s26] ss:$16 sm:$0x3] %v25
    %s28 = scalar_lea.vmem [#allocation0], 8
    %29 = vst [vmem:[%s28] ss:$16 sm:$0xc] %v25
    %s30 = scalar_lea.vmem [#allocation1], 16
    %v31 = vld [vmem:[%s30] sm:$0xf]
    %s32 = scalar_lea.vmem [#allocation0], 1
    %33 = vst [vmem:[%s32] ss:$16 sm:$0x3] %v31
    %s34 = scalar_lea.vmem [#allocation0], 1
    %35 = vst [vmem:[%s34] ss:$16 sm:$0xc] %v31
    %s36 = scalar_lea.vmem [#allocation1], 24
    %v37 = vld [vmem:[%s36] sm:$0xf]
    %s38 = scalar_lea.vmem [#allocation0], 9
    %39 = vst [vmem:[%s38] ss:$16 sm:$0x3] %v37
    %s40 = scalar_lea.vmem [#allocation0], 9
    %41 = vst [vmem:[%s40] ss:$16 sm:$0xc] %v37
    %s43 = sshll.u32 1, 2
    %s44 = ssub.s32 %s43, 1
    %v46 = vld [vmem:[#allocation0] sm:%s44]
    %s47 = sshll.u32 1, 2
    %s48 = ssub.s32 %s47, 1
    %49 = vst [vmem:[%s1] sm:%s48] %v46
    %s50 = scalar_lea.vmem [#allocation0], 8
    %v51 = vld [vmem:[%s50] sm:%s44]
    %s52 = sshll.u32 1, 2
    %s53 = ssub.s32 %s52, 1
    %s54 = scalar_lea.vmem %s1, 2
    %55 = vst [vmem:[%s54] sm:%s53] %v51
    %s56 = scalar_lea.vmem [#allocation0], 16
    %v57 = vld [vmem:[%s56] sm:%s44]
    %s58 = sshll.u32 1, 2
    %s59 = ssub.s32 %s58, 1
    %s60 = smul.addr 2, 2
    %s61 = scalar_lea.vmem %s1, %s60
    %62 = vst [vmem:[%s61] sm:%s59] %v57
    %s63 = scalar_lea.vmem [#allocation0], 24
    %v64 = vld [vmem:[%s63] sm:%s44]
    %s65 = sshll.u32 1, 2
    %s66 = ssub.s32 %s65, 1
    %s67 = smul.addr 2, 3
    %s68 = scalar_lea.vmem %s1, %s67
    %69 = vst [vmem:[%s68] sm:%s66] %v64
    %s70 = scalar_lea.vmem [#allocation0], 32
    %v71 = vld [vmem:[%s70] sm:%s44]
    %s72 = sshll.u32 1, 2
    %s73 = ssub.s32 %s72, 1
    %s74 = smul.addr 2, 4
    %s75 = scalar_lea.vmem %s1, %s74
    %76 = vst [vmem:[%s75] sm:%s73] %v71
    %s77 = scalar_lea.vmem [#allocation0], 40
    %v78 = vld [vmem:[%s77] sm:%s44]
    %s79 = sshll.u32 1, 2
    %s80 = ssub.s32 %s79, 1
    %s81 = smul.addr 2, 5
    %s82 = scalar_lea.vmem %s1, %s81
    %83 = vst [vmem:[%s82] sm:%s80] %v78
    %s84 = scalar_lea.vmem [#allocation0], 48
    %v85 = vld [vmem:[%s84] sm:%s44]
    %s86 = sshll.u32 1, 2
    %s87 = ssub.s32 %s86, 1
    %s88 = smul.addr 2, 6
    %s89 = scalar_lea.vmem %s1, %s88
    %90 = vst [vmem:[%s89] sm:%s87] %v85
    %s91 = scalar_lea.vmem [#allocation0], 56
    %v92 = vld [vmem:[%s91] sm:%s44]
    %s93 = sshll.u32 1, 2
    %s94 = ssub.s32 %s93, 1
    %s95 = smul.addr 2, 7
    %s96 = scalar_lea.vmem %s1, %s95
    %97 = vst [vmem:[%s96] sm:%s94] %v92

// kernel: graph_reasoning_forward.2
$region0: #{graph_reasoning_forward.2}
  #allocation0 [shape = 'u32[]', space=smem, size = 0x4, offset = 0x4, fixed_abs, tag = 'smem constant byte address 0x4 - core index']
  #allocation1 [shape = 'u32[144,128]{1,0:T(1,128)}', space=vmem, size = 0x12000, scoped, tag = 'internal scratch']
  %s0 = inlined_call_operand.vmem [shape: bf16[2,3,72,512], index: 0, kind: input, shape index: {}]
  %s1 = inlined_call_operand.vmem [shape: bf16[2,3,4,72], index: 1, kind: input, shape index: {}]
  %s2 = inlined_call_operand.vmem [shape: f32[2,3,4,1], index: 2, kind: input, shape index: {}]
  %s3 = inlined_call_operand.vmem [shape: f32[2,4,1536], index: 3, kind: output, shape index: {}]
  %s4 = sld [smem:[#allocation0]]
  $region45: #{graph_reasoning_forward.2} parent=0
    _
  %s6 = ssub.s32 1, %s4
  %s7 = scalar_select 0, %s6, %s4
  loop: start=0, step=1, limit=4
  $region2: #{graph_reasoning_forward.2} parent=0 // loop_pre_header
    _
  $region3: #{graph_reasoning_forward.2} parent=0 // loop_header
    %s9 = sphi 0, %s13
    %p10 = scmp.ge.s32.totalorder %s9, 4
    %s19 = sphi 0, %s21
    %s22 = sphi 0, %s19
    %s23 = sphi 0, %s22
    %s39 = sphi 0, %s23
    %s45 = sphi 0, %s47
    %s48 = sphi 0, %s45
    %s49 = sphi 0, %s48
    %s65 = sphi 0, %s49
    %s71 = sphi 0, %s73
    %s74 = sphi 0, %s71
    %s75 = sphi 0, %s74
    %s91 = sphi 0, %s75
    %s97 = sphi 0, %s99
    %s100 = sphi 0, %s97
    %s101 = sphi 0, %s100
    %s117 = sphi 0, %s101
  $region4: #{graph_reasoning_forward.2} parent=0 // loop_header_branch
    %12 = sbr.rel (%p10) target = $region8
  $region5: #{graph_reasoning_forward.2} parent=0 // loop_body
    %s14 = ssub.s32 %s9, 1
    %s15 = ssub.s32 %s9, 2
    %s16 = sadd.s32 %s9, 1
    %s17 = ssub.s32 %s9, %s16
    %p18 = scmp.eq.s32.totalorder %s17, 0
    %s20 = sadd.s32 %s19, 1
    %s21 = scalar_select %p18, %s19, %s20
    %p24 = pneg %p18
    %p25 = scmp.eq.s32.totalorder %s9, 1
    %p26 = por %p24, %p25
    %p27 = scmp.ne.s32.totalorder %s19, %s22
    %p28 = scmp.eq.s32.totalorder %s9, 0
    %p29 = por %p27, %p28
    %p30 = scmp.ne.s32.totalorder %s19, %s22
    %p31 = scmp.eq.s32.totalorder %s14, 1
    %p32 = por %p30, %p31
    %p33 = scmp.ne.s32.totalorder %s22, %s23
    %p34 = scmp.eq.s32.totalorder %s14, 0
    %p35 = por %p33, %p34
    %p36 = scmp.ne.s32.totalorder %s22, %s23
    %p37 = scmp.eq.s32.totalorder %s15, 1
    %p38 = por %p36, %p37
    %p40 = scmp.ne.s32.totalorder %s23, %s39
    %p41 = scmp.eq.s32.totalorder %s15, 0
    %p42 = por %p40, %p41
    %s43 = ssub.s32 %s9, %s16
    %p44 = scmp.eq.s32.totalorder %s43, 0
    %s46 = sadd.s32 %s45, 1
    %s47 = scalar_select %p44, %s45, %s46
    %p50 = pneg %p44
    %p51 = scmp.eq.s32.totalorder %s9, 1
    %p52 = por %p50, %p51
    %p53 = scmp.ne.s32.totalorder %s45, %s48
    %p54 = scmp.eq.s32.totalorder %s9, 0
    %p55 = por %p53, %p54
    %p56 = scmp.ne.s32.totalorder %s45, %s48
    %p57 = scmp.eq.s32.totalorder %s14, 1
    %p58 = por %p56, %p57
    %p59 = scmp.ne.s32.totalorder %s48, %s49
    %p60 = scmp.eq.s32.totalorder %s14, 0
    %p61 = por %p59, %p60
    %p62 = scmp.ne.s32.totalorder %s48, %s49
    %p63 = scmp.eq.s32.totalorder %s15, 1
    %p64 = por %p62, %p63
    %p66 = scmp.ne.s32.totalorder %s49, %s65
    %p67 = scmp.eq.s32.totalorder %s15, 0
    %p68 = por %p66, %p67
    %s69 = ssub.s32 %s9, %s16
    %p70 = scmp.eq.s32.totalorder %s69, 0
    %s72 = sadd.s32 %s71, 1
    %s73 = scalar_select %p70, %s71, %s72
    %p76 = pneg %p70
    %p77 = scmp.eq.s32.totalorder %s9, 1
    %p78 = por %p76, %p77
    %p79 = scmp.ne.s32.totalorder %s71, %s74
    %p80 = scmp.eq.s32.totalorder %s9, 0
    %p81 = por %p79, %p80
    %p82 = scmp.ne.s32.totalorder %s71, %s74
    %p83 = scmp.eq.s32.totalorder %s14, 1
    %p84 = por %p82, %p83
    %p85 = scmp.ne.s32.totalorder %s74, %s75
    %p86 = scmp.eq.s32.totalorder %s14, 0
    %p87 = por %p85, %p86
    %p88 = scmp.ne.s32.totalorder %s74, %s75
    %p89 = scmp.eq.s32.totalorder %s15, 1
    %p90 = por %p88, %p89
    %p92 = scmp.ne.s32.totalorder %s75, %s91
    %p93 = scmp.eq.s32.totalorder %s15, 0
    %p94 = por %p92, %p93
    %s95 = ssub.s32 %s9, %s16
    %p96 = scmp.eq.s32.totalorder %s95, 0
    %s98 = sadd.s32 %s97, 1
    %s99 = scalar_select %p96, %s97, %s98
    %p102 = pneg %p96
    %p103 = scmp.eq.s32.totalorder %s9, 1
    %p104 = por %p102, %p103
    %p105 = scmp.ne.s32.totalorder %s97, %s100
    %p106 = scmp.eq.s32.totalorder %s9, 0
    %p107 = por %p105, %p106
    %p108 = scmp.ne.s32.totalorder %s97, %s100
    %p109 = scmp.eq.s32.totalorder %s14, 1
    %p110 = por %p108, %p109
    %p111 = scmp.ne.s32.totalorder %s100, %s101
    %p112 = scmp.eq.s32.totalorder %s14, 0
    %p113 = por %p111, %p112
    %p114 = scmp.ne.s32.totalorder %s100, %s101
    %p115 = scmp.eq.s32.totalorder %s15, 1
    %p116 = por %p114, %p115
    %p118 = scmp.ne.s32.totalorder %s101, %s117
    %p119 = scmp.eq.s32.totalorder %s15, 0
    %p120 = por %p118, %p119
    %p121 = scmp.le.s32.totalorder 1, %s9
    %p122 = scmp.lt.s32.totalorder %s9, 3
    %p123 = pnand %p121, %p122
    %p124 = pneg %p123
    // Predicated region
    $region9: #{graph_reasoning_forward.2} parent=5 // pred_check
      _
    $region10: #{graph_reasoning_forward.2} parent=5 // pred_check_branch
      %126 = sbr.rel (%p123) target = $region12
    $region11: #{graph_reasoning_forward.2} parent=5 // pred_region
      %s127 = ssub.s32 %s9, 1
    $region12: #{graph_reasoning_forward.2} parent=5 // pred_fallthru
      _
    %p128 = scmp.lt.s32.totalorder %s9, 2
    // Predicated region
    $region13: #{graph_reasoning_forward.2} parent=5 // pred_check
      %p129 = pneg %p128
    $region14: #{graph_reasoning_forward.2} parent=5 // pred_check_branch
      %131 = sbr.rel (%p129) target = $region16
    $region15: #{graph_reasoning_forward.2} parent=5 // pred_region
      // Predicated region
      $region17: #{graph_reasoning_forward.2} parent=15 // pred_check
        %p132 = pneg %p29
      $region18: #{graph_reasoning_forward.2} parent=15 // pred_check_branch
        %134 = sbr.rel (%p132) target = $region20
      $region19: #{graph_reasoning_forward.2} parent=15 // pred_region
        %p135 = scmp.lt.s32.totalorder %s9, 1
        %s136 = scalar_select %p135, %s9, 1
        %s137 = smul.addr %s136, 108
        %s138 = smul.addr %s137, 4
        %s139 = scalar_lea.vmem %s0, %s138
      $region20: #{graph_reasoning_forward.2} parent=15 // pred_fallthru
        _
      // Predicated region
      $region21: #{graph_reasoning_forward.2} parent=15 // pred_check
        %p140 = pneg %p55
      $region22: #{graph_reasoning_forward.2} parent=15 // pred_check_branch
        %142 = sbr.rel (%p140) target = $region24
      $region23: #{graph_reasoning_forward.2} parent=15 // pred_region
        %p143 = scmp.lt.s32.totalorder %s9, 1
        %s144 = scalar_select %p143, %s9, 1
        %s145 = smul.addr %s144, 3
        %s146 = smul.addr %s145, 2
        %s147 = scalar_lea.vmem %s1, %s146
      $region24: #{graph_reasoning_forward.2} parent=15 // pred_fallthru
        _
      // Predicated region
      $region25: #{graph_reasoning_forward.2} parent=15 // pred_check
        %p148 = pneg %p81
      $region26: #{graph_reasoning_forward.2} parent=15 // pred_check_branch
        %150 = sbr.rel (%p148) target = $region28
      $region27: #{graph_reasoning_forward.2} parent=15 // pred_region
        %p151 = scmp.lt.s32.totalorder %s9, 1
        %s152 = scalar_select %p151, %s9, 1
        %s153 = smul.addr %s152, 3
        %s154 = smul.addr %s153, 4
        %s155 = scalar_lea.vmem %s2, %s154
      $region28: #{graph_reasoning_forward.2} parent=15 // pred_fallthru
        _
    $region16: #{graph_reasoning_forward.2} parent=5 // pred_fallthru
      _
    %p156 = scmp.le.s32.totalorder 1, %s9
    %p157 = scmp.lt.s32.totalorder %s9, 3
    %p158 = pnand %p156, %p157
    %p159 = pneg %p158
    // Predicated region
    $region29: #{graph_reasoning_forward.2} parent=5 // pred_check
      _
    $region30: #{graph_reasoning_forward.2} parent=5 // pred_check_branch
      %161 = sbr.rel (%p158) target = $region32
    $region31: #{graph_reasoning_forward.2} parent=5 // pred_region
      %s162 = ssub.s32 %s9, 1
      %p163 = scmp.lt.s32.totalorder %s14, 1
      %s164 = scalar_select %p163, %s14, 1
      %s165 = smul.addr %s164, 108
      %s166 = smul.addr %s165, 4
      %s167 = scalar_lea.vmem %s0, %s166
      %p168 = pneg %p35
      %p169 = pneg %p32
      %p170 = scmp.lt.s32.totalorder %s14, 1
      %s171 = scalar_select %p170, %s14, 1
      %s172 = smul.addr %s171, 3
      %s173 = smul.addr %s172, 2
      %s174 = scalar_lea.vmem %s1, %s173
      %p175 = pneg %p61
      %p176 = pneg %p58
      %p177 = scmp.lt.s32.totalorder %s14, 1
      %s178 = scalar_select %p177, %s14, 1
      %s179 = smul.addr %s178, 3
      %s180 = smul.addr %s179, 4
      %s181 = scalar_lea.vmem %s2, %s180
      %p182 = pneg %p87
      %p183 = pneg %p84
      %p184 = pneg %p113
      %p185 = pneg %p110
      %p186 = scmp.lt.s32.totalorder %s14, 1
      %s187 = scalar_select %p186, %s14, 1
      %s188 = smul.addr %s187, 12
      %s189 = smul.addr %s188, 4
      %s190 = scalar_lea.vmem %s3, %s189
      %p191 = scmp.lt.s32.totalorder %s14, 1
      %s192 = scalar_select %p191, %s14, 1
      %s193 = smul.addr %s192, 108
      %s194 = smul.addr %s193, 4
      %s195 = scalar_lea.vmem %s0, %s194
      %p196 = scmp.lt.s32.totalorder %s14, 1
      %s197 = scalar_select %p196, %s14, 1
      %s198 = smul.addr %s197, 3
      %s199 = smul.addr %s198, 2
      %s200 = scalar_lea.vmem %s1, %s199
      %p201 = scmp.lt.s32.totalorder %s14, 1
      %s202 = scalar_select %p201, %s14, 1
      %s203 = smul.addr %s202, 3
      %s204 = smul.addr %s203, 4
      %s205 = scalar_lea.vmem %s2, %s204
      %p206 = scmp.lt.s32.totalorder %s14, 1
      %s207 = scalar_select %p206, %s14, 1
      %s208 = smul.addr %s207, 12
      %s209 = smul.addr %s208, 4
      %s210 = scalar_lea.vmem %s3, %s209
      %v212 = vld [vmem:[%s200] sm:$0x3]
      %v213 = vld [vmem:[%s195] sm:$0xff]
      %v214 = vld [vmem:[%s195 + $0x8] sm:$0xff]
      %v215 = vld [vmem:[%s195 + $0x10] sm:$0xff]
      %v216 = vld [vmem:[%s195 + $0x18] sm:$0xff]
      %v217 = vld [vmem:[%s195 + $0x20] sm:$0xff]
      %v218 = vld [vmem:[%s195 + $0x28] sm:$0xff]
      %v219 = vld [vmem:[%s195 + $0x30] sm:$0xff]
      %v220 = vld [vmem:[%s195 + $0x38] sm:$0xff]
      %v221 = vld [vmem:[%s195 + $0x40] sm:$0xff]
      %v222 = vld [vmem:[%s195 + $0x48] sm:$0xff]
      %v223 = vld [vmem:[%s195 + $0x50] sm:$0xff]
      %v224 = vld [vmem:[%s195 + $0x58] sm:$0xff]
      %v225 = vld [vmem:[%s195 + $0x60] sm:$0xff]
      %v226 = vld [vmem:[%s195 + $0x68] sm:$0xff]
      %v227 = vld [vmem:[%s195 + $0x70] sm:$0xff]
      %v228 = vld [vmem:[%s195 + $0x78] sm:$0xff]
      %v229 = vld [vmem:[%s195 + $0x80] sm:$0xff]
      %v230 = vld [vmem:[%s195 + $0x88] sm:$0xff]
      %v231 = vld [vmem:[%s205] sm:$0xf]
      %233 = vset.pattern.permute.xlu0 0
      %234 = vperm.xlu0 %233, %v231
      %v235 = vpop.permute.xlu0 %234
      %v255 = vunpack.c.l.b16 %v213
      %v256 = vunpack.c.h.b16 %v213
      %v257 = vunpack.c.l.b16 %v214
      %v258 = vunpack.c.h.b16 %v214
      %v259 = vunpack.c.l.b16 %v215
      %v260 = vunpack.c.h.b16 %v215
      %v261 = vunpack.c.l.b16 %v216
      %v262 = vunpack.c.h.b16 %v216
      %v263 = vunpack.c.l.b16 %v217
      %v264 = vunpack.c.h.b16 %v217
      %v265 = vunpack.c.l.b16 %v218
      %v266 = vunpack.c.h.b16 %v218
      %v267 = vunpack.c.l.b16 %v219
      %v268 = vunpack.c.h.b16 %v219
      %v269 = vunpack.c.l.b16 %v220
      %v270 = vunpack.c.h.b16 %v220
      %v271 = vunpack.c.l.b16 %v221
      %v272 = vunpack.c.h.b16 %v221
      %v273 = vunpack.c.l.b16 %v222
      %v274 = vunpack.c.h.b16 %v222
      %v275 = vunpack.c.l.b16 %v223
      %v276 = vunpack.c.h.b16 %v223
      %v277 = vunpack.c.l.b16 %v224
      %v278 = vunpack.c.h.b16 %v224
      %v279 = vunpack.c.l.b16 %v225
      %v280 = vunpack.c.h.b16 %v225
      %v281 = vunpack.c.l.b16 %v226
      %v282 = vunpack.c.h.b16 %v226
      %v283 = vunpack.c.l.b16 %v227
      %v284 = vunpack.c.h.b16 %v227
      %v285 = vunpack.c.l.b16 %v228
      %v286 = vunpack.c.h.b16 %v228
      %v287 = vunpack.c.l.b16 %v229
      %v288 = vunpack.c.h.b16 %v229
      %v289 = vunpack.c.l.b16 %v230
      %v290 = vunpack.c.h.b16 %v230
      %v291 = vpack.c.b16 %v259, %v255
      %v292 = vpack.c.b16 %v260, %v256
      %v293 = vpack.c.b16 %v261, %v257
      %v294 = vpack.c.b16 %v262, %v258
      %v295 = vpack.c.b16 %v267, %v263
      %v296 = vpack.c.b16 %v268, %v264
      %v297 = vpack.c.b16 %v269, %v265
      %v298 = vpack.c.b16 %v270, %v266
      %v299 = vpack.c.b16 %v275, %v271
      %v300 = vpack.c.b16 %v276, %v272
      %v301 = vpack.c.b16 %v277, %v273
      %v302 = vpack.c.b16 %v278, %v274
      %v303 = vpack.c.b16 %v283, %v279
      %v304 = vpack.c.b16 %v284, %v280
      %v305 = vpack.c.b16 %v285, %v281
      %v306 = vpack.c.b16 %v286, %v282
      %v307 = vpack.c.b16 %v287, %v287
      %v308 = vpack.c.b16 %v288, %v288
      %v309 = vpack.c.b16 %v289, %v289
      %v310 = vpack.c.b16 %v290, %v290
      %vm327 = vcmask 588800
      %v329 = vsel %vm327, %v212, 0
      %vm331 = vcmask 1043456
      %v333 = vsel %vm331, %v307, 0
      %v336 = vsel %vm331, %v308, 0
      %v339 = vsel %vm331, %v309, 0
      %v342 = vsel %vm331, %v310, 0
      %344 = vmatprep.subr.bf16.mxu0 0
      %345 = vmatpush1.bf16.msra.mxu0 0
      %346 = vmatprep.subr.bf16.mxu0 0
      %347 = vmatpush1.bf16.msra.mxu0 0
      %348 = vmatprep.subr.bf16.mxu0 0
      %349 = vmatpush1.bf16.msra.mxu0 0
      %350 = vmatprep.subr.bf16.mxu0 %v336
      %351 = vmatpush1.bf16.msra.mxu0 %v333
      %352 = vmatprep.subr.bf16.mxu0 %v304
      %353 = vmatpush1.bf16.msra.mxu0 %v303
      %354 = vmatprep.subr.bf16.mxu0 %v300
      %355 = vmatpush1.bf16.msra.mxu0 %v299
      %356 = vmatprep.subr.bf16.mxu0 %v296
      %357 = vmatpush1.bf16.msra.mxu0 %v295
      %358 = vmatprep.subr.bf16.mxu0 %v292
      %359 = vmatpush1.bf16.msra.mxu0 %v291
      %360 = vmatprep.subr.bf16.mxu0 0
      %361 = vmatpush2.bf16.msra.mxu0 0
      %362 = vmatprep.subr.bf16.mxu0 0
      %363 = vmatpush2.bf16.msra.mxu0 0
      %364 = vmatprep.subr.bf16.mxu0 0
      %365 = vmatpush2.bf16.msra.mxu0 0
      %366 = vmatprep.subr.bf16.mxu0 0
      %367 = vmatpush2.bf16.msra.mxu0 0
      %368 = vmatprep.subr.bf16.mxu0 0
      %369 = vmatpush2.bf16.msra.mxu0 0
      %370 = vmatprep.subr.bf16.mxu0 0
      %371 = vmatpush2.bf16.msra.mxu0 0
      %372 = vmatprep.subr.bf16.mxu0 0
      %373 = vmatpush2.bf16.msra.mxu0 0
      %374 = vmatprep.subr.bf16.mxu0 0
      %375 = vmatpush2.bf16.msra.mxu0 0
      %376 = vmatprep.mubr.bf16.mxu0 0
      %377 = vmatmul.mubr.bf16.gmra.mxu0 %v329
      %v378 = vpop.f32.mrf.mxu0
      %v379 = vadd.f32 %v235, %v378
      %v380 = vpop.f32.mrf.mxu0
      %v381 = vadd.f32 %v235, %v380
      %v382 = vpop.f32.mrf.mxu0
      %v383 = vpop.f32.mrf.mxu0
      %384 = vdwg.mxu0
      %385 = vmatprep.subr.bf16.mxu0 0
      %386 = vmatpush1.bf16.msra.mxu0 0
      %387 = vmatprep.subr.bf16.mxu0 0
      %388 = vmatpush1.bf16.msra.mxu0 0
      %389 = vmatprep.subr.bf16.mxu0 0
      %390 = vmatpush1.bf16.msra.mxu0 0
      %391 = vmatprep.subr.bf16.mxu0 %v342
      %392 = vmatpush1.bf16.msra.mxu0 %v339
      %393 = vmatprep.subr.bf16.mxu0 %v306
      %394 = vmatpush1.bf16.msra.mxu0 %v305
      %395 = vmatprep.subr.bf16.mxu0 %v302
      %396 = vmatpush1.bf16.msra.mxu0 %v301
      %397 = vmatprep.subr.bf16.mxu0 %v298
      %398 = vmatpush1.bf16.msra.mxu0 %v297
      %399 = vmatprep.subr.bf16.mxu0 %v294
      %400 = vmatpush1.bf16.msra.mxu0 %v293
      %401 = vmatprep.subr.bf16.mxu0 0
      %402 = vmatpush2.bf16.msra.mxu0 0
      %403 = vmatprep.subr.bf16.mxu0 0
      %404 = vmatpush2.bf16.msra.mxu0 0
      %405 = vmatprep.subr.bf16.mxu0 0
      %406 = vmatpush2.bf16.msra.mxu0 0
      %407 = vmatprep.subr.bf16.mxu0 0
      %408 = vmatpush2.bf16.msra.mxu0 0
      %409 = vmatprep.subr.bf16.mxu0 0
      %410 = vmatpush2.bf16.msra.mxu0 0
      %411 = vmatprep.subr.bf16.mxu0 0
      %412 = vmatpush2.bf16.msra.mxu0 0
      %413 = vmatprep.subr.bf16.mxu0 0
      %414 = vmatpush2.bf16.msra.mxu0 0
      %415 = vmatprep.subr.bf16.mxu0 0
      %416 = vmatpush2.bf16.msra.mxu0 0
      %417 = vmatprep.mubr.bf16.mxu0 0
      %418 = vmatmul.mubr.bf16.gmra.mxu0 %v329
      %v419 = vpop.f32.mrf.mxu0
      %v420 = vadd.f32 %v235, %v419
      %v421 = vpop.f32.mrf.mxu0
      %v422 = vadd.f32 %v235, %v421
      %v423 = vpop.f32.mrf.mxu0
      %v424 = vpop.f32.mrf.mxu0
      %425 = vdwg.mxu0
      %v426 = vmax.f32 %v379, 0.0
      %v427 = vmax.f32 %v381, 0.0
      %v428 = vmax.f32 %v420, 0.0
      %v429 = vmax.f32 %v422, 0.0
      %v434 = vcombine.low %v426, %v427
      %v435 = vcombine.low %v428, %v429
      %438 = vst [vmem:[%s210] sm:$0xff] %v434
      %439 = vst [vmem:[%s210 + $0x8] sm:$0xff] %v435
      %s440 = scalar_lea.vmem %s200, 2
      %v441 = vld [vmem:[%s440] sm:$0x3]
      %s442 = scalar_lea.vmem %s195, 144
      %v443 = vld [vmem:[%s442] sm:$0xff]
      %v444 = vld [vmem:[%s442 + $0x8] sm:$0xff]
      %v445 = vld [vmem:[%s442 + $0x10] sm:$0xff]
      %v446 = vld [vmem:[%s442 + $0x18] sm:$0xff]
      %v447 = vld [vmem:[%s442 + $0x20] sm:$0xff]
      %v448 = vld [vmem:[%s442 + $0x28] sm:$0xff]
      %v449 = vld [vmem:[%s442 + $0x30] sm:$0xff]
      %v450 = vld [vmem:[%s442 + $0x38] sm:$0xff]
      %v451 = vld [vmem:[%s442 + $0x40] sm:$0xff]
      %v452 = vld [vmem:[%s442 + $0x48] sm:$0xff]
      %v453 = vld [vmem:[%s442 + $0x50] sm:$0xff]
      %v454 = vld [vmem:[%s442 + $0x58] sm:$0xff]
      %v455 = vld [vmem:[%s442 + $0x60] sm:$0xff]
      %v456 = vld [vmem:[%s442 + $0x68] sm:$0xff]
      %v457 = vld [vmem:[%s442 + $0x70] sm:$0xff]
      %v458 = vld [vmem:[%s442 + $0x78] sm:$0xff]
      %v459 = vld [vmem:[%s442 + $0x80] sm:$0xff]
      %v460 = vld [vmem:[%s442 + $0x88] sm:$0xff]
      %s461 = scalar_lea.vmem %s205, 4
      %v462 = vld [vmem:[%s461] sm:$0xf]
      %464 = vset.pattern.permute.xlu0 0
      %465 = vperm.xlu0 %464, %v462
      %v466 = vpop.permute.xlu0 %465
      %v486 = vunpack.c.l.b16 %v443
      %v487 = vunpack.c.h.b16 %v443
      %v488 = vunpack.c.l.b16 %v444
      %v489 = vunpack.c.h.b16 %v444
      %v490 = vunpack.c.l.b16 %v445
      %v491 = vunpack.c.h.b16 %v445
      %v492 = vunpack.c.l.b16 %v446
      %v493 = vunpack.c.h.b16 %v446
      %v494 = vunpack.c.l.b16 %v447
      %v495 = vunpack.c.h.b16 %v447
      %v496 = vunpack.c.l.b16 %v448
      %v497 = vunpack.c.h.b16 %v448
      %v498 = vunpack.c.l.b16 %v449
      %v499 = vunpack.c.h.b16 %v449
      %v500 = vunpack.c.l.b16 %v450
      %v501 = vunpack.c.h.b16 %v450
      %v502 = vunpack.c.l.b16 %v451
      %v503 = vunpack.c.h.b16 %v451
      %v504 = vunpack.c.l.b16 %v452
      %v505 = vunpack.c.h.b16 %v452
      %v506 = vunpack.c.l.b16 %v453
      %v507 = vunpack.c.h.b16 %v453
      %v508 = vunpack.c.l.b16 %v454
      %v509 = vunpack.c.h.b16 %v454
      %v510 = vunpack.c.l.b16 %v455
      %v511 = vunpack.c.h.b16 %v455
      %v512 = vunpack.c.l.b16 %v456
      %v513 = vunpack.c.h.b16 %v456
      %v514 = vunpack.c.l.b16 %v457
      %v515 = vunpack.c.h.b16 %v457
      %v516 = vunpack.c.l.b16 %v458
      %v517 = vunpack.c.h.b16 %v458
      %v518 = vunpack.c.l.b16 %v459
      %v519 = vunpack.c.h.b16 %v459
      %v520 = vunpack.c.l.b16 %v460
      %v521 = vunpack.c.h.b16 %v460
      %v522 = vpack.c.b16 %v490, %v486
      %v523 = vpack.c.b16 %v491, %v487
      %v524 = vpack.c.b16 %v492, %v488
      %v525 = vpack.c.b16 %v493, %v489
      %v526 = vpack.c.b16 %v498, %v494
      %v527 = vpack.c.b16 %v499, %v495
      %v528 = vpack.c.b16 %v500, %v496
      %v529 = vpack.c.b16 %v501, %v497
      %v530 = vpack.c.b16 %v506, %v502
      %v531 = vpack.c.b16 %v507, %v503
      %v532 = vpack.c.b16 %v508, %v504
      %v533 = vpack.c.b16 %v509, %v505
      %v534 = vpack.c.b16 %v514, %v510
      %v535 = vpack.c.b16 %v515, %v511
      %v536 = vpack.c.b16 %v516, %v512
      %v537 = vpack.c.b16 %v517, %v513
      %v538 = vpack.c.b16 %v518, %v518
      %v539 = vpack.c.b16 %v519, %v519
      %v540 = vpack.c.b16 %v520, %v520
      %v541 = vpack.c.b16 %v521, %v521
      %v559 = vsel %vm327, %v441, 0
      %v562 = vsel %vm331, %v538, 0
      %v565 = vsel %vm331, %v539, 0
      %v568 = vsel %vm331, %v540, 0
      %v571 = vsel %vm331, %v541, 0
      %573 = vmatprep.subr.bf16.mxu0 0
      %574 = vmatpush1.bf16.msra.mxu0 0
      %575 = vmatprep.subr.bf16.mxu0 0
      %576 = vmatpush1.bf16.msra.mxu0 0
      %577 = vmatprep.subr.bf16.mxu0 0
      %578 = vmatpush1.bf16.msra.mxu0 0
      %579 = vmatprep.subr.bf16.mxu0 %v565
      %580 = vmatpush1.bf16.msra.mxu0 %v562
      %581 = vmatprep.subr.bf16.mxu0 %v535
      %582 = vmatpush1.bf16.msra.mxu0 %v534
      %583 = vmatprep.subr.bf16.mxu0 %v531
      %584 = vmatpush1.bf16.msra.mxu0 %v530
      %585 = vmatprep.subr.bf16.mxu0 %v527
      %586 = vmatpush1.bf16.msra.mxu0 %v526
      %587 = vmatprep.subr.bf16.mxu0 %v523
      %588 = vmatpush1.bf16.msra.mxu0 %v522
      %589 = vmatprep.subr.bf16.mxu0 0
      %590 = vmatpush2.bf16.msra.mxu0 0
      %591 = vmatprep.subr.bf16.mxu0 0
      %592 = vmatpush2.bf16.msra.mxu0 0
      %593 = vmatprep.subr.bf16.mxu0 0
      %594 = vmatpush2.bf16.msra.mxu0 0
      %595 = vmatprep.subr.bf16.mxu0 0
      %596 = vmatpush2.bf16.msra.mxu0 0
      %597 = vmatprep.subr.bf16.mxu0 0
      %598 = vmatpush2.bf16.msra.mxu0 0
      %599 = vmatprep.subr.bf16.mxu0 0
      %600 = vmatpush2.bf16.msra.mxu0 0
      %601 = vmatprep.subr.bf16.mxu0 0
      %602 = vmatpush2.bf16.msra.mxu0 0
      %603 = vmatprep.subr.bf16.mxu0 0
      %604 = vmatpush2.bf16.msra.mxu0 0
      %605 = vmatprep.mubr.bf16.mxu0 0
      %606 = vmatmul.mubr.bf16.gmra.mxu0 %v559
      %v607 = vpop.f32.mrf.mxu0
      %v608 = vadd.f32 %v466, %v607
      %v609 = vpop.f32.mrf.mxu0
      %v610 = vadd.f32 %v466, %v609
      %v611 = vpop.f32.mrf.mxu0
      %v612 = vpop.f32.mrf.mxu0
      %613 = vdwg.mxu0
      %614 = vmatprep.subr.bf16.mxu0 0
      %615 = vmatpush1.bf16.msra.mxu0 0
      %616 = vmatprep.subr.bf16.mxu0 0
      %617 = vmatpush1.bf16.msra.mxu0 0
      %618 = vmatprep.subr.bf16.mxu0 0
      %619 = vmatpush1.bf16.msra.mxu0 0
      %620 = vmatprep.subr.bf16.mxu0 %v571
      %621 = vmatpush1.bf16.msra.mxu0 %v568
      %622 = vmatprep.subr.bf16.mxu0 %v537
      %623 = vmatpush1.bf16.msra.mxu0 %v536
      %624 = vmatprep.subr.bf16.mxu0 %v533
      %625 = vmatpush1.bf16.msra.mxu0 %v532
      %626 = vmatprep.subr.bf16.mxu0 %v529
      %627 = vmatpush1.bf16.msra.mxu0 %v528
      %628 = vmatprep.subr.bf16.mxu0 %v525
      %629 = vmatpush1.bf16.msra.mxu0 %v524
      %630 = vmatprep.subr.bf16.mxu0 0
      %631 = vmatpush2.bf16.msra.mxu0 0
      %632 = vmatprep.subr.bf16.mxu0 0
      %633 = vmatpush2.bf16.msra.mxu0 0
      %634 = vmatprep.subr.bf16.mxu0 0
      %635 = vmatpush2.bf16.msra.mxu0 0
      %636 = vmatprep.subr.bf16.mxu0 0
      %637 = vmatpush2.bf16.msra.mxu0 0
      %638 = vmatprep.subr.bf16.mxu0 0
      %639 = vmatpush2.bf16.msra.mxu0 0
      %640 = vmatprep.subr.bf16.mxu0 0
      %641 = vmatpush2.bf16.msra.mxu0 0
      %642 = vmatprep.subr.bf16.mxu0 0
      %643 = vmatpush2.bf16.msra.mxu0 0
      %644 = vmatprep.subr.bf16.mxu0 0
      %645 = vmatpush2.bf16.msra.mxu0 0
      %646 = vmatprep.mubr.bf16.mxu0 0
      %647 = vmatmul.mubr.bf16.gmra.mxu0 %v559
      %v648 = vpop.f32.mrf.mxu0
      %v649 = vadd.f32 %v466, %v648
      %v650 = vpop.f32.mrf.mxu0
      %v651 = vadd.f32 %v466, %v650
      %v652 = vpop.f32.mrf.mxu0
      %v653 = vpop.f32.mrf.mxu0
      %654 = vdwg.mxu0
      %v655 = vmax.f32 %v608, 0.0
      %v656 = vmax.f32 %v610, 0.0
      %v657 = vmax.f32 %v649, 0.0
      %v658 = vmax.f32 %v651, 0.0
      %v663 = vcombine.low %v655, %v656
      %v664 = vcombine.low %v657, %v658
      %667 = vst [vmem:[%s210 + $0x10] sm:$0xff] %v663
      %668 = vst [vmem:[%s210 + $0x18] sm:$0xff] %v664
      %s669 = scalar_lea.vmem %s200, 4
      %v670 = vld [vmem:[%s669] sm:$0x3]
      %s671 = scalar_lea.vmem %s195, 288
      %v672 = vld [vmem:[%s671] sm:$0xff]
      %v673 = vld [vmem:[%s671 + $0x8] sm:$0xff]
      %v674 = vld [vmem:[%s671 + $0x10] sm:$0xff]
      %v675 = vld [vmem:[%s671 + $0x18] sm:$0xff]
      %v676 = vld [vmem:[%s671 + $0x20] sm:$0xff]
      %v677 = vld [vmem:[%s671 + $0x28] sm:$0xff]
      %v678 = vld [vmem:[%s671 + $0x30] sm:$0xff]
      %v679 = vld [vmem:[%s671 + $0x38] sm:$0xff]
      %v680 = vld [vmem:[%s671 + $0x40] sm:$0xff]
      %v681 = vld [vmem:[%s671 + $0x48] sm:$0xff]
      %v682 = vld [vmem:[%s671 + $0x50] sm:$0xff]
      %v683 = vld [vmem:[%s671 + $0x58] sm:$0xff]
      %v684 = vld [vmem:[%s671 + $0x60] sm:$0xff]
      %v685 = vld [vmem:[%s671 + $0x68] sm:$0xff]
      %v686 = vld [vmem:[%s671 + $0x70] sm:$0xff]
      %v687 = vld [vmem:[%s671 + $0x78] sm:$0xff]
      %v688 = vld [vmem:[%s671 + $0x80] sm:$0xff]
      %v689 = vld [vmem:[%s671 + $0x88] sm:$0xff]
      %s690 = scalar_lea.vmem %s205, 8
      %v691 = vld [vmem:[%s690] sm:$0xf]
      %693 = vset.pattern.permute.xlu0 0
      %694 = vperm.xlu0 %693, %v691
      %v695 = vpop.permute.xlu0 %694
      %v715 = vunpack.c.l.b16 %v672
      %v716 = vunpack.c.h.b16 %v672
      %v717 = vunpack.c.l.b16 %v673
      %v718 = vunpack.c.h.b16 %v673
      %v719 = vunpack.c.l.b16 %v674
      %v720 = vunpack.c.h.b16 %v674
      %v721 = vunpack.c.l.b16 %v675
      %v722 = vunpack.c.h.b16 %v675
      %v723 = vunpack.c.l.b16 %v676
      %v724 = vunpack.c.h.b16 %v676
      %v725 = vunpack.c.l.b16 %v677
      %v726 = vunpack.c.h.b16 %v677
      %v727 = vunpack.c.l.b16 %v678
      %v728 = vunpack.c.h.b16 %v678
      %v729 = vunpack.c.l.b16 %v679
      %v730 = vunpack.c.h.b16 %v679
      %v731 = vunpack.c.l.b16 %v680
      %v732 = vunpack.c.h.b16 %v680
      %v733 = vunpack.c.l.b16 %v681
      %v734 = vunpack.c.h.b16 %v681
      %v735 = vunpack.c.l.b16 %v682
      %v736 = vunpack.c.h.b16 %v682
      %v737 = vunpack.c.l.b16 %v683
      %v738 = vunpack.c.h.b16 %v683
      %v739 = vunpack.c.l.b16 %v684
      %v740 = vunpack.c.h.b16 %v684
      %v741 = vunpack.c.l.b16 %v685
      %v742 = vunpack.c.h.b16 %v685
      %v743 = vunpack.c.l.b16 %v686
      %v744 = vunpack.c.h.b16 %v686
      %v745 = vunpack.c.l.b16 %v687
      %v746 = vunpack.c.h.b16 %v687
      %v747 = vunpack.c.l.b16 %v688
      %v748 = vunpack.c.h.b16 %v688
      %v749 = vunpack.c.l.b16 %v689
      %v750 = vunpack.c.h.b16 %v689
      %v751 = vpack.c.b16 %v719, %v715
      %v752 = vpack.c.b16 %v720, %v716
      %v753 = vpack.c.b16 %v721, %v717
      %v754 = vpack.c.b16 %v722, %v718
      %v755 = vpack.c.b16 %v727, %v723
      %v756 = vpack.c.b16 %v728, %v724
      %v757 = vpack.c.b16 %v729, %v725
      %v758 = vpack.c.b16 %v730, %v726
      %v759 = vpack.c.b16 %v735, %v731
      %v760 = vpack.c.b16 %v736, %v732
      %v761 = vpack.c.b16 %v737, %v733
      %v762 = vpack.c.b16 %v738, %v734
      %v763 = vpack.c.b16 %v743, %v739
      %v764 = vpack.c.b16 %v744, %v740
      %v765 = vpack.c.b16 %v745, %v741
      %v766 = vpack.c.b16 %v746, %v742
      %v767 = vpack.c.b16 %v747, %v747
      %v768 = vpack.c.b16 %v748, %v748
      %v769 = vpack.c.b16 %v749, %v749
      %v770 = vpack.c.b16 %v750, %v750
      %v788 = vsel %vm327, %v670, 0
      %v791 = vsel %vm331, %v767, 0
      %v794 = vsel %vm331, %v768, 0
      %v797 = vsel %vm331, %v769, 0
      %v800 = vsel %vm331, %v770, 0
      %802 = vmatprep.subr.bf16.mxu0 0
      %803 = vmatpush1.bf16.msra.mxu0 0
      %804 = vmatprep.subr.bf16.mxu0 0
      %805 = vmatpush1.bf16.msra.mxu0 0
      %806 = vmatprep.subr.bf16.mxu0 0
      %807 = vmatpush1.bf16.msra.mxu0 0
      %808 = vmatprep.subr.bf16.mxu0 %v794
      %809 = vmatpush1.bf16.msra.mxu0 %v791
      %810 = vmatprep.subr.bf16.mxu0 %v764
      %811 = vmatpush1.bf16.msra.mxu0 %v763
      %812 = vmatprep.subr.bf16.mxu0 %v760
      %813 = vmatpush1.bf16.msra.mxu0 %v759
      %814 = vmatprep.subr.bf16.mxu0 %v756
      %815 = vmatpush1.bf16.msra.mxu0 %v755
      %816 = vmatprep.subr.bf16.mxu0 %v752
      %817 = vmatpush1.bf16.msra.mxu0 %v751
      %818 = vmatprep.subr.bf16.mxu0 0
      %819 = vmatpush2.bf16.msra.mxu0 0
      %820 = vmatprep.subr.bf16.mxu0 0
      %821 = vmatpush2.bf16.msra.mxu0 0
      %822 = vmatprep.subr.bf16.mxu0 0
      %823 = vmatpush2.bf16.msra.mxu0 0
      %824 = vmatprep.subr.bf16.mxu0 0
      %825 = vmatpush2.bf16.msra.mxu0 0
      %826 = vmatprep.subr.bf16.mxu0 0
      %827 = vmatpush2.bf16.msra.mxu0 0
      %828 = vmatprep.subr.bf16.mxu0 0
      %829 = vmatpush2.bf16.msra.mxu0 0
      %830 = vmatprep.subr.bf16.mxu0 0
      %831 = vmatpush2.bf16.msra.mxu0 0
      %832 = vmatprep.subr.bf16.mxu0 0
      %833 = vmatpush2.bf16.msra.mxu0 0
      %834 = vmatprep.mubr.bf16.mxu0 0
      %835 = vmatmul.mubr.bf16.gmra.mxu0 %v788
      %v836 = vpop.f32.mrf.mxu0
      %v837 = vadd.f32 %v695, %v836
      %v838 = vpop.f32.mrf.mxu0
      %v839 = vadd.f32 %v695, %v838
      %v840 = vpop.f32.mrf.mxu0
      %v841 = vpop.f32.mrf.mxu0
      %842 = vdwg.mxu0
      %843 = vmatprep.subr.bf16.mxu0 0
      %844 = vmatpush1.bf16.msra.mxu0 0
      %845 = vmatprep.subr.bf16.mxu0 0
      %846 = vmatpush1.bf16.msra.mxu0 0
      %847 = vmatprep.subr.bf16.mxu0 0
      %848 = vmatpush1.bf16.msra.mxu0 0
      %849 = vmatprep.subr.bf16.mxu0 %v800
      %850 = vmatpush1.bf16.msra.mxu0 %v797
      %851 = vmatprep.subr.bf16.mxu0 %v766
      %852 = vmatpush1.bf16.msra.mxu0 %v765
      %853 = vmatprep.subr.bf16.mxu0 %v762
      %854 = vmatpush1.bf16.msra.mxu0 %v761
      %855 = vmatprep.subr.bf16.mxu0 %v758
      %856 = vmatpush1.bf16.msra.mxu0 %v757
      %857 = vmatprep.subr.bf16.mxu0 %v754
      %858 = vmatpush1.bf16.msra.mxu0 %v753
      %859 = vmatprep.subr.bf16.mxu0 0
      %860 = vmatpush2.bf16.msra.mxu0 0
      %861 = vmatprep.subr.bf16.mxu0 0
      %862 = vmatpush2.bf16.msra.mxu0 0
      %863 = vmatprep.subr.bf16.mxu0 0
      %864 = vmatpush2.bf16.msra.mxu0 0
      %865 = vmatprep.subr.bf16.mxu0 0
      %866 = vmatpush2.bf16.msra.mxu0 0
      %867 = vmatprep.subr.bf16.mxu0 0
      %868 = vmatpush2.bf16.msra.mxu0 0
      %869 = vmatprep.subr.bf16.mxu0 0
      %870 = vmatpush2.bf16.msra.mxu0 0
      %871 = vmatprep.subr.bf16.mxu0 0
      %872 = vmatpush2.bf16.msra.mxu0 0
      %873 = vmatprep.subr.bf16.mxu0 0
      %874 = vmatpush2.bf16.msra.mxu0 0
      %875 = vmatprep.mubr.bf16.mxu0 0
      %876 = vmatmul.mubr.bf16.gmra.mxu0 %v788
      %v877 = vpop.f32.mrf.mxu0
      %v878 = vadd.f32 %v695, %v877
      %v879 = vpop.f32.mrf.mxu0
      %v880 = vadd.f32 %v695, %v879
      %v881 = vpop.f32.mrf.mxu0
      %v882 = vpop.f32.mrf.mxu0
      %883 = vdwg.mxu0
      %v884 = vmax.f32 %v837, 0.0
      %v885 = vmax.f32 %v839, 0.0
      %v886 = vmax.f32 %v878, 0.0
      %v887 = vmax.f32 %v880, 0.0
      %v892 = vcombine.low %v884, %v885
      %v893 = vcombine.low %v886, %v887
      %896 = vst [vmem:[%s210 + $0x20] sm:$0xff] %v892
      %897 = vst [vmem:[%s210 + $0x28] sm:$0xff] %v893
      %p898 = scmp.lt.s32.totalorder %s14, 1
      %s899 = scalar_select %p898, %s14, 1
      %s900 = smul.addr %s899, 12
      %s901 = smul.addr %s900, 4
      %s902 = scalar_lea.vmem %s3, %s901
      // Predicated region
      $region33: #{graph_reasoning_forward.2} parent=31 // pred_check
        %p903 = pneg %p110
      $region34: #{graph_reasoning_forward.2} parent=31 // pred_check_branch
        %905 = sbr.rel (%p903) target = $region36
      $region35: #{graph_reasoning_forward.2} parent=31 // pred_region
        _
      $region36: #{graph_reasoning_forward.2} parent=31 // pred_fallthru
        _
    $region32: #{graph_reasoning_forward.2} parent=5 // pred_fallthru
      _
    %p906 = scmp.le.s32.totalorder 2, %s9
    // Predicated region
    $region37: #{graph_reasoning_forward.2} parent=5 // pred_check
      %p907 = pneg %p906
    $region38: #{graph_reasoning_forward.2} parent=5 // pred_check_branch
      %909 = sbr.rel (%p907) target = $region40
    $region39: #{graph_reasoning_forward.2} parent=5 // pred_region
      %s910 = ssub.s32 %s9, 2
      // Predicated region
      $region41: #{graph_reasoning_forward.2} parent=39 // pred_check
        %p911 = pneg %p116
      $region42: #{graph_reasoning_forward.2} parent=39 // pred_check_branch
        %913 = sbr.rel (%p911) target = $region44
      $region43: #{graph_reasoning_forward.2} parent=39 // pred_region
        %p914 = scmp.lt.s32.totalorder %s15, 1
        %s915 = scalar_select %p914, %s15, 1
        %s916 = smul.addr %s915, 12
        %s917 = smul.addr %s916, 4
        %s918 = scalar_lea.vmem %s3, %s917
      $region44: #{graph_reasoning_forward.2} parent=39 // pred_fallthru
        _
    $region40: #{graph_reasoning_forward.2} parent=5 // pred_fallthru
      _
  $region6: #{graph_reasoning_forward.2} parent=0 // loop_footer
    %s13 = sadd.s32 1, %s9
  $region7: #{graph_reasoning_forward.2} parent=0 // loop_footer_branch
    %8 = sbr.rel target = $region3
  $region8: #{graph_reasoning_forward.2} parent=0 // loop_exit
    _

// kernel: graph_reasoning_forward.3
$region0: #{graph_reasoning_forward.3}
  #allocation0 [shape = 'u32[]', space=smem, size = 0x4, offset = 0x4, fixed_abs, tag = 'smem constant byte address 0x4 - core index']
  #allocation1 [shape = 'u32[144,128]{1,0:T(1,128)}', space=vmem, size = 0x12000, scoped, tag = 'internal scratch']
  #allocation2 [shape = 'f32[2,1536]{1,0:T(2,128)}', space=vmem, size = 0x3000, scoped, tag = 'scratch operand']
  %s0 = inlined_call_operand.vmem [shape: f32[2,4,1536], index: 0, kind: input, shape index: {}]
  %s1 = inlined_call_operand.vmem [shape: bf16[2,2,4], index: 1, kind: input, shape index: {}]
  %s2 = inlined_call_operand.vmem [shape: bf16[2,12,8], index: 2, kind: input, shape index: {}]
  %s3 = inlined_call_operand.vmem [shape: bf16[2,4,4], index: 3, kind: input, shape index: {}]
  %s4 = inlined_call_operand.vmem [shape: f32[2,8,1], index: 4, kind: input, shape index: {}]
  %s5 = inlined_call_operand.vmem [shape: f32[2,4,1], index: 5, kind: input, shape index: {}]
  %s6 = inlined_call_operand.vmem [shape: f32[2], index: 6, kind: input, shape index: {}]
  %s7 = inlined_call_operand.vmem [shape: f32[8,2], index: 7, kind: input, shape index: {}]
  %s8 = inlined_call_operand.vmem [shape: f32[2,4,1536], index: 8, kind: output, shape index: {}]
  %s9 = sld [smem:[#allocation0]]
  $region69: #{graph_reasoning_forward.3} parent=0
    _
  %s11 = ssub.s32 1, %s9
  %s12 = scalar_select 0, %s11, %s9
  $region1: #{graph_reasoning_forward.3} parent=0
    #allocation3 [shape = 'u8[512]{0}', space=smem, size = 0x200, scoped, tag = 'input window, operand 6, single buffered']
    #allocation4 [shape = 's32[2]{0}', space=sflag, size = 0x8, scoped, tag = 'scoped memory for graph_reasoning_forward.3']
    %13 = vsyncpa [#allocation4], 0
    loop: start=0, step=1, limit=4
    $region2: #{graph_reasoning_forward.3} parent=1 // loop_pre_header
      _
    $region3: #{graph_reasoning_forward.3} parent=1 // loop_header
      %s15 = sphi 0, %s19
      %p16 = scmp.ge.s32.totalorder %s15, 4
      %s25 = sphi 0, %s27
      %s28 = sphi 0, %s25
      %s29 = sphi 0, %s28
      %s45 = sphi 0, %s29
      %s51 = sphi 0, %s53
      %s54 = sphi 0, %s51
      %s55 = sphi 0, %s54
      %s71 = sphi 0, %s55
      %s77 = sphi 0, %s79
      %s80 = sphi 0, %s77
      %s81 = sphi 0, %s80
      %s97 = sphi 0, %s81
      %s103 = sphi 0, %s105
      %s106 = sphi 0, %s103
      %s107 = sphi 0, %s106
      %s123 = sphi 0, %s107
      %s129 = sphi 0, %s131
      %s132 = sphi 0, %s129
      %s133 = sphi 0, %s132
      %s149 = sphi 0, %s133
      %s155 = sphi 0, %s157
      %s158 = sphi 0, %s155
      %s159 = sphi 0, %s158
      %s175 = sphi 0, %s159
      %s179 = sphi 0, %s179
      %s181 = sphi 0, %s179
      %s182 = sphi 0, %s181
      %s196 = sphi 0, %s182
      %s200 = sphi 0, %s200
      %s202 = sphi 0, %s200
      %s203 = sphi 0, %s202
      %s217 = sphi 0, %s203
      %s223 = sphi 0, %s225
      %s226 = sphi 0, %s223
      %s227 = sphi 0, %s226
      %s243 = sphi 0, %s227
    $region4: #{graph_reasoning_forward.3} parent=1 // loop_header_branch
      %18 = sbr.rel (%p16) target = $region8
    $region5: #{graph_reasoning_forward.3} parent=1 // loop_body
      %s20 = ssub.s32 %s15, 1
      %s21 = ssub.s32 %s15, 2
      %s22 = sadd.s32 %s15, 1
      %s23 = ssub.s32 %s15, %s22
      %p24 = scmp.eq.s32.totalorder %s23, 0
      %s26 = sadd.s32 %s25, 1
      %s27 = scalar_select %p24, %s25, %s26
      %p30 = pneg %p24
      %p31 = scmp.eq.s32.totalorder %s15, 1
      %p32 = por %p30, %p31
      %p33 = scmp.ne.s32.totalorder %s25, %s28
      %p34 = scmp.eq.s32.totalorder %s15, 0
      %p35 = por %p33, %p34
      %p36 = scmp.ne.s32.totalorder %s25, %s28
      %p37 = scmp.eq.s32.totalorder %s20, 1
      %p38 = por %p36, %p37
      %p39 = scmp.ne.s32.totalorder %s28, %s29
      %p40 = scmp.eq.s32.totalorder %s20, 0
      %p41 = por %p39, %p40
      %p42 = scmp.ne.s32.totalorder %s28, %s29
      %p43 = scmp.eq.s32.totalorder %s21, 1
      %p44 = por %p42, %p43
      %p46 = scmp.ne.s32.totalorder %s29, %s45
      %p47 = scmp.eq.s32.totalorder %s21, 0
      %p48 = por %p46, %p47
      %s49 = ssub.s32 %s15, %s22
      %p50 = scmp.eq.s32.totalorder %s49, 0
      %s52 = sadd.s32 %s51, 1
      %s53 = scalar_select %p50, %s51, %s52
      %p56 = pneg %p50
      %p57 = scmp.eq.s32.totalorder %s15, 1
      %p58 = por %p56, %p57
      %p59 = scmp.ne.s32.totalorder %s51, %s54
      %p60 = scmp.eq.s32.totalorder %s15, 0
      %p61 = por %p59, %p60
      %p62 = scmp.ne.s32.totalorder %s51, %s54
      %p63 = scmp.eq.s32.totalorder %s20, 1
      %p64 = por %p62, %p63
      %p65 = scmp.ne.s32.totalorder %s54, %s55
      %p66 = scmp.eq.s32.totalorder %s20, 0
      %p67 = por %p65, %p66
      %p68 = scmp.ne.s32.totalorder %s54, %s55
      %p69 = scmp.eq.s32.totalorder %s21, 1
      %p70 = por %p68, %p69
      %p72 = scmp.ne.s32.totalorder %s55, %s71
      %p73 = scmp.eq.s32.totalorder %s21, 0
      %p74 = por %p72, %p73
      %s75 = ssub.s32 %s15, %s22
      %p76 = scmp.eq.s32.totalorder %s75, 0
      %s78 = sadd.s32 %s77, 1
      %s79 = scalar_select %p76, %s77, %s78
      %p82 = pneg %p76
      %p83 = scmp.eq.s32.totalorder %s15, 1
      %p84 = por %p82, %p83
      %p85 = scmp.ne.s32.totalorder %s77, %s80
      %p86 = scmp.eq.s32.totalorder %s15, 0
      %p87 = por %p85, %p86
      %p88 = scmp.ne.s32.totalorder %s77, %s80
      %p89 = scmp.eq.s32.totalorder %s20, 1
      %p90 = por %p88, %p89
      %p91 = scmp.ne.s32.totalorder %s80, %s81
      %p92 = scmp.eq.s32.totalorder %s20, 0
      %p93 = por %p91, %p92
      %p94 = scmp.ne.s32.totalorder %s80, %s81
      %p95 = scmp.eq.s32.totalorder %s21, 1
      %p96 = por %p94, %p95
      %p98 = scmp.ne.s32.totalorder %s81, %s97
      %p99 = scmp.eq.s32.totalorder %s21, 0
      %p100 = por %p98, %p99
      %s101 = ssub.s32 %s15, %s22
      %p102 = scmp.eq.s32.totalorder %s101, 0
      %s104 = sadd.s32 %s103, 1
      %s105 = scalar_select %p102, %s103, %s104
      %p108 = pneg %p102
      %p109 = scmp.eq.s32.totalorder %s15, 1
      %p110 = por %p108, %p109
      %p111 = scmp.ne.s32.totalorder %s103, %s106
      %p112 = scmp.eq.s32.totalorder %s15, 0
      %p113 = por %p111, %p112
      %p114 = scmp.ne.s32.totalorder %s103, %s106
      %p115 = scmp.eq.s32.totalorder %s20, 1
      %p116 = por %p114, %p115
      %p117 = scmp.ne.s32.totalorder %s106, %s107
      %p118 = scmp.eq.s32.totalorder %s20, 0
      %p119 = por %p117, %p118
      %p120 = scmp.ne.s32.totalorder %s106, %s107
      %p121 = scmp.eq.s32.totalorder %s21, 1
      %p122 = por %p120, %p121
      %p124 = scmp.ne.s32.totalorder %s107, %s123
      %p125 = scmp.eq.s32.totalorder %s21, 0
      %p126 = por %p124, %p125
      %s127 = ssub.s32 %s15, %s22
      %p128 = scmp.eq.s32.totalorder %s127, 0
      %s130 = sadd.s32 %s129, 1
      %s131 = scalar_select %p128, %s129, %s130
      %p134 = pneg %p128
      %p135 = scmp.eq.s32.totalorder %s15, 1
      %p136 = por %p134, %p135
      %p137 = scmp.ne.s32.totalorder %s129, %s132
      %p138 = scmp.eq.s32.totalorder %s15, 0
      %p139 = por %p137, %p138
      %p140 = scmp.ne.s32.totalorder %s129, %s132
      %p141 = scmp.eq.s32.totalorder %s20, 1
      %p142 = por %p140, %p141
      %p143 = scmp.ne.s32.totalorder %s132, %s133
      %p144 = scmp.eq.s32.totalorder %s20, 0
      %p145 = por %p143, %p144
      %p146 = scmp.ne.s32.totalorder %s132, %s133
      %p147 = scmp.eq.s32.totalorder %s21, 1
      %p148 = por %p146, %p147
      %p150 = scmp.ne.s32.totalorder %s133, %s149
      %p151 = scmp.eq.s32.totalorder %s21, 0
      %p152 = por %p150, %p151
      %s153 = ssub.s32 %s15, %s22
      %p154 = scmp.eq.s32.totalorder %s153, 0
      %s156 = sadd.s32 %s155, 1
      %s157 = scalar_select %p154, %s155, %s156
      %p160 = pneg %p154
      %p161 = scmp.eq.s32.totalorder %s15, 1
      %p162 = por %p160, %p161
      %p163 = scmp.ne.s32.totalorder %s155, %s158
      %p164 = scmp.eq.s32.totalorder %s15, 0
      %p165 = por %p163, %p164
      %p166 = scmp.ne.s32.totalorder %s155, %s158
      %p167 = scmp.eq.s32.totalorder %s20, 1
      %p168 = por %p166, %p167
      %p169 = scmp.ne.s32.totalorder %s158, %s159
      %p170 = scmp.eq.s32.totalorder %s20, 0
      %p171 = por %p169, %p170
      %p172 = scmp.ne.s32.totalorder %s158, %s159
      %p173 = scmp.eq.s32.totalorder %s21, 1
      %p174 = por %p172, %p173
      %p176 = scmp.ne.s32.totalorder %s159, %s175
      %p177 = scmp.eq.s32.totalorder %s21, 0
      %p178 = por %p176, %p177
      %s180 = sadd.s32 %s179, 1
      %p183 = scmp.eq.s32.totalorder %s15, 1
      %p184 = scmp.ne.s32.totalorder %s179, %s181
      %p185 = scmp.eq.s32.totalorder %s15, 0
      %p186 = por %p184, %p185
      %p187 = scmp.ne.s32.totalorder %s179, %s181
      %p188 = scmp.eq.s32.totalorder %s20, 1
      %p189 = por %p187, %p188
      %p190 = scmp.ne.s32.totalorder %s181, %s182
      %p191 = scmp.eq.s32.totalorder %s20, 0
      %p192 = por %p190, %p191
      %p193 = scmp.ne.s32.totalorder %s181, %s182
      %p194 = scmp.eq.s32.totalorder %s21, 1
      %p195 = por %p193, %p194
      %p197 = scmp.ne.s32.totalorder %s182, %s196
      %p198 = scmp.eq.s32.totalorder %s21, 0
      %p199 = por %p197, %p198
      %s201 = sadd.s32 %s200, 1
      %p204 = scmp.eq.s32.totalorder %s15, 1
      %p205 = scmp.ne.s32.totalorder %s200, %s202
      %p206 = scmp.eq.s32.totalorder %s15, 0
      %p207 = por %p205, %p206
      %p208 = scmp.ne.s32.totalorder %s200, %s202
      %p209 = scmp.eq.s32.totalorder %s20, 1
      %p210 = por %p208, %p209
      %p211 = scmp.ne.s32.totalorder %s202, %s203
      %p212 = scmp.eq.s32.totalorder %s20, 0
      %p213 = por %p211, %p212
      %p214 = scmp.ne.s32.totalorder %s202, %s203
      %p215 = scmp.eq.s32.totalorder %s21, 1
      %p216 = por %p214, %p215
      %p218 = scmp.ne.s32.totalorder %s203, %s217
      %p219 = scmp.eq.s32.totalorder %s21, 0
      %p220 = por %p218, %p219
      %s221 = ssub.s32 %s15, %s22
      %p222 = scmp.eq.s32.totalorder %s221, 0
      %s224 = sadd.s32 %s223, 1
      %s225 = scalar_select %p222, %s223, %s224
      %p228 = pneg %p222
      %p229 = scmp.eq.s32.totalorder %s15, 1
      %p230 = por %p228, %p229
      %p231 = scmp.ne.s32.totalorder %s223, %s226
      %p232 = scmp.eq.s32.totalorder %s15, 0
      %p233 = por %p231, %p232
      %p234 = scmp.ne.s32.totalorder %s223, %s226
      %p235 = scmp.eq.s32.totalorder %s20, 1
      %p236 = por %p234, %p235
      %p237 = scmp.ne.s32.totalorder %s226, %s227
      %p238 = scmp.eq.s32.totalorder %s20, 0
      %p239 = por %p237, %p238
      %p240 = scmp.ne.s32.totalorder %s226, %s227
      %p241 = scmp.eq.s32.totalorder %s21, 1
      %p242 = por %p240, %p241
      %p244 = scmp.ne.s32.totalorder %s227, %s243
      %p245 = scmp.eq.s32.totalorder %s21, 0
      %p246 = por %p244, %p245
      %p247 = scmp.le.s32.totalorder 1, %s15
      %p248 = scmp.lt.s32.totalorder %s15, 3
      %p249 = pnand %p247, %p248
      %p250 = pneg %p249
      // Predicated region
      $region9: #{graph_reasoning_forward.3} parent=5 // pred_check
        _
      $region10: #{graph_reasoning_forward.3} parent=5 // pred_check_branch
        %252 = sbr.rel (%p249) target = $region12
      $region11: #{graph_reasoning_forward.3} parent=5 // pred_region
        %s253 = ssub.s32 %s15, 1
        // Predicated region
        $region13: #{graph_reasoning_forward.3} parent=11 // pred_check
          %p254 = pneg %p192
        $region14: #{graph_reasoning_forward.3} parent=11 // pred_check_branch
          %256 = sbr.rel (%p254) target = $region16
        $region15: #{graph_reasoning_forward.3} parent=11 // pred_region
          %s258 = ssub.s32 16, 16
          %259 = vsyncadd [#allocation4], %s258
          %s261 = sshll.u32 %s6, 4
          %s262 = int_to_ptr.vmem [resolvable:$true] %s261
          %264 = dma.vmem_to_smem %s262, 16, [#allocation3], [#allocation4]
        $region16: #{graph_reasoning_forward.3} parent=11 // pred_fallthru
          _
        // Predicated region
        $region17: #{graph_reasoning_forward.3} parent=11 // pred_check
          %p265 = pneg %p213
        $region18: #{graph_reasoning_forward.3} parent=11 // pred_check_branch
          %267 = sbr.rel (%p265) target = $region20
        $region19: #{graph_reasoning_forward.3} parent=11 // pred_region
          _
        $region20: #{graph_reasoning_forward.3} parent=11 // pred_fallthru
          _
      $region12: #{graph_reasoning_forward.3} parent=5 // pred_fallthru
        _
      %p268 = scmp.lt.s32.totalorder %s15, 2
      // Predicated region
      $region21: #{graph_reasoning_forward.3} parent=5 // pred_check
        %p269 = pneg %p268
      $region22: #{graph_reasoning_forward.3} parent=5 // pred_check_branch
        %271 = sbr.rel (%p269) target = $region24
      $region23: #{graph_reasoning_forward.3} parent=5 // pred_region
        // Predicated region
        $region25: #{graph_reasoning_forward.3} parent=23 // pred_check
          %p272 = pneg %p35
        $region26: #{graph_reasoning_forward.3} parent=23 // pred_check_branch
          %274 = sbr.rel (%p272) target = $region28
        $region27: #{graph_reasoning_forward.3} parent=23 // pred_region
          %p275 = scmp.lt.s32.totalorder %s15, 1
          %s276 = scalar_select %p275, %s15, 1
          %s277 = smul.addr %s276, 12
          %s278 = smul.addr %s277, 4
          %s279 = scalar_lea.vmem %s0, %s278
        $region28: #{graph_reasoning_forward.3} parent=23 // pred_fallthru
          _
        // Predicated region
        $region29: #{graph_reasoning_forward.3} parent=23 // pred_check
          %p280 = pneg %p61
        $region30: #{graph_reasoning_forward.3} parent=23 // pred_check_branch
          %282 = sbr.rel (%p280) target = $region32
        $region31: #{graph_reasoning_forward.3} parent=23 // pred_region
          %p283 = scmp.lt.s32.totalorder %s15, 1
          %s284 = scalar_select %p283, %s15, 1
          %s285 = scalar_lea.vmem %s1, %s284
        $region32: #{graph_reasoning_forward.3} parent=23 // pred_fallthru
          _
        // Predicated region
        $region33: #{graph_reasoning_forward.3} parent=23 // pred_check
          %p286 = pneg %p87
        $region34: #{graph_reasoning_forward.3} parent=23 // pred_check_branch
          %288 = sbr.rel (%p286) target = $region36
        $region35: #{graph_reasoning_forward.3} parent=23 // pred_region
          %p289 = scmp.lt.s32.totalorder %s15, 1
          %s290 = scalar_select %p289, %s15, 1
          %s291 = smul.addr %s290, 2
          %s292 = smul.addr %s291, 4
          %s293 = scalar_lea.vmem %s2, %s292
        $region36: #{graph_reasoning_forward.3} parent=23 // pred_fallthru
          _
        // Predicated region
        $region37: #{graph_reasoning_forward.3} parent=23 // pred_check
          %p294 = pneg %p113
        $region38: #{graph_reasoning_forward.3} parent=23 // pred_check_branch
          %296 = sbr.rel (%p294) target = $region40
        $region39: #{graph_reasoning_forward.3} parent=23 // pred_region
          %p297 = scmp.lt.s32.totalorder %s15, 1
          %s298 = scalar_select %p297, %s15, 1
          %s299 = smul.addr %s298, 2
          %s300 = scalar_lea.vmem %s3, %s299
        $region40: #{graph_reasoning_forward.3} parent=23 // pred_fallthru
          _
        // Predicated region
        $region41: #{graph_reasoning_forward.3} parent=23 // pred_check
          %p301 = pneg %p139
        $region42: #{graph_reasoning_forward.3} parent=23 // pred_check_branch
          %303 = sbr.rel (%p301) target = $region44
        $region43: #{graph_reasoning_forward.3} parent=23 // pred_region
          %p304 = scmp.lt.s32.totalorder %s15, 1
          %s305 = scalar_select %p304, %s15, 1
          %s306 = smul.addr %s305, 8
          %s307 = scalar_lea.vmem %s4, %s306
        $region44: #{graph_reasoning_forward.3} parent=23 // pred_fallthru
          _
        // Predicated region
        $region45: #{graph_reasoning_forward.3} parent=23 // pred_check
          %p308 = pneg %p165
        $region46: #{graph_reasoning_forward.3} parent=23 // pred_check_branch
          %310 = sbr.rel (%p308) target = $region48
        $region47: #{graph_reasoning_forward.3} parent=23 // pred_region
          %p311 = scmp.lt.s32.totalorder %s15, 1
          %s312 = scalar_select %p311, %s15, 1
          %s313 = smul.addr %s312, 4
          %s314 = scalar_lea.vmem %s5, %s313
        $region48: #{graph_reasoning_forward.3} parent=23 // pred_fallthru
          _
      $region24: #{graph_reasoning_forward.3} parent=5 // pred_fallthru
        _
      %p315 = scmp.le.s32.totalorder 1, %s15
      %p316 = scmp.lt.s32.totalorder %s15, 3
      %p317 = pnand %p315, %p316
      %p318 = pneg %p317
      // Predicated region
      $region49: #{graph_reasoning_forward.3} parent=5 // pred_check
        _
      $region50: #{graph_reasoning_forward.3} parent=5 // pred_check_branch
        %320 = sbr.rel (%p317) target = $region52
      $region51: #{graph_reasoning_forward.3} parent=5 // pred_region
        %s321 = ssub.s32 %s15, 1
        // Predicated region
        $region53: #{graph_reasoning_forward.3} parent=51 // pred_check
          %p322 = pneg %p192
        $region54: #{graph_reasoning_forward.3} parent=51 // pred_check_branch
          %324 = sbr.rel (%p322) target = $region56
        $region55: #{graph_reasoning_forward.3} parent=51 // pred_region
          %325 = dma.done [#allocation4], 16
        $region56: #{graph_reasoning_forward.3} parent=51 // pred_fallthru
          _
        %326 = sfence
        %p327 = scmp.lt.s32.totalorder %s20, 1
        %s328 = scalar_select %p327, %s20, 1
        %s329 = smul.addr %s328, 12
        %s330 = smul.addr %s329, 4
        %s331 = scalar_lea.vmem %s0, %s330
        %p332 = pneg %p41
        %p333 = pneg %p38
        %p334 = scmp.lt.s32.totalorder %s20, 1
        %s335 = scalar_select %p334, %s20, 1
        %s336 = scalar_lea.vmem %s1, %s335
        %p337 = pneg %p67
        %p338 = pneg %p64
        %p339 = scmp.lt.s32.totalorder %s20, 1
        %s340 = scalar_select %p339, %s20, 1
        %s341 = smul.addr %s340, 2
        %s342 = smul.addr %s341, 4
        %s343 = scalar_lea.vmem %s2, %s342
        %p344 = pneg %p93
        %p345 = pneg %p90
        %p346 = scmp.lt.s32.totalorder %s20, 1
        %s347 = scalar_select %p346, %s20, 1
        %s348 = smul.addr %s347, 2
        %s349 = scalar_lea.vmem %s3, %s348
        %p350 = pneg %p119
        %p351 = pneg %p116
        %p352 = scmp.lt.s32.totalorder %s20, 1
        %s353 = scalar_select %p352, %s20, 1
        %s354 = smul.addr %s353, 8
        %s355 = scalar_lea.vmem %s4, %s354
        %p356 = pneg %p145
        %p357 = pneg %p142
        %p358 = scmp.lt.s32.totalorder %s20, 1
        %s359 = scalar_select %p358, %s20, 1
        %s360 = smul.addr %s359, 4
        %s361 = scalar_lea.vmem %s5, %s360
        %p362 = pneg %p171
        %p363 = pneg %p168
        %p364 = pneg %p192
        %p365 = pneg %p189
        %p366 = pneg %p213
        %p367 = pneg %p210
        %p368 = pneg %p239
        %p369 = pneg %p236
        %p370 = scmp.lt.s32.totalorder %s20, 1
        %s371 = scalar_select %p370, %s20, 1
        %s372 = smul.addr %s371, 12
        %s373 = smul.addr %s372, 4
        %s374 = scalar_lea.vmem %s8, %s373
        %p375 = scmp.lt.s32.totalorder %s20, 1
        %s376 = scalar_select %p375, %s20, 1
        %s377 = smul.addr %s376, 12
        %s378 = smul.addr %s377, 4
        %s379 = scalar_lea.vmem %s0, %s378
        %p380 = scmp.lt.s32.totalorder %s20, 1
        %s381 = scalar_select %p380, %s20, 1
        %s382 = scalar_lea.vmem %s1, %s381
        %p383 = scmp.lt.s32.totalorder %s20, 1
        %s384 = scalar_select %p383, %s20, 1
        %s385 = smul.addr %s384, 2
        %s386 = smul.addr %s385, 4
        %s387 = scalar_lea.vmem %s2, %s386
        %p388 = scmp.lt.s32.totalorder %s20, 1
        %s389 = scalar_select %p388, %s20, 1
        %s390 = smul.addr %s389, 2
        %s391 = scalar_lea.vmem %s3, %s390
        %p392 = scmp.lt.s32.totalorder %s20, 1
        %s393 = scalar_select %p392, %s20, 1
        %s394 = smul.addr %s393, 8
        %s395 = scalar_lea.vmem %s4, %s394
        %p396 = scmp.lt.s32.totalorder %s20, 1
        %s397 = scalar_select %p396, %s20, 1
        %s398 = smul.addr %s397, 4
        %s399 = scalar_lea.vmem %s5, %s398
        %p400 = scmp.lt.s32.totalorder %s20, 1
        %s401 = scalar_select %p400, %s20, 1
        %s402 = smul.addr %s401, 12
        %s403 = smul.addr %s402, 4
        %s404 = scalar_lea.vmem %s8, %s403
        %v406 = vld [vmem:[%s382] sm:$0x1]
        %v407 = vld [vmem:[%s387] sm:$0xf]
        %v408 = vld [vmem:[%s387 + $0x4] sm:$0x3]
        %v409 = vld [vmem:[%s391] sm:$0x3]
        %v410 = vld [vmem:[%s395] sm:$0xff]
        %v411 = vld [vmem:[%s399] sm:$0xf]
        %s412 = sld [smem:[#allocation3 + %s20]]
        %v413 = vld [vmem:[%s379] sm:$0xff]
        %v414 = vld [vmem:[%s379 + $0x8] sm:$0xff]
        %v415 = vld [vmem:[%s379 + $0x10] sm:$0xff]
        %v416 = vld [vmem:[%s379 + $0x18] sm:$0xff]
        %v417 = vld [vmem:[%s379 + $0x20] sm:$0xff]
        %v418 = vld [vmem:[%s379 + $0x28] sm:$0xff]
        %v425 = vcombine.high %v413, %v413
        %v426 = vcombine.high %v414, %v414
        %v427 = vcombine.high %v415, %v415
        %v428 = vcombine.high %v416, %v416
        %v429 = vcombine.high %v417, %v417
        %v430 = vcombine.high %v418, %v418
        %v437 = vpack.c.bf16 %v413, %v413
        %v438 = vpack.c.bf16 %v425, %v425
        %v439 = vpack.c.bf16 %v414, %v414
        %v440 = vpack.c.bf16 %v426, %v426
        %v441 = vpack.c.bf16 %v415, %v415
        %v442 = vpack.c.bf16 %v427, %v427
        %v443 = vpack.c.bf16 %v416, %v416
        %v444 = vpack.c.bf16 %v428, %v428
        %v445 = vpack.c.bf16 %v417, %v417
        %v446 = vpack.c.bf16 %v429, %v429
        %v447 = vpack.c.bf16 %v418, %v418
        %v448 = vpack.c.bf16 %v430, %v430
        %vm449 = vcmask 31744
        %v451 = vsel %vm449, %v406, 0
        %vm453 = vcmask 1041408
        %v455 = vsel %vm453, %v437, 0
        %v458 = vsel %vm453, %v438, 0
        %v461 = vsel %vm453, %v439, 0
        %v464 = vsel %vm453, %v440, 0
        %v467 = vsel %vm453, %v441, 0
        %v470 = vsel %vm453, %v442, 0
        %v473 = vsel %vm453, %v443, 0
        %v476 = vsel %vm453, %v444, 0
        %v479 = vsel %vm453, %v445, 0
        %v482 = vsel %vm453, %v446, 0
        %v485 = vsel %vm453, %v447, 0
        %v488 = vsel %vm453, %v448, 0
        %490 = vmatprep.subr.bf16.mxu0 0
        %491 = vmatpush1.bf16.msra.mxu0 0
        %492 = vmatprep.subr.bf16.mxu0 0
        %493 = vmatpush1.bf16.msra.mxu0 0
        %494 = vmatprep.subr.bf16.mxu0 0
        %495 = vmatpush1.bf16.msra.mxu0 0
        %496 = vmatprep.subr.bf16.mxu0 0
        %497 = vmatpush1.bf16.msra.mxu0 0
        %498 = vmatprep.subr.bf16.mxu0 0
        %499 = vmatpush1.bf16.msra.mxu0 0
        %500 = vmatprep.subr.bf16.mxu0 0
        %501 = vmatpush1.bf16.msra.mxu0 0
        %502 = vmatprep.subr.bf16.mxu0 0
        %503 = vmatpush1.bf16.msra.mxu0 0
        %504 = vmatprep.subr.bf16.mxu0 %v458
        %505 = vmatpush1.bf16.msra.mxu0 %v455
        %506 = vmatprep.subr.bf16.mxu0 0
        %507 = vmatpush2.bf16.msra.mxu0 0
        %508 = vmatprep.subr.bf16.mxu0 0
        %509 = vmatpush2.bf16.msra.mxu0 0
        %510 = vmatprep.subr.bf16.mxu0 0
        %511 = vmatpush2.bf16.msra.mxu0 0
        %512 = vmatprep.subr.bf16.mxu0 0
        %513 = vmatpush2.bf16.msra.mxu0 0
        %514 = vmatprep.subr.bf16.mxu0 0
        %515 = vmatpush2.bf16.msra.mxu0 0
        %516 = vmatprep.subr.bf16.mxu0 0
        %517 = vmatpush2.bf16.msra.mxu0 0
        %518 = vmatprep.subr.bf16.mxu0 0
        %519 = vmatpush2.bf16.msra.mxu0 0
        %520 = vmatprep.subr.bf16.mxu0 0
        %521 = vmatpush2.bf16.msra.mxu0 0
        %522 = vmatprep.mubr.bf16.mxu0 0
        %523 = vmatmul.mubr.bf16.gmra.mxu0 %v451
        %v524 = vpop.f32.mrf.mxu0
        %v525 = vadd.f32 0.0, %v524
        %v526 = vpop.f32.mrf.mxu0
        %v527 = vadd.f32 0.0, %v526
        %v528 = vpop.f32.mrf.mxu0
        %v529 = vpop.f32.mrf.mxu0
        %530 = vdwg.mxu0
        %531 = vmatprep.subr.bf16.mxu0 0
        %532 = vmatpush1.bf16.msra.mxu0 0
        %533 = vmatprep.subr.bf16.mxu0 0
        %534 = vmatpush1.bf16.msra.mxu0 0
        %535 = vmatprep.subr.bf16.mxu0 0
        %536 = vmatpush1.bf16.msra.mxu0 0
        %537 = vmatprep.subr.bf16.mxu0 0
        %538 = vmatpush1.bf16.msra.mxu0 0
        %539 = vmatprep.subr.bf16.mxu0 0
        %540 = vmatpush1.bf16.msra.mxu0 0
        %541 = vmatprep.subr.bf16.mxu0 0
        %542 = vmatpush1.bf16.msra.mxu0 0
        %543 = vmatprep.subr.bf16.mxu0 0
        %544 = vmatpush1.bf16.msra.mxu0 0
        %545 = vmatprep.subr.bf16.mxu0 %v464
        %546 = vmatpush1.bf16.msra.mxu0 %v461
        %547 = vmatprep.subr.bf16.mxu0 0
        %548 = vmatpush2.bf16.msra.mxu0 0
        %549 = vmatprep.subr.bf16.mxu0 0
        %550 = vmatpush2.bf16.msra.mxu0 0
        %551 = vmatprep.subr.bf16.mxu0 0
        %552 = vmatpush2.bf16.msra.mxu0 0
        %553 = vmatprep.subr.bf16.mxu0 0
        %554 = vmatpush2.bf16.msra.mxu0 0
        %555 = vmatprep.subr.bf16.mxu0 0
        %556 = vmatpush2.bf16.msra.mxu0 0
        %557 = vmatprep.subr.bf16.mxu0 0
        %558 = vmatpush2.bf16.msra.mxu0 0
        %559 = vmatprep.subr.bf16.mxu0 0
        %560 = vmatpush2.bf16.msra.mxu0 0
        %561 = vmatprep.subr.bf16.mxu0 0
        %562 = vmatpush2.bf16.msra.mxu0 0
        %563 = vmatprep.mubr.bf16.mxu0 0
        %564 = vmatmul.mubr.bf16.gmra.mxu0 %v451
        %v565 = vpop.f32.mrf.mxu0
        %v566 = vadd.f32 0.0, %v565
        %v567 = vpop.f32.mrf.mxu0
        %v568 = vadd.f32 0.0, %v567
        %v569 = vpop.f32.mrf.mxu0
        %v570 = vpop.f32.mrf.mxu0
        %571 = vdwg.mxu0
        %572 = vmatprep.subr.bf16.mxu0 0
        %573 = vmatpush1.bf16.msra.mxu0 0
        %574 = vmatprep.subr.bf16.mxu0 0
        %575 = vmatpush1.bf16.msra.mxu0 0
        %576 = vmatprep.subr.bf16.mxu0 0
        %577 = vmatpush1.bf16.msra.mxu0 0
        %578 = vmatprep.subr.bf16.mxu0 0
        %579 = vmatpush1.bf16.msra.mxu0 0
        %580 = vmatprep.subr.bf16.mxu0 0
        %581 = vmatpush1.bf16.msra.mxu0 0
        %582 = vmatprep.subr.bf16.mxu0 0
        %583 = vmatpush1.bf16.msra.mxu0 0
        %584 = vmatprep.subr.bf16.mxu0 0
        %585 = vmatpush1.bf16.msra.mxu0 0
        %586 = vmatprep.subr.bf16.mxu0 %v470
        %587 = vmatpush1.bf16.msra.mxu0 %v467
        %588 = vmatprep.subr.bf16.mxu0 0
        %589 = vmatpush2.bf16.msra.mxu0 0
        %590 = vmatprep.subr.bf16.mxu0 0
        %591 = vmatpush2.bf16.msra.mxu0 0
        %592 = vmatprep.subr.bf16.mxu0 0
        %593 = vmatpush2.bf16.msra.mxu0 0
        %594 = vmatprep.subr.bf16.mxu0 0
        %595 = vmatpush2.bf16.msra.mxu0 0
        %596 = vmatprep.subr.bf16.mxu0 0
        %597 = vmatpush2.bf16.msra.mxu0 0
        %598 = vmatprep.subr.bf16.mxu0 0
        %599 = vmatpush2.bf16.msra.mxu0 0
        %600 = vmatprep.subr.bf16.mxu0 0
        %601 = vmatpush2.bf16.msra.mxu0 0
        %602 = vmatprep.subr.bf16.mxu0 0
        %603 = vmatpush2.bf16.msra.mxu0 0
        %604 = vmatprep.mubr.bf16.mxu0 0
        %605 = vmatmul.mubr.bf16.gmra.mxu0 %v451
        %v606 = vpop.f32.mrf.mxu0
        %v607 = vadd.f32 0.0, %v606
        %v608 = vpop.f32.mrf.mxu0
        %v609 = vadd.f32 0.0, %v608
        %v610 = vpop.f32.mrf.mxu0
        %v611 = vpop.f32.mrf.mxu0
        %612 = vdwg.mxu0
        %613 = vmatprep.subr.bf16.mxu0 0
        %614 = vmatpush1.bf16.msra.mxu0 0
        %615 = vmatprep.subr.bf16.mxu0 0
        %616 = vmatpush1.bf16.msra.mxu0 0
        %617 = vmatprep.subr.bf16.mxu0 0
        %618 = vmatpush1.bf16.msra.mxu0 0
        %619 = vmatprep.subr.bf16.mxu0 0
        %620 = vmatpush1.bf16.msra.mxu0 0
        %621 = vmatprep.subr.bf16.mxu0 0
        %622 = vmatpush1.bf16.msra.mxu0 0
        %623 = vmatprep.subr.bf16.mxu0 0
        %624 = vmatpush1.bf16.msra.mxu0 0
        %625 = vmatprep.subr.bf16.mxu0 0
        %626 = vmatpush1.bf16.msra.mxu0 0
        %627 = vmatprep.subr.bf16.mxu0 %v476
        %628 = vmatpush1.bf16.msra.mxu0 %v473
        %629 = vmatprep.subr.bf16.mxu0 0
        %630 = vmatpush2.bf16.msra.mxu0 0
        %631 = vmatprep.subr.bf16.mxu0 0
        %632 = vmatpush2.bf16.msra.mxu0 0
        %633 = vmatprep.subr.bf16.mxu0 0
        %634 = vmatpush2.bf16.msra.mxu0 0
        %635 = vmatprep.subr.bf16.mxu0 0
        %636 = vmatpush2.bf16.msra.mxu0 0
        %637 = vmatprep.subr.bf16.mxu0 0
        %638 = vmatpush2.bf16.msra.mxu0 0
        %639 = vmatprep.subr.bf16.mxu0 0
        %640 = vmatpush2.bf16.msra.mxu0 0
        %641 = vmatprep.subr.bf16.mxu0 0
        %642 = vmatpush2.bf16.msra.mxu0 0
        %643 = vmatprep.subr.bf16.mxu0 0
        %644 = vmatpush2.bf16.msra.mxu0 0
        %645 = vmatprep.mubr.bf16.mxu0 0
        %646 = vmatmul.mubr.bf16.gmra.mxu0 %v451
        %v647 = vpop.f32.mrf.mxu0
        %v648 = vadd.f32 0.0, %v647
        %v649 = vpop.f32.mrf.mxu0
        %v650 = vadd.f32 0.0, %v649
        %v651 = vpop.f32.mrf.mxu0
        %v652 = vpop.f32.mrf.mxu0
        %653 = vdwg.mxu0
        %654 = vmatprep.subr.bf16.mxu0 0
        %655 = vmatpush1.bf16.msra.mxu0 0
        %656 = vmatprep.subr.bf16.mxu0 0
        %657 = vmatpush1.bf16.msra.mxu0 0
        %658 = vmatprep.subr.bf16.mxu0 0
        %659 = vmatpush1.bf16.msra.mxu0 0
        %660 = vmatprep.subr.bf16.mxu0 0
        %661 = vmatpush1.bf16.msra.mxu0 0
        %662 = vmatprep.subr.bf16.mxu0 0
        %663 = vmatpush1.bf16.msra.mxu0 0
        %664 = vmatprep.subr.bf16.mxu0 0
        %665 = vmatpush1.bf16.msra.mxu0 0
        %666 = vmatprep.subr.bf16.mxu0 0
        %667 = vmatpush1.bf16.msra.mxu0 0
        %668 = vmatprep.subr.bf16.mxu0 %v482
        %669 = vmatpush1.bf16.msra.mxu0 %v479
        %670 = vmatprep.subr.bf16.mxu0 0
        %671 = vmatpush2.bf16.msra.mxu0 0
        %672 = vmatprep.subr.bf16.mxu0 0
        %673 = vmatpush2.bf16.msra.mxu0 0
        %674 = vmatprep.subr.bf16.mxu0 0
        %675 = vmatpush2.bf16.msra.mxu0 0
        %676 = vmatprep.subr.bf16.mxu0 0
        %677 = vmatpush2.bf16.msra.mxu0 0
        %678 = vmatprep.subr.bf16.mxu0 0
        %679 = vmatpush2.bf16.msra.mxu0 0
        %680 = vmatprep.subr.bf16.mxu0 0
        %681 = vmatpush2.bf16.msra.mxu0 0
        %682 = vmatprep.subr.bf16.mxu0 0
        %683 = vmatpush2.bf16.msra.mxu0 0
        %684 = vmatprep.subr.bf16.mxu0 0
        %685 = vmatpush2.bf16.msra.mxu0 0
        %686 = vmatprep.mubr.bf16.mxu0 0
        %687 = vmatmul.mubr.bf16.gmra.mxu0 %v451
        %v688 = vpop.f32.mrf.mxu0
        %v689 = vadd.f32 0.0, %v688
        %v690 = vpop.f32.mrf.mxu0
        %v691 = vadd.f32 0.0, %v690
        %v692 = vpop.f32.mrf.mxu0
        %v693 = vpop.f32.mrf.mxu0
        %694 = vdwg.mxu0
        %695 = vmatprep.subr.bf16.mxu0 0
        %696 = vmatpush1.bf16.msra.mxu0 0
        %697 = vmatprep.subr.bf16.mxu0 0
        %698 = vmatpush1.bf16.msra.mxu0 0
        %699 = vmatprep.subr.bf16.mxu0 0
        %700 = vmatpush1.bf16.msra.mxu0 0
        %701 = vmatprep.subr.bf16.mxu0 0
        %702 = vmatpush1.bf16.msra.mxu0 0
        %703 = vmatprep.subr.bf16.mxu0 0
        %704 = vmatpush1.bf16.msra.mxu0 0
        %705 = vmatprep.subr.bf16.mxu0 0
        %706 = vmatpush1.bf16.msra.mxu0 0
        %707 = vmatprep.subr.bf16.mxu0 0
        %708 = vmatpush1.bf16.msra.mxu0 0
        %709 = vmatprep.subr.bf16.mxu0 %v488
        %710 = vmatpush1.bf16.msra.mxu0 %v485
        %711 = vmatprep.subr.bf16.mxu0 0
        %712 = vmatpush2.bf16.msra.mxu0 0
        %713 = vmatprep.subr.bf16.mxu0 0
        %714 = vmatpush2.bf16.msra.mxu0 0
        %715 = vmatprep.subr.bf16.mxu0 0
        %716 = vmatpush2.bf16.msra.mxu0 0
        %717 = vmatprep.subr.bf16.mxu0 0
        %718 = vmatpush2.bf16.msra.mxu0 0
        %719 = vmatprep.subr.bf16.mxu0 0
        %720 = vmatpush2.bf16.msra.mxu0 0
        %721 = vmatprep.subr.bf16.mxu0 0
        %722 = vmatpush2.bf16.msra.mxu0 0
        %723 = vmatprep.subr.bf16.mxu0 0
        %724 = vmatpush2.bf16.msra.mxu0 0
        %725 = vmatprep.subr.bf16.mxu0 0
        %726 = vmatpush2.bf16.msra.mxu0 0
        %727 = vmatprep.mubr.bf16.mxu0 0
        %728 = vmatmul.mubr.bf16.gmra.mxu0 %v451
        %v729 = vpop.f32.mrf.mxu0
        %v730 = vadd.f32 0.0, %v729
        %v731 = vpop.f32.mrf.mxu0
        %v732 = vadd.f32 0.0, %v731
        %v733 = vpop.f32.mrf.mxu0
        %v734 = vpop.f32.mrf.mxu0
        %735 = vdwg.mxu0
        %v740 = vcombine.low %v607, %v609
        %v741 = vcombine.low %v648, %v650
        %v743 = vunpack.c.l.s4 1966171168
        %v744 = vunpack.c.0.s8 %v743
        %v745 = vlaneseq
        %v746 = vshrl.u32 %v745, 7
        %v747 = vsub.s32 %v744, %v746
        %v748 = vrot.slane %v740, %v747
        %v750 = vunpack.c.l.s4 1966171168
        %v751 = vunpack.c.0.s8 %v750
        %v752 = vlaneseq
        %v753 = vshrl.u32 %v752, 7
        %v754 = vsub.s32 %v751, %v753
        %v755 = vrot.slane %v741, %v754
        %v756 = vcombine.low %v748, %v755
        %v758 = vunpack.c.l.s4 1966171168
        %v759 = vunpack.c.0.s8 %v758
        %v760 = vlaneseq
        %v761 = vshrl.u32 %v760, 7
        %v762 = vsub.s32 %v759, %v761
        %v763 = vrot.slane %v756, %v762
        %v765 = vlaneseq
        %vm766 = vcmp.ge.s32.totalorder %v765, 0
        %vm767 = vcmp.lt.s32.totalorder %v765, 512
        %vm768 = vmand %vm766, %vm767
        %769 = vst.msk [vmem:[#allocation2] ss:$2 sm:$0xf] %vm768, %v763
        %v774 = vcombine.low %v689, %v691
        %v775 = vcombine.low %v730, %v732
        %v777 = vunpack.c.l.s4 1966171168
        %v778 = vunpack.c.0.s8 %v777
        %v779 = vlaneseq
        %v780 = vshrl.u32 %v779, 7
        %v781 = vsub.s32 %v778, %v780
        %v782 = vrot.slane %v774, %v781
        %v784 = vunpack.c.l.s4 1966171168
        %v785 = vunpack.c.0.s8 %v784
        %v786 = vlaneseq
        %v787 = vshrl.u32 %v786, 7
        %v788 = vsub.s32 %v785, %v787
        %v789 = vrot.slane %v775, %v788
        %v790 = vcombine.high %v782, %v789
        %v792 = vunpack.c.l.s4 1966171168
        %v793 = vunpack.c.0.s8 %v792
        %v794 = vlaneseq
        %v795 = vshrl.u32 %v794, 7
        %v796 = vsub.s32 %v793, %v795
        %v797 = vrot.slane %v790, %v796
        %s799 = scalar_lea.vmem [#allocation2], 1
        %800 = vst.msk [vmem:[%s799] ss:$2 sm:$0xf] %vm768, %v797
        %v805 = vcombine.low %v525, %v527
        %v806 = vcombine.low %v566, %v568
        %v808 = vunpack.c.l.s4 1966171168
        %v809 = vunpack.c.0.s8 %v808
        %v810 = vlaneseq
        %v811 = vshrl.u32 %v810, 7
        %v812 = vsub.s32 %v809, %v811
        %v813 = vrot.slane %v805, %v812
        %v815 = vunpack.c.l.s4 1966171168
        %v816 = vunpack.c.0.s8 %v815
        %v817 = vlaneseq
        %v818 = vshrl.u32 %v817, 7
        %v819 = vsub.s32 %v816, %v818
        %v820 = vrot.slane %v806, %v819
        %v821 = vcombine.low %v813, %v820
        %v823 = vunpack.c.l.s4 1966171168
        %v824 = vunpack.c.0.s8 %v823
        %v825 = vlaneseq
        %v826 = vshrl.u32 %v825, 7
        %v827 = vsub.s32 %v824, %v826
        %v828 = vrot.slane %v821, %v827
        %s830 = scalar_lea.vmem [#allocation2], 8
        %831 = vst.msk [vmem:[%s830] ss:$2 sm:$0xf] %vm768, %v828
        %s832 = scalar_lea.vmem [#allocation2], 9
        %833 = vst.msk [vmem:[%s832] ss:$2 sm:$0xf] %vm768, %v797
        %s834 = scalar_lea.vmem [#allocation2], 16
        %835 = vst.msk [vmem:[%s834] ss:$2 sm:$0xf] %vm768, %v828
        %v836 = vcombine.high %v748, %v755
        %v838 = vunpack.c.l.s4 1966171168
        %v839 = vunpack.c.0.s8 %v838
        %v840 = vlaneseq
        %v841 = vshrl.u32 %v840, 7
        %v842 = vsub.s32 %v839, %v841
        %v843 = vrot.slane %v836, %v842
        %s845 = scalar_lea.vmem [#allocation2], 17
        %846 = vst.msk [vmem:[%s845] ss:$2 sm:$0xf] %vm768, %v843
        %v847 = vld [vmem:[#allocation2] sm:$0xff]
        %v848 = vld [vmem:[#allocation2 + $0x8] sm:$0xff]
        %v849 = vld [vmem:[#allocation2 + $0x10] sm:$0xff]
        %v853 = vcombine.high %v847, %v847
        %v855 = vunpack.c.l.s4 1983009808
        %v856 = vunpack.c.0.s8 %v855
        %v857 = vlaneseq
        %v858 = vshrl.u32 %v857, 7
        %v859 = vsub.s32 %v856, %v858
        %v860 = vrot.slane %v847, %v859
        %v862 = vunpack.c.l.s4 1983009808
        %v863 = vunpack.c.0.s8 %v862
        %v864 = vlaneseq
        %v865 = vshrl.u32 %v864, 7
        %v866 = vsub.s32 %v863, %v865
        %v867 = vrot.slane %v853, %v866
        %v868 = vcombine.high %v860, %v860
        %v869 = vcombine.high %v867, %v867
        %v870 = vcombine.high %v848, %v848
        %v872 = vunpack.c.l.s4 1983009808
        %v873 = vunpack.c.0.s8 %v872
        %v874 = vlaneseq
        %v875 = vshrl.u32 %v874, 7
        %v876 = vsub.s32 %v873, %v875
        %v877 = vrot.slane %v848, %v876
        %v879 = vunpack.c.l.s4 1983009808
        %v880 = vunpack.c.0.s8 %v879
        %v881 = vlaneseq
        %v882 = vshrl.u32 %v881, 7
        %v883 = vsub.s32 %v880, %v882
        %v884 = vrot.slane %v870, %v883
        %v885 = vcombine.high %v877, %v877
        %v886 = vcombine.high %v884, %v884
        %v887 = vcombine.high %v849, %v849
        %v889 = vunpack.c.l.s4 1983009808
        %v890 = vunpack.c.0.s8 %v889
        %v891 = vlaneseq
        %v892 = vshrl.u32 %v891, 7
        %v893 = vsub.s32 %v890, %v892
        %v894 = vrot.slane %v849, %v893
        %v896 = vunpack.c.l.s4 1983009808
        %v897 = vunpack.c.0.s8 %v896
        %v898 = vlaneseq
        %v899 = vshrl.u32 %v898, 7
        %v900 = vsub.s32 %v897, %v899
        %v901 = vrot.slane %v887, %v900
        %v902 = vcombine.high %v894, %v894
        %v903 = vcombine.high %v901, %v901
        %v916 = vsub.f32 %v525, %v860
        %v917 = vsub.f32 %v527, %v868
        %v918 = vsub.f32 %v566, %v867
        %v919 = vsub.f32 %v568, %v869
        %v920 = vsub.f32 %v607, %v877
        %v921 = vsub.f32 %v609, %v885
        %v922 = vsub.f32 %v648, %v884
        %v923 = vsub.f32 %v650, %v886
        %v924 = vsub.f32 %v689, %v894
        %v925 = vsub.f32 %v691, %v902
        %v926 = vsub.f32 %v730, %v901
        %v927 = vsub.f32 %v732, %v903
        %v928 = vxor.u32 %v916, 2147483648
        %v929 = vxor.u32 %v917, 2147483648
        %v930 = vxor.u32 %v918, 2147483648
        %v931 = vxor.u32 %v919, 2147483648
        %v932 = vxor.u32 %v920, 2147483648
        %v933 = vxor.u32 %v921, 2147483648
        %v934 = vxor.u32 %v922, 2147483648
        %v935 = vxor.u32 %v923, 2147483648
        %v936 = vxor.u32 %v924, 2147483648
        %v937 = vxor.u32 %v925, 2147483648
        %v938 = vxor.u32 %v926, 2147483648
        %v939 = vxor.u32 %v927, 2147483648
        %v940 = vmul.f32 %v928, 1.442695
        %v941 = vpow.pop %v940
        %v942 = vmul.f32 %v929, 1.442695
        %v943 = vpow.pop %v942
        %v944 = vmul.f32 %v930, 1.442695
        %v945 = vpow.pop %v944
        %v946 = vmul.f32 %v931, 1.442695
        %v947 = vpow.pop %v946
        %v948 = vmul.f32 %v932, 1.442695
        %v949 = vpow.pop %v948
        %v950 = vmul.f32 %v933, 1.442695
        %v951 = vpow.pop %v950
        %v952 = vmul.f32 %v934, 1.442695
        %v953 = vpow.pop %v952
        %v954 = vmul.f32 %v935, 1.442695
        %v955 = vpow.pop %v954
        %v956 = vmul.f32 %v936, 1.442695
        %v957 = vpow.pop %v956
        %v958 = vmul.f32 %v937, 1.442695
        %v959 = vpow.pop %v958
        %v960 = vmul.f32 %v938, 1.442695
        %v961 = vpow.pop %v960
        %v962 = vmul.f32 %v939, 1.442695
        %v963 = vpow.pop %v962
        %v964 = vadd.f32 %v941, 1.0
        %v965 = vadd.f32 %v943, 1.0
        %v966 = vadd.f32 %v945, 1.0
        %v967 = vadd.f32 %v947, 1.0
        %v968 = vadd.f32 %v949, 1.0
        %v969 = vadd.f32 %v951, 1.0
        %v970 = vadd.f32 %v953, 1.0
        %v971 = vadd.f32 %v955, 1.0
        %v972 = vadd.f32 %v957, 1.0
        %v973 = vadd.f32 %v959, 1.0
        %v974 = vadd.f32 %v961, 1.0
        %v975 = vadd.f32 %v963, 1.0
        %v976 = vrcp.pop %v964
        %v977 = vmul.f32 1.0, %v976
        %v978 = vrcp.pop %v965
        %v979 = vmul.f32 1.0, %v978
        %v980 = vrcp.pop %v966
        %v981 = vmul.f32 1.0, %v980
        %v982 = vrcp.pop %v967
        %v983 = vmul.f32 1.0, %v982
        %v984 = vrcp.pop %v968
        %v985 = vmul.f32 1.0, %v984
        %v986 = vrcp.pop %v969
        %v987 = vmul.f32 1.0, %v986
        %v988 = vrcp.pop %v970
        %v989 = vmul.f32 1.0, %v988
        %v990 = vrcp.pop %v971
        %v991 = vmul.f32 1.0, %v990
        %v992 = vrcp.pop %v972
        %v993 = vmul.f32 1.0, %v992
        %v994 = vrcp.pop %v973
        %v995 = vmul.f32 1.0, %v994
        %v996 = vrcp.pop %v974
        %v997 = vmul.f32 1.0, %v996
        %v998 = vrcp.pop %v975
        %v999 = vmul.f32 1.0, %v998
        %v1012 = vrot.slane %v977, 6
        %v1013 = vrot.slane %v979, 6
        %v1014 = vrot.slane %v981, 6
        %v1015 = vrot.slane %v983, 6
        %v1016 = vrot.slane %v985, 6
        %v1017 = vrot.slane %v987, 6
        %v1018 = vrot.slane %v989, 6
        %v1019 = vrot.slane %v991, 6
        %v1020 = vrot.slane %v993, 6
        %v1021 = vrot.slane %v995, 6
        %v1022 = vrot.slane %v997, 6
        %v1023 = vrot.slane %v999, 6
        %v1036 = vsel %vm453, %v977, %v1012
        %v1037 = vsel %vm453, %v979, %v1013
        %v1038 = vsel %vm453, %v981, %v1014
        %v1039 = vsel %vm453, %v983, %v1015
        %v1040 = vsel %vm453, %v985, %v1016
        %v1041 = vsel %vm453, %v987, %v1017
        %v1042 = vsel %vm453, %v989, %v1018
        %v1043 = vsel %vm453, %v991, %v1019
        %v1044 = vsel %vm453, %v993, %v1020
        %v1045 = vsel %vm453, %v995, %v1021
        %v1046 = vsel %vm453, %v997, %v1022
        %v1047 = vsel %vm453, %v999, %v1023
        %v1048 = vadd.f32 %v413, %v415
        %v1049 = vadd.f32 %v414, %v416
        %v1050 = vadd.f32 %v1048, %v417
        %v1051 = vadd.f32 %v1049, %v418
        %v1054 = vcombine.high %v1050, %v1050
        %v1055 = vcombine.high %v1051, %v1051
        %v1058 = vsub.f32 %v1050, %v413
        %v1059 = vsub.f32 %v1054, %v425
        %v1060 = vsub.f32 %v1051, %v414
        %v1061 = vsub.f32 %v1055, %v426
        %v1062 = vsub.f32 %v1050, %v415
        %v1063 = vsub.f32 %v1054, %v427
        %v1064 = vsub.f32 %v1051, %v416
        %v1065 = vsub.f32 %v1055, %v428
        %v1066 = vsub.f32 %v1050, %v417
        %v1067 = vsub.f32 %v1054, %v429
        %v1068 = vsub.f32 %v1051, %v418
        %v1069 = vsub.f32 %v1055, %v430
        %v1070 = vmul.f32 %v1058, %v1036
        %v1071 = vmul.f32 %v1059, %v1037
        %v1072 = vmul.f32 %v1060, %v1038
        %v1073 = vmul.f32 %v1061, %v1039
        %v1074 = vmul.f32 %v1062, %v1040
        %v1075 = vmul.f32 %v1063, %v1041
        %v1076 = vmul.f32 %v1064, %v1042
        %v1077 = vmul.f32 %v1065, %v1043
        %v1078 = vmul.f32 %v1066, %v1044
        %v1079 = vmul.f32 %v1067, %v1045
        %v1080 = vmul.f32 %v1068, %v1046
        %v1081 = vmul.f32 %v1069, %v1047
        %v1082 = vpack.c.bf16 %v1070, %v1070
        %v1083 = vpack.c.bf16 %v1071, %v1071
        %v1084 = vpack.c.bf16 %v1072, %v1072
        %v1085 = vpack.c.bf16 %v1073, %v1073
        %v1086 = vpack.c.bf16 %v1074, %v1074
        %v1087 = vpack.c.bf16 %v1075, %v1075
        %v1088 = vpack.c.bf16 %v1076, %v1076
        %v1089 = vpack.c.bf16 %v1077, %v1077
        %v1090 = vpack.c.bf16 %v1078, %v1078
        %v1091 = vpack.c.bf16 %v1079, %v1079
        %v1092 = vpack.c.bf16 %v1080, %v1080
        %v1093 = vpack.c.bf16 %v1081, %v1081
        %v1106 = vrot.slane %v437, 6
        %v1107 = vrot.slane %v438, 6
        %v1108 = vrot.slane %v439, 6
        %v1109 = vrot.slane %v440, 6
        %v1110 = vrot.slane %v441, 6
        %v1111 = vrot.slane %v442, 6
        %v1112 = vrot.slane %v443, 6
        %v1113 = vrot.slane %v444, 6
        %v1114 = vrot.slane %v445, 6
        %v1115 = vrot.slane %v446, 6
        %v1116 = vrot.slane %v447, 6
        %v1117 = vrot.slane %v448, 6
        %v1120 = vsel %vm453, %v1082, %v1106
        %v1123 = vsel %vm453, %v1083, %v1107
        %v1126 = vsel %vm453, %v1084, %v1108
        %v1129 = vsel %vm453, %v1085, %v1109
        %v1132 = vsel %vm453, %v1086, %v1110
        %v1135 = vsel %vm453, %v1087, %v1111
        %v1138 = vsel %vm453, %v1088, %v1112
        %v1141 = vsel %vm453, %v1089, %v1113
        %v1144 = vsel %vm453, %v1090, %v1114
        %v1147 = vsel %vm453, %v1091, %v1115
        %v1150 = vsel %vm453, %v1092, %v1116
        %v1153 = vsel %vm453, %v1093, %v1117
        %v1156 = vunpack.c.l.b16 %v407
        %v1157 = vunpack.c.l.b16 %v408
        %v1158 = vpack.c.b16 %v1157, %v1156
        %vm1159 = vcmask 64512
        %v1161 = vsel %vm1159, %v1158, 0
        %vm1163 = vcmask 1043456
        %v1164 = vsel %vm1163, %v1120, 0
        %v1166 = vsel %vm1163, %v1123, 0
        %v1168 = vsel %vm1163, %v1126, 0
        %v1170 = vsel %vm1163, %v1129, 0
        %v1172 = vsel %vm1163, %v1132, 0
        %v1174 = vsel %vm1163, %v1135, 0
        %v1176 = vsel %vm1163, %v1138, 0
        %v1178 = vsel %vm1163, %v1141, 0
        %v1180 = vsel %vm1163, %v1144, 0
        %v1182 = vsel %vm1163, %v1147, 0
        %v1184 = vsel %vm1163, %v1150, 0
        %v1186 = vsel %vm1163, %v1153, 0
        %1188 = vmatprep.subr.bf16.mxu0 0
        %1189 = vmatpush1.bf16.msra.mxu0 0
        %1190 = vmatprep.subr.bf16.mxu0 0
        %1191 = vmatpush1.bf16.msra.mxu0 0
        %1192 = vmatprep.subr.bf16.mxu0 0
        %1193 = vmatpush1.bf16.msra.mxu0 0
        %1194 = vmatprep.subr.bf16.mxu0 0
        %1195 = vmatpush1.bf16.msra.mxu0 0
        %1196 = vmatprep.subr.bf16.mxu0 0
        %1197 = vmatpush1.bf16.msra.mxu0 0
        %1198 = vmatprep.subr.bf16.mxu0 0
        %1199 = vmatpush1.bf16.msra.mxu0 0
        %1200 = vmatprep.subr.bf16.mxu0 0
        %1201 = vmatpush1.bf16.msra.mxu0 0
        %1202 = vmatprep.subr.bf16.mxu0 %v1166
        %1203 = vmatpush1.bf16.msra.mxu0 %v1164
        %1204 = vmatprep.subr.bf16.mxu0 0
        %1205 = vmatpush2.bf16.msra.mxu0 0
        %1206 = vmatprep.subr.bf16.mxu0 0
        %1207 = vmatpush2.bf16.msra.mxu0 0
        %1208 = vmatprep.subr.bf16.mxu0 0
        %1209 = vmatpush2.bf16.msra.mxu0 0
        %1210 = vmatprep.subr.bf16.mxu0 0
        %1211 = vmatpush2.bf16.msra.mxu0 0
        %1212 = vmatprep.subr.bf16.mxu0 0
        %1213 = vmatpush2.bf16.msra.mxu0 0
        %1214 = vmatprep.subr.bf16.mxu0 0
        %1215 = vmatpush2.bf16.msra.mxu0 0
        %1216 = vmatprep.subr.bf16.mxu0 0
        %1217 = vmatpush2.bf16.msra.mxu0 0
        %1218 = vmatprep.subr.bf16.mxu0 0
        %1219 = vmatpush2.bf16.msra.mxu0 0
        %1220 = vmatprep.mubr.bf16.mxu0 0
        %1221 = vmatmul.mubr.bf16.gmra.mxu0 %v1161
        %v1222 = vpop.f32.mrf.mxu0
        %v1223 = vadd.f32 0.0, %v1222
        %v1224 = vpop.f32.mrf.mxu0
        %v1225 = vadd.f32 0.0, %v1224
        %v1226 = vpop.f32.mrf.mxu0
        %v1227 = vadd.f32 0.0, %v1226
        %v1228 = vpop.f32.mrf.mxu0
        %v1229 = vadd.f32 0.0, %v1228
        %1230 = vdwg.mxu0
        %1231 = vmatprep.subr.bf16.mxu0 0
        %1232 = vmatpush1.bf16.msra.mxu0 0
        %1233 = vmatprep.subr.bf16.mxu0 0
        %1234 = vmatpush1.bf16.msra.mxu0 0
        %1235 = vmatprep.subr.bf16.mxu0 0
        %1236 = vmatpush1.bf16.msra.mxu0 0
        %1237 = vmatprep.subr.bf16.mxu0 0
        %1238 = vmatpush1.bf16.msra.mxu0 0
        %1239 = vmatprep.subr.bf16.mxu0 0
        %1240 = vmatpush1.bf16.msra.mxu0 0
        %1241 = vmatprep.subr.bf16.mxu0 0
        %1242 = vmatpush1.bf16.msra.mxu0 0
        %1243 = vmatprep.subr.bf16.mxu0 0
        %1244 = vmatpush1.bf16.msra.mxu0 0
        %1245 = vmatprep.subr.bf16.mxu0 %v1170
        %1246 = vmatpush1.bf16.msra.mxu0 %v1168
        %1247 = vmatprep.subr.bf16.mxu0 0
        %1248 = vmatpush2.bf16.msra.mxu0 0
        %1249 = vmatprep.subr.bf16.mxu0 0
        %1250 = vmatpush2.bf16.msra.mxu0 0
        %1251 = vmatprep.subr.bf16.mxu0 0
        %1252 = vmatpush2.bf16.msra.mxu0 0
        %1253 = vmatprep.subr.bf16.mxu0 0
        %1254 = vmatpush2.bf16.msra.mxu0 0
        %1255 = vmatprep.subr.bf16.mxu0 0
        %1256 = vmatpush2.bf16.msra.mxu0 0
        %1257 = vmatprep.subr.bf16.mxu0 0
        %1258 = vmatpush2.bf16.msra.mxu0 0
        %1259 = vmatprep.subr.bf16.mxu0 0
        %1260 = vmatpush2.bf16.msra.mxu0 0
        %1261 = vmatprep.subr.bf16.mxu0 0
        %1262 = vmatpush2.bf16.msra.mxu0 0
        %1263 = vmatprep.mubr.bf16.mxu0 0
        %1264 = vmatmul.mubr.bf16.gmra.mxu0 %v1161
        %v1265 = vpop.f32.mrf.mxu0
        %v1266 = vadd.f32 0.0, %v1265
        %v1267 = vpop.f32.mrf.mxu0
        %v1268 = vadd.f32 0.0, %v1267
        %v1269 = vpop.f32.mrf.mxu0
        %v1270 = vadd.f32 0.0, %v1269
        %v1271 = vpop.f32.mrf.mxu0
        %v1272 = vadd.f32 0.0, %v1271
        %1273 = vdwg.mxu0
        %1274 = vmatprep.subr.bf16.mxu0 0
        %1275 = vmatpush1.bf16.msra.mxu0 0
        %1276 = vmatprep.subr.bf16.mxu0 0
        %1277 = vmatpush1.bf16.msra.mxu0 0
        %1278 = vmatprep.subr.bf16.mxu0 0
        %1279 = vmatpush1.bf16.msra.mxu0 0
        %1280 = vmatprep.subr.bf16.mxu0 0
        %1281 = vmatpush1.bf16.msra.mxu0 0
        %1282 = vmatprep.subr.bf16.mxu0 0
        %1283 = vmatpush1.bf16.msra.mxu0 0
        %1284 = vmatprep.subr.bf16.mxu0 0
        %1285 = vmatpush1.bf16.msra.mxu0 0
        %1286 = vmatprep.subr.bf16.mxu0 0
        %1287 = vmatpush1.bf16.msra.mxu0 0
        %1288 = vmatprep.subr.bf16.mxu0 %v1174
        %1289 = vmatpush1.bf16.msra.mxu0 %v1172
        %1290 = vmatprep.subr.bf16.mxu0 0
        %1291 = vmatpush2.bf16.msra.mxu0 0
        %1292 = vmatprep.subr.bf16.mxu0 0
        %1293 = vmatpush2.bf16.msra.mxu0 0
        %1294 = vmatprep.subr.bf16.mxu0 0
        %1295 = vmatpush2.bf16.msra.mxu0 0
        %1296 = vmatprep.subr.bf16.mxu0 0
        %1297 = vmatpush2.bf16.msra.mxu0 0
        %1298 = vmatprep.subr.bf16.mxu0 0
        %1299 = vmatpush2.bf16.msra.mxu0 0
        %1300 = vmatprep.subr.bf16.mxu0 0
        %1301 = vmatpush2.bf16.msra.mxu0 0
        %1302 = vmatprep.subr.bf16.mxu0 0
        %1303 = vmatpush2.bf16.msra.mxu0 0
        %1304 = vmatprep.subr.bf16.mxu0 0
        %1305 = vmatpush2.bf16.msra.mxu0 0
        %1306 = vmatprep.mubr.bf16.mxu0 0
        %1307 = vmatmul.mubr.bf16.gmra.mxu0 %v1161
        %v1308 = vpop.f32.mrf.mxu0
        %v1309 = vadd.f32 0.0, %v1308
        %v1310 = vpop.f32.mrf.mxu0
        %v1311 = vadd.f32 0.0, %v1310
        %v1312 = vpop.f32.mrf.mxu0
        %v1313 = vadd.f32 0.0, %v1312
        %v1314 = vpop.f32.mrf.mxu0
        %v1315 = vadd.f32 0.0, %v1314
        %1316 = vdwg.mxu0
        %1317 = vmatprep.subr.bf16.mxu0 0
        %1318 = vmatpush1.bf16.msra.mxu0 0
        %1319 = vmatprep.subr.bf16.mxu0 0
        %1320 = vmatpush1.bf16.msra.mxu0 0
        %1321 = vmatprep.subr.bf16.mxu0 0
        %1322 = vmatpush1.bf16.msra.mxu0 0
        %1323 = vmatprep.subr.bf16.mxu0 0
        %1324 = vmatpush1.bf16.msra.mxu0 0
        %1325 = vmatprep.subr.bf16.mxu0 0
        %1326 = vmatpush1.bf16.msra.mxu0 0
        %1327 = vmatprep.subr.bf16.mxu0 0
        %1328 = vmatpush1.bf16.msra.mxu0 0
        %1329 = vmatprep.subr.bf16.mxu0 0
        %1330 = vmatpush1.bf16.msra.mxu0 0
        %1331 = vmatprep.subr.bf16.mxu0 %v1178
        %1332 = vmatpush1.bf16.msra.mxu0 %v1176
        %1333 = vmatprep.subr.bf16.mxu0 0
        %1334 = vmatpush2.bf16.msra.mxu0 0
        %1335 = vmatprep.subr.bf16.mxu0 0
        %1336 = vmatpush2.bf16.msra.mxu0 0
        %1337 = vmatprep.subr.bf16.mxu0 0
        %1338 = vmatpush2.bf16.msra.mxu0 0
        %1339 = vmatprep.subr.bf16.mxu0 0
        %1340 = vmatpush2.bf16.msra.mxu0 0
        %1341 = vmatprep.subr.bf16.mxu0 0
        %1342 = vmatpush2.bf16.msra.mxu0 0
        %1343 = vmatprep.subr.bf16.mxu0 0
        %1344 = vmatpush2.bf16.msra.mxu0 0
        %1345 = vmatprep.subr.bf16.mxu0 0
        %1346 = vmatpush2.bf16.msra.mxu0 0
        %1347 = vmatprep.subr.bf16.mxu0 0
        %1348 = vmatpush2.bf16.msra.mxu0 0
        %1349 = vmatprep.mubr.bf16.mxu0 0
        %1350 = vmatmul.mubr.bf16.gmra.mxu0 %v1161
        %v1351 = vpop.f32.mrf.mxu0
        %v1352 = vadd.f32 0.0, %v1351
        %v1353 = vpop.f32.mrf.mxu0
        %v1354 = vadd.f32 0.0, %v1353
        %v1355 = vpop.f32.mrf.mxu0
        %v1356 = vadd.f32 0.0, %v1355
        %v1357 = vpop.f32.mrf.mxu0
        %v1358 = vadd.f32 0.0, %v1357
        %1359 = vdwg.mxu0
        %1360 = vmatprep.subr.bf16.mxu0 0
        %1361 = vmatpush1.bf16.msra.mxu0 0
        %1362 = vmatprep.subr.bf16.mxu0 0
        %1363 = vmatpush1.bf16.msra.mxu0 0
        %1364 = vmatprep.subr.bf16.mxu0 0
        %1365 = vmatpush1.bf16.msra.mxu0 0
        %1366 = vmatprep.subr.bf16.mxu0 0
        %1367 = vmatpush1.bf16.msra.mxu0 0
        %1368 = vmatprep.subr.bf16.mxu0 0
        %1369 = vmatpush1.bf16.msra.mxu0 0
        %1370 = vmatprep.subr.bf16.mxu0 0
        %1371 = vmatpush1.bf16.msra.mxu0 0
        %1372 = vmatprep.subr.bf16.mxu0 0
        %1373 = vmatpush1.bf16.msra.mxu0 0
        %1374 = vmatprep.subr.bf16.mxu0 %v1182
        %1375 = vmatpush1.bf16.msra.mxu0 %v1180
        %1376 = vmatprep.subr.bf16.mxu0 0
        %1377 = vmatpush2.bf16.msra.mxu0 0
        %1378 = vmatprep.subr.bf16.mxu0 0
        %1379 = vmatpush2.bf16.msra.mxu0 0
        %1380 = vmatprep.subr.bf16.mxu0 0
        %1381 = vmatpush2.bf16.msra.mxu0 0
        %1382 = vmatprep.subr.bf16.mxu0 0
        %1383 = vmatpush2.bf16.msra.mxu0 0
        %1384 = vmatprep.subr.bf16.mxu0 0
        %1385 = vmatpush2.bf16.msra.mxu0 0
        %1386 = vmatprep.subr.bf16.mxu0 0
        %1387 = vmatpush2.bf16.msra.mxu0 0
        %1388 = vmatprep.subr.bf16.mxu0 0
        %1389 = vmatpush2.bf16.msra.mxu0 0
        %1390 = vmatprep.subr.bf16.mxu0 0
        %1391 = vmatpush2.bf16.msra.mxu0 0
        %1392 = vmatprep.mubr.bf16.mxu0 0
        %1393 = vmatmul.mubr.bf16.gmra.mxu0 %v1161
        %v1394 = vpop.f32.mrf.mxu0
        %v1395 = vadd.f32 0.0, %v1394
        %v1396 = vpop.f32.mrf.mxu0
        %v1397 = vadd.f32 0.0, %v1396
        %v1398 = vpop.f32.mrf.mxu0
        %v1399 = vadd.f32 0.0, %v1398
        %v1400 = vpop.f32.mrf.mxu0
        %v1401 = vadd.f32 0.0, %v1400
        %1402 = vdwg.mxu0
        %1403 = vmatprep.subr.bf16.mxu0 0
        %1404 = vmatpush1.bf16.msra.mxu0 0
        %1405 = vmatprep.subr.bf16.mxu0 0
        %1406 = vmatpush1.bf16.msra.mxu0 0
        %1407 = vmatprep.subr.bf16.mxu0 0
        %1408 = vmatpush1.bf16.msra.mxu0 0
        %1409 = vmatprep.subr.bf16.mxu0 0
        %1410 = vmatpush1.bf16.msra.mxu0 0
        %1411 = vmatprep.subr.bf16.mxu0 0
        %1412 = vmatpush1.bf16.msra.mxu0 0
        %1413 = vmatprep.subr.bf16.mxu0 0
        %1414 = vmatpush1.bf16.msra.mxu0 0
        %1415 = vmatprep.subr.bf16.mxu0 0
        %1416 = vmatpush1.bf16.msra.mxu0 0
        %1417 = vmatprep.subr.bf16.mxu0 %v1186
        %1418 = vmatpush1.bf16.msra.mxu0 %v1184
        %1419 = vmatprep.subr.bf16.mxu0 0
        %1420 = vmatpush2.bf16.msra.mxu0 0
        %1421 = vmatprep.subr.bf16.mxu0 0
        %1422 = vmatpush2.bf16.msra.mxu0 0
        %1423 = vmatprep.subr.bf16.mxu0 0
        %1424 = vmatpush2.bf16.msra.mxu0 0
        %1425 = vmatprep.subr.bf16.mxu0 0
        %1426 = vmatpush2.bf16.msra.mxu0 0
        %1427 = vmatprep.subr.bf16.mxu0 0
        %1428 = vmatpush2.bf16.msra.mxu0 0
        %1429 = vmatprep.subr.bf16.mxu0 0
        %1430 = vmatpush2.bf16.msra.mxu0 0
        %1431 = vmatprep.subr.bf16.mxu0 0
        %1432 = vmatpush2.bf16.msra.mxu0 0
        %1433 = vmatprep.subr.bf16.mxu0 0
        %1434 = vmatpush2.bf16.msra.mxu0 0
        %1435 = vmatprep.mubr.bf16.mxu0 0
        %1436 = vmatmul.mubr.bf16.gmra.mxu0 %v1161
        %v1437 = vpop.f32.mrf.mxu0
        %v1438 = vadd.f32 0.0, %v1437
        %v1439 = vpop.f32.mrf.mxu0
        %v1440 = vadd.f32 0.0, %v1439
        %v1441 = vpop.f32.mrf.mxu0
        %v1442 = vadd.f32 0.0, %v1441
        %v1443 = vpop.f32.mrf.mxu0
        %v1444 = vadd.f32 0.0, %v1443
        %1445 = vdwg.mxu0
        %1447 = vset.pattern.permute.xlu0 0
        %1448 = vperm.xlu0 %1447, %v410
        %v1449 = vpop.permute.xlu0 %1448
        %v1451 = vadd.f32 %v1223, %v1449
        %v1452 = vadd.f32 %v1225, %v1449
        %v1453 = vadd.f32 %v1266, %v1449
        %v1454 = vadd.f32 %v1268, %v1449
        %v1455 = vadd.f32 %v1309, %v1449
        %v1456 = vadd.f32 %v1311, %v1449
        %v1457 = vadd.f32 %v1352, %v1449
        %v1458 = vadd.f32 %v1354, %v1449
        %v1459 = vadd.f32 %v1395, %v1449
        %v1460 = vadd.f32 %v1397, %v1449
        %v1461 = vadd.f32 %v1438, %v1449
        %v1462 = vadd.f32 %v1440, %v1449
        %v1463 = vxor.u32 %v1451, 2147483648
        %v1464 = vxor.u32 %v1452, 2147483648
        %v1465 = vxor.u32 %v1453, 2147483648
        %v1466 = vxor.u32 %v1454, 2147483648
        %v1467 = vxor.u32 %v1455, 2147483648
        %v1468 = vxor.u32 %v1456, 2147483648
        %v1469 = vxor.u32 %v1457, 2147483648
        %v1470 = vxor.u32 %v1458, 2147483648
        %v1471 = vxor.u32 %v1459, 2147483648
        %v1472 = vxor.u32 %v1460, 2147483648
        %v1473 = vxor.u32 %v1461, 2147483648
        %v1474 = vxor.u32 %v1462, 2147483648
        %v1475 = vmul.f32 %v1463, 1.442695
        %v1476 = vpow.pop %v1475
        %v1477 = vmul.f32 %v1464, 1.442695
        %v1478 = vpow.pop %v1477
        %v1479 = vmul.f32 %v1465, 1.442695
        %v1480 = vpow.pop %v1479
        %v1481 = vmul.f32 %v1466, 1.442695
        %v1482 = vpow.pop %v1481
        %v1483 = vmul.f32 %v1467, 1.442695
        %v1484 = vpow.pop %v1483
        %v1485 = vmul.f32 %v1468, 1.442695
        %v1486 = vpow.pop %v1485
        %v1487 = vmul.f32 %v1469, 1.442695
        %v1488 = vpow.pop %v1487
        %v1489 = vmul.f32 %v1470, 1.442695
        %v1490 = vpow.pop %v1489
        %v1491 = vmul.f32 %v1471, 1.442695
        %v1492 = vpow.pop %v1491
        %v1493 = vmul.f32 %v1472, 1.442695
        %v1494 = vpow.pop %v1493
        %v1495 = vmul.f32 %v1473, 1.442695
        %v1496 = vpow.pop %v1495
        %v1497 = vmul.f32 %v1474, 1.442695
        %v1498 = vpow.pop %v1497
        %v1499 = vadd.f32 %v1476, 1.0
        %v1500 = vadd.f32 %v1478, 1.0
        %v1501 = vadd.f32 %v1480, 1.0
        %v1502 = vadd.f32 %v1482, 1.0
        %v1503 = vadd.f32 %v1484, 1.0
        %v1504 = vadd.f32 %v1486, 1.0
        %v1505 = vadd.f32 %v1488, 1.0
        %v1506 = vadd.f32 %v1490, 1.0
        %v1507 = vadd.f32 %v1492, 1.0
        %v1508 = vadd.f32 %v1494, 1.0
        %v1509 = vadd.f32 %v1496, 1.0
        %v1510 = vadd.f32 %v1498, 1.0
        %v1511 = vrcp.pop %v1499
        %v1512 = vmul.f32 1.0, %v1511
        %v1513 = vrcp.pop %v1500
        %v1514 = vmul.f32 1.0, %v1513
        %v1515 = vrcp.pop %v1501
        %v1516 = vmul.f32 1.0, %v1515
        %v1517 = vrcp.pop %v1502
        %v1518 = vmul.f32 1.0, %v1517
        %v1519 = vrcp.pop %v1503
        %v1520 = vmul.f32 1.0, %v1519
        %v1521 = vrcp.pop %v1504
        %v1522 = vmul.f32 1.0, %v1521
        %v1523 = vrcp.pop %v1505
        %v1524 = vmul.f32 1.0, %v1523
        %v1525 = vrcp.pop %v1506
        %v1526 = vmul.f32 1.0, %v1525
        %v1527 = vrcp.pop %v1507
        %v1528 = vmul.f32 1.0, %v1527
        %v1529 = vrcp.pop %v1508
        %v1530 = vmul.f32 1.0, %v1529
        %v1531 = vrcp.pop %v1509
        %v1532 = vmul.f32 1.0, %v1531
        %v1533 = vrcp.pop %v1510
        %v1534 = vmul.f32 1.0, %v1533
        %v1535 = vcombine.low %v413, %v413
        %v1536 = vcombine.low %v414, %v414
        %v1537 = vcombine.low %v415, %v415
        %v1538 = vcombine.low %v416, %v416
        %v1539 = vcombine.low %v417, %v417
        %v1540 = vcombine.low %v418, %v418
        %v1547 = vmul.f32 %v1512, %v1535
        %v1548 = vmul.f32 %v1514, %v413
        %v1549 = vmul.f32 %v1516, %v1536
        %v1550 = vmul.f32 %v1518, %v414
        %v1551 = vmul.f32 %v1520, %v1537
        %v1552 = vmul.f32 %v1522, %v415
        %v1553 = vmul.f32 %v1524, %v1538
        %v1554 = vmul.f32 %v1526, %v416
        %v1555 = vmul.f32 %v1528, %v1539
        %v1556 = vmul.f32 %v1530, %v417
        %v1557 = vmul.f32 %v1532, %v1540
        %v1558 = vmul.f32 %v1534, %v418
        %v1559 = vpack.c.bf16 %v1547, %v1547
        %v1560 = vpack.c.bf16 %v1548, %v1548
        %v1561 = vpack.c.bf16 %v1549, %v1549
        %v1562 = vpack.c.bf16 %v1550, %v1550
        %v1563 = vpack.c.bf16 %v1551, %v1551
        %v1564 = vpack.c.bf16 %v1552, %v1552
        %v1565 = vpack.c.bf16 %v1553, %v1553
        %v1566 = vpack.c.bf16 %v1554, %v1554
        %v1567 = vpack.c.bf16 %v1555, %v1555
        %v1568 = vpack.c.bf16 %v1556, %v1556
        %v1569 = vpack.c.bf16 %v1557, %v1557
        %v1570 = vpack.c.bf16 %v1558, %v1558
        %v1583 = vrot.slane %v1559, 2
        %v1584 = vrot.slane %v1560, 2
        %v1585 = vrot.slane %v1561, 2
        %v1586 = vrot.slane %v1562, 2
        %v1587 = vrot.slane %v1563, 2
        %v1588 = vrot.slane %v1564, 2
        %v1589 = vrot.slane %v1565, 2
        %v1590 = vrot.slane %v1566, 2
        %v1591 = vrot.slane %v1567, 2
        %v1592 = vrot.slane %v1568, 2
        %v1593 = vrot.slane %v1569, 2
        %v1594 = vrot.slane %v1570, 2
        %v1596 = vsel %vm449, %v409, 0
        %v1599 = vsel %vm453, %v1583, 0
        %v1602 = vsel %vm453, %v1584, 0
        %v1605 = vsel %vm453, %v1585, 0
        %v1608 = vsel %vm453, %v1586, 0
        %v1611 = vsel %vm453, %v1587, 0
        %v1614 = vsel %vm453, %v1588, 0
        %v1617 = vsel %vm453, %v1589, 0
        %v1620 = vsel %vm453, %v1590, 0
        %v1623 = vsel %vm453, %v1591, 0
        %v1626 = vsel %vm453, %v1592, 0
        %v1629 = vsel %vm453, %v1593, 0
        %v1632 = vsel %vm453, %v1594, 0
        %1634 = vmatprep.subr.bf16.mxu0 0
        %1635 = vmatpush1.bf16.msra.mxu0 0
        %1636 = vmatprep.subr.bf16.mxu0 0
        %1637 = vmatpush1.bf16.msra.mxu0 0
        %1638 = vmatprep.subr.bf16.mxu0 0
        %1639 = vmatpush1.bf16.msra.mxu0 0
        %1640 = vmatprep.subr.bf16.mxu0 0
        %1641 = vmatpush1.bf16.msra.mxu0 0
        %1642 = vmatprep.subr.bf16.mxu0 0
        %1643 = vmatpush1.bf16.msra.mxu0 0
        %1644 = vmatprep.subr.bf16.mxu0 0
        %1645 = vmatpush1.bf16.msra.mxu0 0
        %1646 = vmatprep.subr.bf16.mxu0 0
        %1647 = vmatpush1.bf16.msra.mxu0 0
        %1648 = vmatprep.subr.bf16.mxu0 %v1602
        %1649 = vmatpush1.bf16.msra.mxu0 %v1599
        %1650 = vmatprep.subr.bf16.mxu0 0
        %1651 = vmatpush2.bf16.msra.mxu0 0
        %1652 = vmatprep.subr.bf16.mxu0 0
        %1653 = vmatpush2.bf16.msra.mxu0 0
        %1654 = vmatprep.subr.bf16.mxu0 0
        %1655 = vmatpush2.bf16.msra.mxu0 0
        %1656 = vmatprep.subr.bf16.mxu0 0
        %1657 = vmatpush2.bf16.msra.mxu0 0
        %1658 = vmatprep.subr.bf16.mxu0 0
        %1659 = vmatpush2.bf16.msra.mxu0 0
        %1660 = vmatprep.subr.bf16.mxu0 0
        %1661 = vmatpush2.bf16.msra.mxu0 0
        %1662 = vmatprep.subr.bf16.mxu0 0
        %1663 = vmatpush2.bf16.msra.mxu0 0
        %1664 = vmatprep.subr.bf16.mxu0 0
        %1665 = vmatpush2.bf16.msra.mxu0 0
        %1666 = vmatprep.mubr.bf16.mxu0 0
        %1667 = vmatmul.mubr.bf16.gmra.mxu0 %v1596
        %v1668 = vpop.f32.mrf.mxu0
        %v1669 = vadd.f32 0.0, %v1668
        %v1670 = vpop.f32.mrf.mxu0
        %v1671 = vadd.f32 0.0, %v1670
        %v1672 = vpop.f32.mrf.mxu0
        %v1673 = vpop.f32.mrf.mxu0
        %1674 = vdwg.mxu0
        %1675 = vmatprep.subr.bf16.mxu0 0
        %1676 = vmatpush1.bf16.msra.mxu0 0
        %1677 = vmatprep.subr.bf16.mxu0 0
        %1678 = vmatpush1.bf16.msra.mxu0 0
        %1679 = vmatprep.subr.bf16.mxu0 0
        %1680 = vmatpush1.bf16.msra.mxu0 0
        %1681 = vmatprep.subr.bf16.mxu0 0
        %1682 = vmatpush1.bf16.msra.mxu0 0
        %1683 = vmatprep.subr.bf16.mxu0 0
        %1684 = vmatpush1.bf16.msra.mxu0 0
        %1685 = vmatprep.subr.bf16.mxu0 0
        %1686 = vmatpush1.bf16.msra.mxu0 0
        %1687 = vmatprep.subr.bf16.mxu0 0
        %1688 = vmatpush1.bf16.msra.mxu0 0
        %1689 = vmatprep.subr.bf16.mxu0 %v1608
        %1690 = vmatpush1.bf16.msra.mxu0 %v1605
        %1691 = vmatprep.subr.bf16.mxu0 0
        %1692 = vmatpush2.bf16.msra.mxu0 0
        %1693 = vmatprep.subr.bf16.mxu0 0
        %1694 = vmatpush2.bf16.msra.mxu0 0
        %1695 = vmatprep.subr.bf16.mxu0 0
        %1696 = vmatpush2.bf16.msra.mxu0 0
        %1697 = vmatprep.subr.bf16.mxu0 0
        %1698 = vmatpush2.bf16.msra.mxu0 0
        %1699 = vmatprep.subr.bf16.mxu0 0
        %1700 = vmatpush2.bf16.msra.mxu0 0
        %1701 = vmatprep.subr.bf16.mxu0 0
        %1702 = vmatpush2.bf16.msra.mxu0 0
        %1703 = vmatprep.subr.bf16.mxu0 0
        %1704 = vmatpush2.bf16.msra.mxu0 0
        %1705 = vmatprep.subr.bf16.mxu0 0
        %1706 = vmatpush2.bf16.msra.mxu0 0
        %1707 = vmatprep.mubr.bf16.mxu0 0
        %1708 = vmatmul.mubr.bf16.gmra.mxu0 %v1596
        %v1709 = vpop.f32.mrf.mxu0
        %v1710 = vadd.f32 0.0, %v1709
        %v1711 = vpop.f32.mrf.mxu0
        %v1712 = vadd.f32 0.0, %v1711
        %v1713 = vpop.f32.mrf.mxu0
        %v1714 = vpop.f32.mrf.mxu0
        %1715 = vdwg.mxu0
        %1716 = vmatprep.subr.bf16.mxu0 0
        %1717 = vmatpush1.bf16.msra.mxu0 0
        %1718 = vmatprep.subr.bf16.mxu0 0
        %1719 = vmatpush1.bf16.msra.mxu0 0
        %1720 = vmatprep.subr.bf16.mxu0 0
        %1721 = vmatpush1.bf16.msra.mxu0 0
        %1722 = vmatprep.subr.bf16.mxu0 0
        %1723 = vmatpush1.bf16.msra.mxu0 0
        %1724 = vmatprep.subr.bf16.mxu0 0
        %1725 = vmatpush1.bf16.msra.mxu0 0
        %1726 = vmatprep.subr.bf16.mxu0 0
        %1727 = vmatpush1.bf16.msra.mxu0 0
        %1728 = vmatprep.subr.bf16.mxu0 0
        %1729 = vmatpush1.bf16.msra.mxu0 0
        %1730 = vmatprep.subr.bf16.mxu0 %v1614
        %1731 = vmatpush1.bf16.msra.mxu0 %v1611
        %1732 = vmatprep.subr.bf16.mxu0 0
        %1733 = vmatpush2.bf16.msra.mxu0 0
        %1734 = vmatprep.subr.bf16.mxu0 0
        %1735 = vmatpush2.bf16.msra.mxu0 0
        %1736 = vmatprep.subr.bf16.mxu0 0
        %1737 = vmatpush2.bf16.msra.mxu0 0
        %1738 = vmatprep.subr.bf16.mxu0 0
        %1739 = vmatpush2.bf16.msra.mxu0 0
        %1740 = vmatprep.subr.bf16.mxu0 0
        %1741 = vmatpush2.bf16.msra.mxu0 0
        %1742 = vmatprep.subr.bf16.mxu0 0
        %1743 = vmatpush2.bf16.msra.mxu0 0
        %1744 = vmatprep.subr.bf16.mxu0 0
        %1745 = vmatpush2.bf16.msra.mxu0 0
        %1746 = vmatprep.subr.bf16.mxu0 0
        %1747 = vmatpush2.bf16.msra.mxu0 0
        %1748 = vmatprep.mubr.bf16.mxu0 0
        %1749 = vmatmul.mubr.bf16.gmra.mxu0 %v1596
        %v1750 = vpop.f32.mrf.mxu0
        %v1751 = vadd.f32 0.0, %v1750
        %v1752 = vpop.f32.mrf.mxu0
        %v1753 = vadd.f32 0.0, %v1752
        %v1754 = vpop.f32.mrf.mxu0
        %v1755 = vpop.f32.mrf.mxu0
        %1756 = vdwg.mxu0
        %1757 = vmatprep.subr.bf16.mxu0 0
        %1758 = vmatpush1.bf16.msra.mxu0 0
        %1759 = vmatprep.subr.bf16.mxu0 0
        %1760 = vmatpush1.bf16.msra.mxu0 0
        %1761 = vmatprep.subr.bf16.mxu0 0
        %1762 = vmatpush1.bf16.msra.mxu0 0
        %1763 = vmatprep.subr.bf16.mxu0 0
        %1764 = vmatpush1.bf16.msra.mxu0 0
        %1765 = vmatprep.subr.bf16.mxu0 0
        %1766 = vmatpush1.bf16.msra.mxu0 0
        %1767 = vmatprep.subr.bf16.mxu0 0
        %1768 = vmatpush1.bf16.msra.mxu0 0
        %1769 = vmatprep.subr.bf16.mxu0 0
        %1770 = vmatpush1.bf16.msra.mxu0 0
        %1771 = vmatprep.subr.bf16.mxu0 %v1620
        %1772 = vmatpush1.bf16.msra.mxu0 %v1617
        %1773 = vmatprep.subr.bf16.mxu0 0
        %1774 = vmatpush2.bf16.msra.mxu0 0
        %1775 = vmatprep.subr.bf16.mxu0 0
        %1776 = vmatpush2.bf16.msra.mxu0 0
        %1777 = vmatprep.subr.bf16.mxu0 0
        %1778 = vmatpush2.bf16.msra.mxu0 0
        %1779 = vmatprep.subr.bf16.mxu0 0
        %1780 = vmatpush2.bf16.msra.mxu0 0
        %1781 = vmatprep.subr.bf16.mxu0 0
        %1782 = vmatpush2.bf16.msra.mxu0 0
        %1783 = vmatprep.subr.bf16.mxu0 0
        %1784 = vmatpush2.bf16.msra.mxu0 0
        %1785 = vmatprep.subr.bf16.mxu0 0
        %1786 = vmatpush2.bf16.msra.mxu0 0
        %1787 = vmatprep.subr.bf16.mxu0 0
        %1788 = vmatpush2.bf16.msra.mxu0 0
        %1789 = vmatprep.mubr.bf16.mxu0 0
        %1790 = vmatmul.mubr.bf16.gmra.mxu0 %v1596
        %v1791 = vpop.f32.mrf.mxu0
        %v1792 = vadd.f32 0.0, %v1791
        %v1793 = vpop.f32.mrf.mxu0
        %v1794 = vadd.f32 0.0, %v1793
        %v1795 = vpop.f32.mrf.mxu0
        %v1796 = vpop.f32.mrf.mxu0
        %1797 = vdwg.mxu0
        %1798 = vmatprep.subr.bf16.mxu0 0
        %1799 = vmatpush1.bf16.msra.mxu0 0
        %1800 = vmatprep.subr.bf16.mxu0 0
        %1801 = vmatpush1.bf16.msra.mxu0 0
        %1802 = vmatprep.subr.bf16.mxu0 0
        %1803 = vmatpush1.bf16.msra.mxu0 0
        %1804 = vmatprep.subr.bf16.mxu0 0
        %1805 = vmatpush1.bf16.msra.mxu0 0
        %1806 = vmatprep.subr.bf16.mxu0 0
        %1807 = vmatpush1.bf16.msra.mxu0 0
        %1808 = vmatprep.subr.bf16.mxu0 0
        %1809 = vmatpush1.bf16.msra.mxu0 0
        %1810 = vmatprep.subr.bf16.mxu0 0
        %1811 = vmatpush1.bf16.msra.mxu0 0
        %1812 = vmatprep.subr.bf16.mxu0 %v1626
        %1813 = vmatpush1.bf16.msra.mxu0 %v1623
        %1814 = vmatprep.subr.bf16.mxu0 0
        %1815 = vmatpush2.bf16.msra.mxu0 0
        %1816 = vmatprep.subr.bf16.mxu0 0
        %1817 = vmatpush2.bf16.msra.mxu0 0
        %1818 = vmatprep.subr.bf16.mxu0 0
        %1819 = vmatpush2.bf16.msra.mxu0 0
        %1820 = vmatprep.subr.bf16.mxu0 0
        %1821 = vmatpush2.bf16.msra.mxu0 0
        %1822 = vmatprep.subr.bf16.mxu0 0
        %1823 = vmatpush2.bf16.msra.mxu0 0
        %1824 = vmatprep.subr.bf16.mxu0 0
        %1825 = vmatpush2.bf16.msra.mxu0 0
        %1826 = vmatprep.subr.bf16.mxu0 0
        %1827 = vmatpush2.bf16.msra.mxu0 0
        %1828 = vmatprep.subr.bf16.mxu0 0
        %1829 = vmatpush2.bf16.msra.mxu0 0
        %1830 = vmatprep.mubr.bf16.mxu0 0
        %1831 = vmatmul.mubr.bf16.gmra.mxu0 %v1596
        %v1832 = vpop.f32.mrf.mxu0
        %v1833 = vadd.f32 0.0, %v1832
        %v1834 = vpop.f32.mrf.mxu0
        %v1835 = vadd.f32 0.0, %v1834
        %v1836 = vpop.f32.mrf.mxu0
        %v1837 = vpop.f32.mrf.mxu0
        %1838 = vdwg.mxu0
        %1839 = vmatprep.subr.bf16.mxu0 0
        %1840 = vmatpush1.bf16.msra.mxu0 0
        %1841 = vmatprep.subr.bf16.mxu0 0
        %1842 = vmatpush1.bf16.msra.mxu0 0
        %1843 = vmatprep.subr.bf16.mxu0 0
        %1844 = vmatpush1.bf16.msra.mxu0 0
        %1845 = vmatprep.subr.bf16.mxu0 0
        %1846 = vmatpush1.bf16.msra.mxu0 0
        %1847 = vmatprep.subr.bf16.mxu0 0
        %1848 = vmatpush1.bf16.msra.mxu0 0
        %1849 = vmatprep.subr.bf16.mxu0 0
        %1850 = vmatpush1.bf16.msra.mxu0 0
        %1851 = vmatprep.subr.bf16.mxu0 0
        %1852 = vmatpush1.bf16.msra.mxu0 0
        %1853 = vmatprep.subr.bf16.mxu0 %v1632
        %1854 = vmatpush1.bf16.msra.mxu0 %v1629
        %1855 = vmatprep.subr.bf16.mxu0 0
        %1856 = vmatpush2.bf16.msra.mxu0 0
        %1857 = vmatprep.subr.bf16.mxu0 0
        %1858 = vmatpush2.bf16.msra.mxu0 0
        %1859 = vmatprep.subr.bf16.mxu0 0
        %1860 = vmatpush2.bf16.msra.mxu0 0
        %1861 = vmatprep.subr.bf16.mxu0 0
        %1862 = vmatpush2.bf16.msra.mxu0 0
        %1863 = vmatprep.subr.bf16.mxu0 0
        %1864 = vmatpush2.bf16.msra.mxu0 0
        %1865 = vmatprep.subr.bf16.mxu0 0
        %1866 = vmatpush2.bf16.msra.mxu0 0
        %1867 = vmatprep.subr.bf16.mxu0 0
        %1868 = vmatpush2.bf16.msra.mxu0 0
        %1869 = vmatprep.subr.bf16.mxu0 0
        %1870 = vmatpush2.bf16.msra.mxu0 0
        %1871 = vmatprep.mubr.bf16.mxu0 0
        %1872 = vmatmul.mubr.bf16.gmra.mxu0 %v1596
        %v1873 = vpop.f32.mrf.mxu0
        %v1874 = vadd.f32 0.0, %v1873
        %v1875 = vpop.f32.mrf.mxu0
        %v1876 = vadd.f32 0.0, %v1875
        %v1877 = vpop.f32.mrf.mxu0
        %v1878 = vpop.f32.mrf.mxu0
        %1879 = vdwg.mxu0
        %v1880 = vadd.f32 %v1227, %v1669
        %v1881 = vadd.f32 %v1229, %v1671
        %v1882 = vadd.f32 %v1270, %v1710
        %v1883 = vadd.f32 %v1272, %v1712
        %v1884 = vadd.f32 %v1313, %v1751
        %v1885 = vadd.f32 %v1315, %v1753
        %v1886 = vadd.f32 %v1356, %v1792
        %v1887 = vadd.f32 %v1358, %v1794
        %v1888 = vadd.f32 %v1399, %v1833
        %v1889 = vadd.f32 %v1401, %v1835
        %v1890 = vadd.f32 %v1442, %v1874
        %v1891 = vadd.f32 %v1444, %v1876
        %1893 = vset.pattern.permute.xlu0 0
        %1894 = vperm.xlu0 %1893, %v411
        %v1895 = vpop.permute.xlu0 %1894
        %v1897 = vadd.f32 %v1880, %v1895
        %v1898 = vadd.f32 %v1881, %v1895
        %v1899 = vadd.f32 %v1882, %v1895
        %v1900 = vadd.f32 %v1883, %v1895
        %v1901 = vadd.f32 %v1884, %v1895
        %v1902 = vadd.f32 %v1885, %v1895
        %v1903 = vadd.f32 %v1886, %v1895
        %v1904 = vadd.f32 %v1887, %v1895
        %v1905 = vadd.f32 %v1888, %v1895
        %v1906 = vadd.f32 %v1889, %v1895
        %v1907 = vadd.f32 %v1890, %v1895
        %v1908 = vadd.f32 %v1891, %v1895
        %v1909 = vtanh.pop %v1897
        %v1910 = vtanh.pop %v1898
        %v1911 = vtanh.pop %v1899
        %v1912 = vtanh.pop %v1900
        %v1913 = vtanh.pop %v1901
        %v1914 = vtanh.pop %v1902
        %v1915 = vtanh.pop %v1903
        %v1916 = vtanh.pop %v1904
        %v1917 = vtanh.pop %v1905
        %v1918 = vtanh.pop %v1906
        %v1919 = vtanh.pop %v1907
        %v1920 = vtanh.pop %v1908
        %v1921 = vsub.f32 1.0, %v1512
        %v1922 = vsub.f32 1.0, %v1514
        %v1923 = vsub.f32 1.0, %v1516
        %v1924 = vsub.f32 1.0, %v1518
        %v1925 = vsub.f32 1.0, %v1520
        %v1926 = vsub.f32 1.0, %v1522
        %v1927 = vsub.f32 1.0, %v1524
        %v1928 = vsub.f32 1.0, %v1526
        %v1929 = vsub.f32 1.0, %v1528
        %v1930 = vsub.f32 1.0, %v1530
        %v1931 = vsub.f32 1.0, %v1532
        %v1932 = vsub.f32 1.0, %v1534
        %v1933 = vmul.f32 %v1921, %v413
        %v1934 = vmul.f32 %v1922, %v425
        %v1935 = vmul.f32 %v1923, %v414
        %v1936 = vmul.f32 %v1924, %v426
        %v1937 = vmul.f32 %v1925, %v415
        %v1938 = vmul.f32 %v1926, %v427
        %v1939 = vmul.f32 %v1927, %v416
        %v1940 = vmul.f32 %v1928, %v428
        %v1941 = vmul.f32 %v1929, %v417
        %v1942 = vmul.f32 %v1930, %v429
        %v1943 = vmul.f32 %v1931, %v418
        %v1944 = vmul.f32 %v1932, %v430
        %v1945 = vmul.f32 %v1512, %v1909
        %v1946 = vmul.f32 %v1514, %v1910
        %v1947 = vmul.f32 %v1516, %v1911
        %v1948 = vmul.f32 %v1518, %v1912
        %v1949 = vmul.f32 %v1520, %v1913
        %v1950 = vmul.f32 %v1522, %v1914
        %v1951 = vmul.f32 %v1524, %v1915
        %v1952 = vmul.f32 %v1526, %v1916
        %v1953 = vmul.f32 %v1528, %v1917
        %v1954 = vmul.f32 %v1530, %v1918
        %v1955 = vmul.f32 %v1532, %v1919
        %v1956 = vmul.f32 %v1534, %v1920
        %v1957 = vadd.f32 %v1933, %v1945
        %v1958 = vadd.f32 %v1934, %v1946
        %v1959 = vadd.f32 %v1935, %v1947
        %v1960 = vadd.f32 %v1936, %v1948
        %v1961 = vadd.f32 %v1937, %v1949
        %v1962 = vadd.f32 %v1938, %v1950
        %v1963 = vadd.f32 %v1939, %v1951
        %v1964 = vadd.f32 %v1940, %v1952
        %v1965 = vadd.f32 %v1941, %v1953
        %v1966 = vadd.f32 %v1942, %v1954
        %v1967 = vadd.f32 %v1943, %v1955
        %v1968 = vadd.f32 %v1944, %v1956
        %v1969 = vstv %s412
        %v1970 = vmul.f32 %v1957, %v1969
        %v1971 = vmul.f32 %v1958, %v1969
        %v1972 = vmul.f32 %v1959, %v1969
        %v1973 = vmul.f32 %v1960, %v1969
        %v1974 = vmul.f32 %v1961, %v1969
        %v1975 = vmul.f32 %v1962, %v1969
        %v1976 = vmul.f32 %v1963, %v1969
        %v1977 = vmul.f32 %v1964, %v1969
        %v1978 = vmul.f32 %v1965, %v1969
        %v1979 = vmul.f32 %v1966, %v1969
        %v1980 = vmul.f32 %v1967, %v1969
        %v1981 = vmul.f32 %v1968, %v1969
        %v1982 = vadd.f32 %v1970, %v413
        %v1983 = vadd.f32 %v1971, %v425
        %v1984 = vadd.f32 %v1972, %v414
        %v1985 = vadd.f32 %v1973, %v426
        %v1986 = vadd.f32 %v1974, %v415
        %v1987 = vadd.f32 %v1975, %v427
        %v1988 = vadd.f32 %v1976, %v416
        %v1989 = vadd.f32 %v1977, %v428
        %v1990 = vadd.f32 %v1978, %v417
        %v1991 = vadd.f32 %v1979, %v429
        %v1992 = vadd.f32 %v1980, %v418
        %v1993 = vadd.f32 %v1981, %v430
        %v1994 = vpack.c.bf16 %v1982, %v1982
        %v1995 = vpack.c.bf16 %v1983, %v1983
        %v1996 = vpack.c.bf16 %v1984, %v1984
        %v1997 = vpack.c.bf16 %v1985, %v1985
        %v1998 = vpack.c.bf16 %v1986, %v1986
        %v1999 = vpack.c.bf16 %v1987, %v1987
        %v2000 = vpack.c.bf16 %v1988, %v1988
        %v2001 = vpack.c.bf16 %v1989, %v1989
        %v2002 = vpack.c.bf16 %v1990, %v1990
        %v2003 = vpack.c.bf16 %v1991, %v1991
        %v2004 = vpack.c.bf16 %v1992, %v1992
        %v2005 = vpack.c.bf16 %v1993, %v1993
        %v2007 = vsel %vm453, %v1994, 0
        %v2010 = vsel %vm453, %v1995, 0
        %v2013 = vsel %vm453, %v1996, 0
        %v2016 = vsel %vm453, %v1997, 0
        %v2019 = vsel %vm453, %v1998, 0
        %v2022 = vsel %vm453, %v1999, 0
        %v2025 = vsel %vm453, %v2000, 0
        %v2028 = vsel %vm453, %v2001, 0
        %v2031 = vsel %vm453, %v2002, 0
        %v2034 = vsel %vm453, %v2003, 0
        %v2037 = vsel %vm453, %v2004, 0
        %v2040 = vsel %vm453, %v2005, 0
        %2042 = vmatprep.subr.bf16.mxu0 0
        %2043 = vmatpush1.bf16.msra.mxu0 0
        %2044 = vmatprep.subr.bf16.mxu0 0
        %2045 = vmatpush1.bf16.msra.mxu0 0
        %2046 = vmatprep.subr.bf16.mxu0 0
        %2047 = vmatpush1.bf16.msra.mxu0 0
        %2048 = vmatprep.subr.bf16.mxu0 0
        %2049 = vmatpush1.bf16.msra.mxu0 0
        %2050 = vmatprep.subr.bf16.mxu0 0
        %2051 = vmatpush1.bf16.msra.mxu0 0
        %2052 = vmatprep.subr.bf16.mxu0 0
        %2053 = vmatpush1.bf16.msra.mxu0 0
        %2054 = vmatprep.subr.bf16.mxu0 0
        %2055 = vmatpush1.bf16.msra.mxu0 0
        %2056 = vmatprep.subr.bf16.mxu0 %v2010
        %2057 = vmatpush1.bf16.msra.mxu0 %v2007
        %2058 = vmatprep.subr.bf16.mxu0 0
        %2059 = vmatpush2.bf16.msra.mxu0 0
        %2060 = vmatprep.subr.bf16.mxu0 0
        %2061 = vmatpush2.bf16.msra.mxu0 0
        %2062 = vmatprep.subr.bf16.mxu0 0
        %2063 = vmatpush2.bf16.msra.mxu0 0
        %2064 = vmatprep.subr.bf16.mxu0 0
        %2065 = vmatpush2.bf16.msra.mxu0 0
        %2066 = vmatprep.subr.bf16.mxu0 0
        %2067 = vmatpush2.bf16.msra.mxu0 0
        %2068 = vmatprep.subr.bf16.mxu0 0
        %2069 = vmatpush2.bf16.msra.mxu0 0
        %2070 = vmatprep.subr.bf16.mxu0 0
        %2071 = vmatpush2.bf16.msra.mxu0 0
        %2072 = vmatprep.subr.bf16.mxu0 0
        %2073 = vmatpush2.bf16.msra.mxu0 0
        %2074 = vmatprep.mubr.bf16.mxu0 0
        %2075 = vmatmul.mubr.bf16.gmra.mxu0 %v451
        %v2076 = vpop.f32.mrf.mxu0
        %v2077 = vadd.f32 0.0, %v2076
        %v2078 = vpop.f32.mrf.mxu0
        %v2079 = vadd.f32 0.0, %v2078
        %v2080 = vpop.f32.mrf.mxu0
        %v2081 = vpop.f32.mrf.mxu0
        %2082 = vdwg.mxu0
        %2083 = vmatprep.subr.bf16.mxu0 0
        %2084 = vmatpush1.bf16.msra.mxu0 0
        %2085 = vmatprep.subr.bf16.mxu0 0
        %2086 = vmatpush1.bf16.msra.mxu0 0
        %2087 = vmatprep.subr.bf16.mxu0 0
        %2088 = vmatpush1.bf16.msra.mxu0 0
        %2089 = vmatprep.subr.bf16.mxu0 0
        %2090 = vmatpush1.bf16.msra.mxu0 0
        %2091 = vmatprep.subr.bf16.mxu0 0
        %2092 = vmatpush1.bf16.msra.mxu0 0
        %2093 = vmatprep.subr.bf16.mxu0 0
        %2094 = vmatpush1.bf16.msra.mxu0 0
        %2095 = vmatprep.subr.bf16.mxu0 0
        %2096 = vmatpush1.bf16.msra.mxu0 0
        %2097 = vmatprep.subr.bf16.mxu0 %v2016
        %2098 = vmatpush1.bf16.msra.mxu0 %v2013
        %2099 = vmatprep.subr.bf16.mxu0 0
        %2100 = vmatpush2.bf16.msra.mxu0 0
        %2101 = vmatprep.subr.bf16.mxu0 0
        %2102 = vmatpush2.bf16.msra.mxu0 0
        %2103 = vmatprep.subr.bf16.mxu0 0
        %2104 = vmatpush2.bf16.msra.mxu0 0
        %2105 = vmatprep.subr.bf16.mxu0 0
        %2106 = vmatpush2.bf16.msra.mxu0 0
        %2107 = vmatprep.subr.bf16.mxu0 0
        %2108 = vmatpush2.bf16.msra.mxu0 0
        %2109 = vmatprep.subr.bf16.mxu0 0
        %2110 = vmatpush2.bf16.msra.mxu0 0
        %2111 = vmatprep.subr.bf16.mxu0 0
        %2112 = vmatpush2.bf16.msra.mxu0 0
        %2113 = vmatprep.subr.bf16.mxu0 0
        %2114 = vmatpush2.bf16.msra.mxu0 0
        %2115 = vmatprep.mubr.bf16.mxu0 0
        %2116 = vmatmul.mubr.bf16.gmra.mxu0 %v451
        %v2117 = vpop.f32.mrf.mxu0
        %v2118 = vadd.f32 0.0, %v2117
        %v2119 = vpop.f32.mrf.mxu0
        %v2120 = vadd.f32 0.0, %v2119
        %v2121 = vpop.f32.mrf.mxu0
        %v2122 = vpop.f32.mrf.mxu0
        %2123 = vdwg.mxu0
        %2124 = vmatprep.subr.bf16.mxu0 0
        %2125 = vmatpush1.bf16.msra.mxu0 0
        %2126 = vmatprep.subr.bf16.mxu0 0
        %2127 = vmatpush1.bf16.msra.mxu0 0
        %2128 = vmatprep.subr.bf16.mxu0 0
        %2129 = vmatpush1.bf16.msra.mxu0 0
        %2130 = vmatprep.subr.bf16.mxu0 0
        %2131 = vmatpush1.bf16.msra.mxu0 0
        %2132 = vmatprep.subr.bf16.mxu0 0
        %2133 = vmatpush1.bf16.msra.mxu0 0
        %2134 = vmatprep.subr.bf16.mxu0 0
        %2135 = vmatpush1.bf16.msra.mxu0 0
        %2136 = vmatprep.subr.bf16.mxu0 0
        %2137 = vmatpush1.bf16.msra.mxu0 0
        %2138 = vmatprep.subr.bf16.mxu0 %v2022
        %2139 = vmatpush1.bf16.msra.mxu0 %v2019
        %2140 = vmatprep.subr.bf16.mxu0 0
        %2141 = vmatpush2.bf16.msra.mxu0 0
        %2142 = vmatprep.subr.bf16.mxu0 0
        %2143 = vmatpush2.bf16.msra.mxu0 0
        %2144 = vmatprep.subr.bf16.mxu0 0
        %2145 = vmatpush2.bf16.msra.mxu0 0
        %2146 = vmatprep.subr.bf16.mxu0 0
        %2147 = vmatpush2.bf16.msra.mxu0 0
        %2148 = vmatprep.subr.bf16.mxu0 0
        %2149 = vmatpush2.bf16.msra.mxu0 0
        %2150 = vmatprep.subr.bf16.mxu0 0
        %2151 = vmatpush2.bf16.msra.mxu0 0
        %2152 = vmatprep.subr.bf16.mxu0 0
        %2153 = vmatpush2.bf16.msra.mxu0 0
        %2154 = vmatprep.subr.bf16.mxu0 0
        %2155 = vmatpush2.bf16.msra.mxu0 0
        %2156 = vmatprep.mubr.bf16.mxu0 0
        %2157 = vmatmul.mubr.bf16.gmra.mxu0 %v451
        %v2158 = vpop.f32.mrf.mxu0
        %v2159 = vadd.f32 0.0, %v2158
        %v2160 = vpop.f32.mrf.mxu0
        %v2161 = vadd.f32 0.0, %v2160
        %v2162 = vpop.f32.mrf.mxu0
        %v2163 = vpop.f32.mrf.mxu0
        %2164 = vdwg.mxu0
        %2165 = vmatprep.subr.bf16.mxu0 0
        %2166 = vmatpush1.bf16.msra.mxu0 0
        %2167 = vmatprep.subr.bf16.mxu0 0
        %2168 = vmatpush1.bf16.msra.mxu0 0
        %2169 = vmatprep.subr.bf16.mxu0 0
        %2170 = vmatpush1.bf16.msra.mxu0 0
        %2171 = vmatprep.subr.bf16.mxu0 0
        %2172 = vmatpush1.bf16.msra.mxu0 0
        %2173 = vmatprep.subr.bf16.mxu0 0
        %2174 = vmatpush1.bf16.msra.mxu0 0
        %2175 = vmatprep.subr.bf16.mxu0 0
        %2176 = vmatpush1.bf16.msra.mxu0 0
        %2177 = vmatprep.subr.bf16.mxu0 0
        %2178 = vmatpush1.bf16.msra.mxu0 0
        %2179 = vmatprep.subr.bf16.mxu0 %v2028
        %2180 = vmatpush1.bf16.msra.mxu0 %v2025
        %2181 = vmatprep.subr.bf16.mxu0 0
        %2182 = vmatpush2.bf16.msra.mxu0 0
        %2183 = vmatprep.subr.bf16.mxu0 0
        %2184 = vmatpush2.bf16.msra.mxu0 0
        %2185 = vmatprep.subr.bf16.mxu0 0
        %2186 = vmatpush2.bf16.msra.mxu0 0
        %2187 = vmatprep.subr.bf16.mxu0 0
        %2188 = vmatpush2.bf16.msra.mxu0 0
        %2189 = vmatprep.subr.bf16.mxu0 0
        %2190 = vmatpush2.bf16.msra.mxu0 0
        %2191 = vmatprep.subr.bf16.mxu0 0
        %2192 = vmatpush2.bf16.msra.mxu0 0
        %2193 = vmatprep.subr.bf16.mxu0 0
        %2194 = vmatpush2.bf16.msra.mxu0 0
        %2195 = vmatprep.subr.bf16.mxu0 0
        %2196 = vmatpush2.bf16.msra.mxu0 0
        %2197 = vmatprep.mubr.bf16.mxu0 0
        %2198 = vmatmul.mubr.bf16.gmra.mxu0 %v451
        %v2199 = vpop.f32.mrf.mxu0
        %v2200 = vadd.f32 0.0, %v2199
        %v2201 = vpop.f32.mrf.mxu0
        %v2202 = vadd.f32 0.0, %v2201
        %v2203 = vpop.f32.mrf.mxu0
        %v2204 = vpop.f32.mrf.mxu0
        %2205 = vdwg.mxu0
        %2206 = vmatprep.subr.bf16.mxu0 0
        %2207 = vmatpush1.bf16.msra.mxu0 0
        %2208 = vmatprep.subr.bf16.mxu0 0
        %2209 = vmatpush1.bf16.msra.mxu0 0
        %2210 = vmatprep.subr.bf16.mxu0 0
        %2211 = vmatpush1.bf16.msra.mxu0 0
        %2212 = vmatprep.subr.bf16.mxu0 0
        %2213 = vmatpush1.bf16.msra.mxu0 0
        %2214 = vmatprep.subr.bf16.mxu0 0
        %2215 = vmatpush1.bf16.msra.mxu0 0
        %2216 = vmatprep.subr.bf16.mxu0 0
        %2217 = vmatpush1.bf16.msra.mxu0 0
        %2218 = vmatprep.subr.bf16.mxu0 0
        %2219 = vmatpush1.bf16.msra.mxu0 0
        %2220 = vmatprep.subr.bf16.mxu0 %v2034
        %2221 = vmatpush1.bf16.msra.mxu0 %v2031
        %2222 = vmatprep.subr.bf16.mxu0 0
        %2223 = vmatpush2.bf16.msra.mxu0 0
        %2224 = vmatprep.subr.bf16.mxu0 0
        %2225 = vmatpush2.bf16.msra.mxu0 0
        %2226 = vmatprep.subr.bf16.mxu0 0
        %2227 = vmatpush2.bf16.msra.mxu0 0
        %2228 = vmatprep.subr.bf16.mxu0 0
        %2229 = vmatpush2.bf16.msra.mxu0 0
        %2230 = vmatprep.subr.bf16.mxu0 0
        %2231 = vmatpush2.bf16.msra.mxu0 0
        %2232 = vmatprep.subr.bf16.mxu0 0
        %2233 = vmatpush2.bf16.msra.mxu0 0
        %2234 = vmatprep.subr.bf16.mxu0 0
        %2235 = vmatpush2.bf16.msra.mxu0 0
        %2236 = vmatprep.subr.bf16.mxu0 0
        %2237 = vmatpush2.bf16.msra.mxu0 0
        %2238 = vmatprep.mubr.bf16.mxu0 0
        %2239 = vmatmul.mubr.bf16.gmra.mxu0 %v451
        %v2240 = vpop.f32.mrf.mxu0
        %v2241 = vadd.f32 0.0, %v2240
        %v2242 = vpop.f32.mrf.mxu0
        %v2243 = vadd.f32 0.0, %v2242
        %v2244 = vpop.f32.mrf.mxu0
        %v2245 = vpop.f32.mrf.mxu0
        %2246 = vdwg.mxu0
        %2247 = vmatprep.subr.bf16.mxu0 0
        %2248 = vmatpush1.bf16.msra.mxu0 0
        %2249 = vmatprep.subr.bf16.mxu0 0
        %2250 = vmatpush1.bf16.msra.mxu0 0
        %2251 = vmatprep.subr.bf16.mxu0 0
        %2252 = vmatpush1.bf16.msra.mxu0 0
        %2253 = vmatprep.subr.bf16.mxu0 0
        %2254 = vmatpush1.bf16.msra.mxu0 0
        %2255 = vmatprep.subr.bf16.mxu0 0
        %2256 = vmatpush1.bf16.msra.mxu0 0
        %2257 = vmatprep.subr.bf16.mxu0 0
        %2258 = vmatpush1.bf16.msra.mxu0 0
        %2259 = vmatprep.subr.bf16.mxu0 0
        %2260 = vmatpush1.bf16.msra.mxu0 0
        %2261 = vmatprep.subr.bf16.mxu0 %v2040
        %2262 = vmatpush1.bf16.msra.mxu0 %v2037
        %2263 = vmatprep.subr.bf16.mxu0 0
        %2264 = vmatpush2.bf16.msra.mxu0 0
        %2265 = vmatprep.subr.bf16.mxu0 0
        %2266 = vmatpush2.bf16.msra.mxu0 0
        %2267 = vmatprep.subr.bf16.mxu0 0
        %2268 = vmatpush2.bf16.msra.mxu0 0
        %2269 = vmatprep.subr.bf16.mxu0 0
        %2270 = vmatpush2.bf16.msra.mxu0 0
        %2271 = vmatprep.subr.bf16.mxu0 0
        %2272 = vmatpush2.bf16.msra.mxu0 0
        %2273 = vmatprep.subr.bf16.mxu0 0
        %2274 = vmatpush2.bf16.msra.mxu0 0
        %2275 = vmatprep.subr.bf16.mxu0 0
        %2276 = vmatpush2.bf16.msra.mxu0 0
        %2277 = vmatprep.subr.bf16.mxu0 0
        %2278 = vmatpush2.bf16.msra.mxu0 0
        %2279 = vmatprep.mubr.bf16.mxu0 0
        %2280 = vmatmul.mubr.bf16.gmra.mxu0 %v451
        %v2281 = vpop.f32.mrf.mxu0
        %v2282 = vadd.f32 0.0, %v2281
        %v2283 = vpop.f32.mrf.mxu0
        %v2284 = vadd.f32 0.0, %v2283
        %v2285 = vpop.f32.mrf.mxu0
        %v2286 = vpop.f32.mrf.mxu0
        %2287 = vdwg.mxu0
        %v2292 = vcombine.low %v2159, %v2161
        %v2293 = vcombine.low %v2200, %v2202
        %v2295 = vunpack.c.l.s4 1966171168
        %v2296 = vunpack.c.0.s8 %v2295
        %v2297 = vlaneseq
        %v2298 = vshrl.u32 %v2297, 7
        %v2299 = vsub.s32 %v2296, %v2298
        %v2300 = vrot.slane %v2292, %v2299
        %v2302 = vunpack.c.l.s4 1966171168
        %v2303 = vunpack.c.0.s8 %v2302
        %v2304 = vlaneseq
        %v2305 = vshrl.u32 %v2304, 7
        %v2306 = vsub.s32 %v2303, %v2305
        %v2307 = vrot.slane %v2293, %v2306
        %v2308 = vcombine.low %v2300, %v2307
        %v2310 = vunpack.c.l.s4 1966171168
        %v2311 = vunpack.c.0.s8 %v2310
        %v2312 = vlaneseq
        %v2313 = vshrl.u32 %v2312, 7
        %v2314 = vsub.s32 %v2311, %v2313
        %v2315 = vrot.slane %v2308, %v2314
        %2317 = vst.msk [vmem:[#allocation2] ss:$2 sm:$0xf] %vm768, %v2315
        %v2322 = vcombine.low %v2241, %v2243
        %v2323 = vcombine.low %v2282, %v2284
        %v2325 = vunpack.c.l.s4 1966171168
        %v2326 = vunpack.c.0.s8 %v2325
        %v2327 = vlaneseq
        %v2328 = vshrl.u32 %v2327, 7
        %v2329 = vsub.s32 %v2326, %v2328
        %v2330 = vrot.slane %v2322, %v2329
        %v2332 = vunpack.c.l.s4 1966171168
        %v2333 = vunpack.c.0.s8 %v2332
        %v2334 = vlaneseq
        %v2335 = vshrl.u32 %v2334, 7
        %v2336 = vsub.s32 %v2333, %v2335
        %v2337 = vrot.slane %v2323, %v2336
        %v2338 = vcombine.high %v2330, %v2337
        %v2340 = vunpack.c.l.s4 1966171168
        %v2341 = vunpack.c.0.s8 %v2340
        %v2342 = vlaneseq
        %v2343 = vshrl.u32 %v2342, 7
        %v2344 = vsub.s32 %v2341, %v2343
        %v2345 = vrot.slane %v2338, %v2344
        %2347 = vst.msk [vmem:[%s799] ss:$2 sm:$0xf] %vm768, %v2345
        %v2352 = vcombine.low %v2077, %v2079
        %v2353 = vcombine.low %v2118, %v2120
        %v2355 = vunpack.c.l.s4 1966171168
        %v2356 = vunpack.c.0.s8 %v2355
        %v2357 = vlaneseq
        %v2358 = vshrl.u32 %v2357, 7
        %v2359 = vsub.s32 %v2356, %v2358
        %v2360 = vrot.slane %v2352, %v2359
        %v2362 = vunpack.c.l.s4 1966171168
        %v2363 = vunpack.c.0.s8 %v2362
        %v2364 = vlaneseq
        %v2365 = vshrl.u32 %v2364, 7
        %v2366 = vsub.s32 %v2363, %v2365
        %v2367 = vrot.slane %v2353, %v2366
        %v2368 = vcombine.low %v2360, %v2367
        %v2370 = vunpack.c.l.s4 1966171168
        %v2371 = vunpack.c.0.s8 %v2370
        %v2372 = vlaneseq
        %v2373 = vshrl.u32 %v2372, 7
        %v2374 = vsub.s32 %v2371, %v2373
        %v2375 = vrot.slane %v2368, %v2374
        %2377 = vst.msk [vmem:[%s830] ss:$2 sm:$0xf] %vm768, %v2375
        %2378 = vst.msk [vmem:[%s832] ss:$2 sm:$0xf] %vm768, %v2345
        %2379 = vst.msk [vmem:[%s834] ss:$2 sm:$0xf] %vm768, %v2375
        %v2380 = vcombine.high %v2300, %v2307
        %v2382 = vunpack.c.l.s4 1966171168
        %v2383 = vunpack.c.0.s8 %v2382
        %v2384 = vlaneseq
        %v2385 = vshrl.u32 %v2384, 7
        %v2386 = vsub.s32 %v2383, %v2385
        %v2387 = vrot.slane %v2380, %v2386
        %2389 = vst.msk [vmem:[%s845] ss:$2 sm:$0xf] %vm768, %v2387
        %v2390 = vld [vmem:[#allocation2] sm:$0xff]
        %v2391 = vld [vmem:[#allocation2 + $0x8] sm:$0xff]
        %v2392 = vld [vmem:[#allocation2 + $0x10] sm:$0xff]
        %v2396 = vcombine.high %v2390, %v2390
        %v2398 = vunpack.c.l.s4 1983009808
        %v2399 = vunpack.c.0.s8 %v2398
        %v2400 = vlaneseq
        %v2401 = vshrl.u32 %v2400, 7
        %v2402 = vsub.s32 %v2399, %v2401
        %v2403 = vrot.slane %v2390, %v2402
        %v2405 = vunpack.c.l.s4 1983009808
        %v2406 = vunpack.c.0.s8 %v2405
        %v2407 = vlaneseq
        %v2408 = vshrl.u32 %v2407, 7
        %v2409 = vsub.s32 %v2406, %v2408
        %v2410 = vrot.slane %v2396, %v2409
        %v2411 = vcombine.high %v2403, %v2403
        %v2412 = vcombine.high %v2410, %v2410
        %v2413 = vcombine.high %v2391, %v2391
        %v2415 = vunpack.c.l.s4 1983009808
        %v2416 = vunpack.c.0.s8 %v2415
        %v2417 = vlaneseq
        %v2418 = vshrl.u32 %v2417, 7
        %v2419 = vsub.s32 %v2416, %v2418
        %v2420 = vrot.slane %v2391, %v2419
        %v2422 = vunpack.c.l.s4 1983009808
        %v2423 = vunpack.c.0.s8 %v2422
        %v2424 = vlaneseq
        %v2425 = vshrl.u32 %v2424, 7
        %v2426 = vsub.s32 %v2423, %v2425
        %v2427 = vrot.slane %v2413, %v2426
        %v2428 = vcombine.high %v2420, %v2420
        %v2429 = vcombine.high %v2427, %v2427
        %v2430 = vcombine.high %v2392, %v2392
        %v2432 = vunpack.c.l.s4 1983009808
        %v2433 = vunpack.c.0.s8 %v2432
        %v2434 = vlaneseq
        %v2435 = vshrl.u32 %v2434, 7
        %v2436 = vsub.s32 %v2433, %v2435
        %v2437 = vrot.slane %v2392, %v2436
        %v2439 = vunpack.c.l.s4 1983009808
        %v2440 = vunpack.c.0.s8 %v2439
        %v2441 = vlaneseq
        %v2442 = vshrl.u32 %v2441, 7
        %v2443 = vsub.s32 %v2440, %v2442
        %v2444 = vrot.slane %v2430, %v2443
        %v2445 = vcombine.high %v2437, %v2437
        %v2446 = vcombine.high %v2444, %v2444
        %v2459 = vsub.f32 %v2077, %v2403
        %v2460 = vsub.f32 %v2079, %v2411
        %v2461 = vsub.f32 %v2118, %v2410
        %v2462 = vsub.f32 %v2120, %v2412
        %v2463 = vsub.f32 %v2159, %v2420
        %v2464 = vsub.f32 %v2161, %v2428
        %v2465 = vsub.f32 %v2200, %v2427
        %v2466 = vsub.f32 %v2202, %v2429
        %v2467 = vsub.f32 %v2241, %v2437
        %v2468 = vsub.f32 %v2243, %v2445
        %v2469 = vsub.f32 %v2282, %v2444
        %v2470 = vsub.f32 %v2284, %v2446
        %v2471 = vxor.u32 %v2459, 2147483648
        %v2472 = vxor.u32 %v2460, 2147483648
        %v2473 = vxor.u32 %v2461, 2147483648
        %v2474 = vxor.u32 %v2462, 2147483648
        %v2475 = vxor.u32 %v2463, 2147483648
        %v2476 = vxor.u32 %v2464, 2147483648
        %v2477 = vxor.u32 %v2465, 2147483648
        %v2478 = vxor.u32 %v2466, 2147483648
        %v2479 = vxor.u32 %v2467, 2147483648
        %v2480 = vxor.u32 %v2468, 2147483648
        %v2481 = vxor.u32 %v2469, 2147483648
        %v2482 = vxor.u32 %v2470, 2147483648
        %v2483 = vmul.f32 %v2471, 1.442695
        %v2484 = vpow.pop %v2483
        %v2485 = vmul.f32 %v2472, 1.442695
        %v2486 = vpow.pop %v2485
        %v2487 = vmul.f32 %v2473, 1.442695
        %v2488 = vpow.pop %v2487
        %v2489 = vmul.f32 %v2474, 1.442695
        %v2490 = vpow.pop %v2489
        %v2491 = vmul.f32 %v2475, 1.442695
        %v2492 = vpow.pop %v2491
        %v2493 = vmul.f32 %v2476, 1.442695
        %v2494 = vpow.pop %v2493
        %v2495 = vmul.f32 %v2477, 1.442695
        %v2496 = vpow.pop %v2495
        %v2497 = vmul.f32 %v2478, 1.442695
        %v2498 = vpow.pop %v2497
        %v2499 = vmul.f32 %v2479, 1.442695
        %v2500 = vpow.pop %v2499
        %v2501 = vmul.f32 %v2480, 1.442695
        %v2502 = vpow.pop %v2501
        %v2503 = vmul.f32 %v2481, 1.442695
        %v2504 = vpow.pop %v2503
        %v2505 = vmul.f32 %v2482, 1.442695
        %v2506 = vpow.pop %v2505
        %v2507 = vadd.f32 %v2484, 1.0
        %v2508 = vadd.f32 %v2486, 1.0
        %v2509 = vadd.f32 %v2488, 1.0
        %v2510 = vadd.f32 %v2490, 1.0
        %v2511 = vadd.f32 %v2492, 1.0
        %v2512 = vadd.f32 %v2494, 1.0
        %v2513 = vadd.f32 %v2496, 1.0
        %v2514 = vadd.f32 %v2498, 1.0
        %v2515 = vadd.f32 %v2500, 1.0
        %v2516 = vadd.f32 %v2502, 1.0
        %v2517 = vadd.f32 %v2504, 1.0
        %v2518 = vadd.f32 %v2506, 1.0
        %v2519 = vrcp.pop %v2507
        %v2520 = vmul.f32 1.0, %v2519
        %v2521 = vrcp.pop %v2508
        %v2522 = vmul.f32 1.0, %v2521
        %v2523 = vrcp.pop %v2509
        %v2524 = vmul.f32 1.0, %v2523
        %v2525 = vrcp.pop %v2510
        %v2526 = vmul.f32 1.0, %v2525
        %v2527 = vrcp.pop %v2511
        %v2528 = vmul.f32 1.0, %v2527
        %v2529 = vrcp.pop %v2512
        %v2530 = vmul.f32 1.0, %v2529
        %v2531 = vrcp.pop %v2513
        %v2532 = vmul.f32 1.0, %v2531
        %v2533 = vrcp.pop %v2514
        %v2534 = vmul.f32 1.0, %v2533
        %v2535 = vrcp.pop %v2515
        %v2536 = vmul.f32 1.0, %v2535
        %v2537 = vrcp.pop %v2516
        %v2538 = vmul.f32 1.0, %v2537
        %v2539 = vrcp.pop %v2517
        %v2540 = vmul.f32 1.0, %v2539
        %v2541 = vrcp.pop %v2518
        %v2542 = vmul.f32 1.0, %v2541
        %v2555 = vrot.slane %v2520, 6
        %v2556 = vrot.slane %v2522, 6
        %v2557 = vrot.slane %v2524, 6
        %v2558 = vrot.slane %v2526, 6
        %v2559 = vrot.slane %v2528, 6
        %v2560 = vrot.slane %v2530, 6
        %v2561 = vrot.slane %v2532, 6
        %v2562 = vrot.slane %v2534, 6
        %v2563 = vrot.slane %v2536, 6
        %v2564 = vrot.slane %v2538, 6
        %v2565 = vrot.slane %v2540, 6
        %v2566 = vrot.slane %v2542, 6
        %v2579 = vsel %vm453, %v2520, %v2555
        %v2580 = vsel %vm453, %v2522, %v2556
        %v2581 = vsel %vm453, %v2524, %v2557
        %v2582 = vsel %vm453, %v2526, %v2558
        %v2583 = vsel %vm453, %v2528, %v2559
        %v2584 = vsel %vm453, %v2530, %v2560
        %v2585 = vsel %vm453, %v2532, %v2561
        %v2586 = vsel %vm453, %v2534, %v2562
        %v2587 = vsel %vm453, %v2536, %v2563
        %v2588 = vsel %vm453, %v2538, %v2564
        %v2589 = vsel %vm453, %v2540, %v2565
        %v2590 = vsel %vm453, %v2542, %v2566
        %v2591 = vadd.f32 %v1982, %v1986
        %v2592 = vadd.f32 %v1983, %v1987
        %v2593 = vadd.f32 %v1984, %v1988
        %v2594 = vadd.f32 %v1985, %v1989
        %v2595 = vadd.f32 %v2591, %v1990
        %v2596 = vadd.f32 %v2592, %v1991
        %v2597 = vadd.f32 %v2593, %v1992
        %v2598 = vadd.f32 %v2594, %v1993
        %v2599 = vsub.f32 %v2595, %v1982
        %v2600 = vsub.f32 %v2596, %v1983
        %v2601 = vsub.f32 %v2597, %v1984
        %v2602 = vsub.f32 %v2598, %v1985
        %v2603 = vsub.f32 %v2595, %v1986
        %v2604 = vsub.f32 %v2596, %v1987
        %v2605 = vsub.f32 %v2597, %v1988
        %v2606 = vsub.f32 %v2598, %v1989
        %v2607 = vsub.f32 %v2595, %v1990
        %v2608 = vsub.f32 %v2596, %v1991
        %v2609 = vsub.f32 %v2597, %v1992
        %v2610 = vsub.f32 %v2598, %v1993
        %v2611 = vmul.f32 %v2599, %v2579
        %v2612 = vmul.f32 %v2600, %v2580
        %v2613 = vmul.f32 %v2601, %v2581
        %v2614 = vmul.f32 %v2602, %v2582
        %v2615 = vmul.f32 %v2603, %v2583
        %v2616 = vmul.f32 %v2604, %v2584
        %v2617 = vmul.f32 %v2605, %v2585
        %v2618 = vmul.f32 %v2606, %v2586
        %v2619 = vmul.f32 %v2607, %v2587
        %v2620 = vmul.f32 %v2608, %v2588
        %v2621 = vmul.f32 %v2609, %v2589
        %v2622 = vmul.f32 %v2610, %v2590
        %v2623 = vpack.c.bf16 %v2611, %v2611
        %v2624 = vpack.c.bf16 %v2612, %v2612
        %v2625 = vpack.c.bf16 %v2613, %v2613
        %v2626 = vpack.c.bf16 %v2614, %v2614
        %v2627 = vpack.c.bf16 %v2615, %v2615
        %v2628 = vpack.c.bf16 %v2616, %v2616
        %v2629 = vpack.c.bf16 %v2617, %v2617
        %v2630 = vpack.c.bf16 %v2618, %v2618
        %v2631 = vpack.c.bf16 %v2619, %v2619
        %v2632 = vpack.c.bf16 %v2620, %v2620
        %v2633 = vpack.c.bf16 %v2621, %v2621
        %v2634 = vpack.c.bf16 %v2622, %v2622
        %v2647 = vrot.slane %v1994, 6
        %v2648 = vrot.slane %v1995, 6
        %v2649 = vrot.slane %v1996, 6
        %v2650 = vrot.slane %v1997, 6
        %v2651 = vrot.slane %v1998, 6
        %v2652 = vrot.slane %v1999, 6
        %v2653 = vrot.slane %v2000, 6
        %v2654 = vrot.slane %v2001, 6
        %v2655 = vrot.slane %v2002, 6
        %v2656 = vrot.slane %v2003, 6
        %v2657 = vrot.slane %v2004, 6
        %v2658 = vrot.slane %v2005, 6
        %v2661 = vsel %vm453, %v2623, %v2647
        %v2664 = vsel %vm453, %v2624, %v2648
        %v2667 = vsel %vm453, %v2625, %v2649
        %v2670 = vsel %vm453, %v2626, %v2650
        %v2673 = vsel %vm453, %v2627, %v2651
        %v2676 = vsel %vm453, %v2628, %v2652
        %v2679 = vsel %vm453, %v2629, %v2653
        %v2682 = vsel %vm453, %v2630, %v2654
        %v2685 = vsel %vm453, %v2631, %v2655
        %v2688 = vsel %vm453, %v2632, %v2656
        %v2691 = vsel %vm453, %v2633, %v2657
        %v2694 = vsel %vm453, %v2634, %v2658
        %v2695 = vsel %vm1163, %v2661, 0
        %v2697 = vsel %vm1163, %v2664, 0
        %v2699 = vsel %vm1163, %v2667, 0
        %v2701 = vsel %vm1163, %v2670, 0
        %v2703 = vsel %vm1163, %v2673, 0
        %v2705 = vsel %vm1163, %v2676, 0
        %v2707 = vsel %vm1163, %v2679, 0
        %v2709 = vsel %vm1163, %v2682, 0
        %v2711 = vsel %vm1163, %v2685, 0
        %v2713 = vsel %vm1163, %v2688, 0
        %v2715 = vsel %vm1163, %v2691, 0
        %v2717 = vsel %vm1163, %v2694, 0
        %2719 = vmatprep.subr.bf16.mxu0 0
        %2720 = vmatpush1.bf16.msra.mxu0 0
        %2721 = vmatprep.subr.bf16.mxu0 0
        %2722 = vmatpush1.bf16.msra.mxu0 0
        %2723 = vmatprep.subr.bf16.mxu0 0
        %2724 = vmatpush1.bf16.msra.mxu0 0
        %2725 = vmatprep.subr.bf16.mxu0 0
        %2726 = vmatpush1.bf16.msra.mxu0 0
        %2727 = vmatprep.subr.bf16.mxu0 0
        %2728 = vmatpush1.bf16.msra.mxu0 0
        %2729 = vmatprep.subr.bf16.mxu0 0
        %2730 = vmatpush1.bf16.msra.mxu0 0
        %2731 = vmatprep.subr.bf16.mxu0 0
        %2732 = vmatpush1.bf16.msra.mxu0 0
        %2733 = vmatprep.subr.bf16.mxu0 %v2697
        %2734 = vmatpush1.bf16.msra.mxu0 %v2695
        %2735 = vmatprep.subr.bf16.mxu0 0
        %2736 = vmatpush2.bf16.msra.mxu0 0
        %2737 = vmatprep.subr.bf16.mxu0 0
        %2738 = vmatpush2.bf16.msra.mxu0 0
        %2739 = vmatprep.subr.bf16.mxu0 0
        %2740 = vmatpush2.bf16.msra.mxu0 0
        %2741 = vmatprep.subr.bf16.mxu0 0
        %2742 = vmatpush2.bf16.msra.mxu0 0
        %2743 = vmatprep.subr.bf16.mxu0 0
        %2744 = vmatpush2.bf16.msra.mxu0 0
        %2745 = vmatprep.subr.bf16.mxu0 0
        %2746 = vmatpush2.bf16.msra.mxu0 0
        %2747 = vmatprep.subr.bf16.mxu0 0
        %2748 = vmatpush2.bf16.msra.mxu0 0
        %2749 = vmatprep.subr.bf16.mxu0 0
        %2750 = vmatpush2.bf16.msra.mxu0 0
        %2751 = vmatprep.mubr.bf16.mxu0 0
        %2752 = vmatmul.mubr.bf16.gmra.mxu0 %v1161
        %v2753 = vpop.f32.mrf.mxu0
        %v2754 = vadd.f32 0.0, %v2753
        %v2755 = vpop.f32.mrf.mxu0
        %v2756 = vadd.f32 0.0, %v2755
        %v2757 = vpop.f32.mrf.mxu0
        %v2758 = vadd.f32 0.0, %v2757
        %v2759 = vpop.f32.mrf.mxu0
        %v2760 = vadd.f32 0.0, %v2759
        %2761 = vdwg.mxu0
        %2762 = vmatprep.subr.bf16.mxu0 0
        %2763 = vmatpush1.bf16.msra.mxu0 0
        %2764 = vmatprep.subr.bf16.mxu0 0
        %2765 = vmatpush1.bf16.msra.mxu0 0
        %2766 = vmatprep.subr.bf16.mxu0 0
        %2767 = vmatpush1.bf16.msra.mxu0 0
        %2768 = vmatprep.subr.bf16.mxu0 0
        %2769 = vmatpush1.bf16.msra.mxu0 0
        %2770 = vmatprep.subr.bf16.mxu0 0
        %2771 = vmatpush1.bf16.msra.mxu0 0
        %2772 = vmatprep.subr.bf16.mxu0 0
        %2773 = vmatpush1.bf16.msra.mxu0 0
        %2774 = vmatprep.subr.bf16.mxu0 0
        %2775 = vmatpush1.bf16.msra.mxu0 0
        %2776 = vmatprep.subr.bf16.mxu0 %v2701
        %2777 = vmatpush1.bf16.msra.mxu0 %v2699
        %2778 = vmatprep.subr.bf16.mxu0 0
        %2779 = vmatpush2.bf16.msra.mxu0 0
        %2780 = vmatprep.subr.bf16.mxu0 0
        %2781 = vmatpush2.bf16.msra.mxu0 0
        %2782 = vmatprep.subr.bf16.mxu0 0
        %2783 = vmatpush2.bf16.msra.mxu0 0
        %2784 = vmatprep.subr.bf16.mxu0 0
        %2785 = vmatpush2.bf16.msra.mxu0 0
        %2786 = vmatprep.subr.bf16.mxu0 0
        %2787 = vmatpush2.bf16.msra.mxu0 0
        %2788 = vmatprep.subr.bf16.mxu0 0
        %2789 = vmatpush2.bf16.msra.mxu0 0
        %2790 = vmatprep.subr.bf16.mxu0 0
        %2791 = vmatpush2.bf16.msra.mxu0 0
        %2792 = vmatprep.subr.bf16.mxu0 0
        %2793 = vmatpush2.bf16.msra.mxu0 0
        %2794 = vmatprep.mubr.bf16.mxu0 0
        %2795 = vmatmul.mubr.bf16.gmra.mxu0 %v1161
        %v2796 = vpop.f32.mrf.mxu0
        %v2797 = vadd.f32 0.0, %v2796
        %v2798 = vpop.f32.mrf.mxu0
        %v2799 = vadd.f32 0.0, %v2798
        %v2800 = vpop.f32.mrf.mxu0
        %v2801 = vadd.f32 0.0, %v2800
        %v2802 = vpop.f32.mrf.mxu0
        %v2803 = vadd.f32 0.0, %v2802
        %2804 = vdwg.mxu0
        %2805 = vmatprep.subr.bf16.mxu0 0
        %2806 = vmatpush1.bf16.msra.mxu0 0
        %2807 = vmatprep.subr.bf16.mxu0 0
        %2808 = vmatpush1.bf16.msra.mxu0 0
        %2809 = vmatprep.subr.bf16.mxu0 0
        %2810 = vmatpush1.bf16.msra.mxu0 0
        %2811 = vmatprep.subr.bf16.mxu0 0
        %2812 = vmatpush1.bf16.msra.mxu0 0
        %2813 = vmatprep.subr.bf16.mxu0 0
        %2814 = vmatpush1.bf16.msra.mxu0 0
        %2815 = vmatprep.subr.bf16.mxu0 0
        %2816 = vmatpush1.bf16.msra.mxu0 0
        %2817 = vmatprep.subr.bf16.mxu0 0
        %2818 = vmatpush1.bf16.msra.mxu0 0
        %2819 = vmatprep.subr.bf16.mxu0 %v2705
        %2820 = vmatpush1.bf16.msra.mxu0 %v2703
        %2821 = vmatprep.subr.bf16.mxu0 0
        %2822 = vmatpush2.bf16.msra.mxu0 0
        %2823 = vmatprep.subr.bf16.mxu0 0
        %2824 = vmatpush2.bf16.msra.mxu0 0
        %2825 = vmatprep.subr.bf16.mxu0 0
        %2826 = vmatpush2.bf16.msra.mxu0 0
        %2827 = vmatprep.subr.bf16.mxu0 0
        %2828 = vmatpush2.bf16.msra.mxu0 0
        %2829 = vmatprep.subr.bf16.mxu0 0
        %2830 = vmatpush2.bf16.msra.mxu0 0
        %2831 = vmatprep.subr.bf16.mxu0 0
        %2832 = vmatpush2.bf16.msra.mxu0 0
        %2833 = vmatprep.subr.bf16.mxu0 0
        %2834 = vmatpush2.bf16.msra.mxu0 0
        %2835 = vmatprep.subr.bf16.mxu0 0
        %2836 = vmatpush2.bf16.msra.mxu0 0
        %2837 = vmatprep.mubr.bf16.mxu0 0
        %2838 = vmatmul.mubr.bf16.gmra.mxu0 %v1161
        %v2839 = vpop.f32.mrf.mxu0
        %v2840 = vadd.f32 0.0, %v2839
        %v2841 = vpop.f32.mrf.mxu0
        %v2842 = vadd.f32 0.0, %v2841
        %v2843 = vpop.f32.mrf.mxu0
        %v2844 = vadd.f32 0.0, %v2843
        %v2845 = vpop.f32.mrf.mxu0
        %v2846 = vadd.f32 0.0, %v2845
        %2847 = vdwg.mxu0
        %2848 = vmatprep.subr.bf16.mxu0 0
        %2849 = vmatpush1.bf16.msra.mxu0 0
        %2850 = vmatprep.subr.bf16.mxu0 0
        %2851 = vmatpush1.bf16.msra.mxu0 0
        %2852 = vmatprep.subr.bf16.mxu0 0
        %2853 = vmatpush1.bf16.msra.mxu0 0
        %2854 = vmatprep.subr.bf16.mxu0 0
        %2855 = vmatpush1.bf16.msra.mxu0 0
        %2856 = vmatprep.subr.bf16.mxu0 0
        %2857 = vmatpush1.bf16.msra.mxu0 0
        %2858 = vmatprep.subr.bf16.mxu0 0
        %2859 = vmatpush1.bf16.msra.mxu0 0
        %2860 = vmatprep.subr.bf16.mxu0 0
        %2861 = vmatpush1.bf16.msra.mxu0 0
        %2862 = vmatprep.subr.bf16.mxu0 %v2709
        %2863 = vmatpush1.bf16.msra.mxu0 %v2707
        %2864 = vmatprep.subr.bf16.mxu0 0
        %2865 = vmatpush2.bf16.msra.mxu0 0
        %2866 = vmatprep.subr.bf16.mxu0 0
        %2867 = vmatpush2.bf16.msra.mxu0 0
        %2868 = vmatprep.subr.bf16.mxu0 0
        %2869 = vmatpush2.bf16.msra.mxu0 0
        %2870 = vmatprep.subr.bf16.mxu0 0
        %2871 = vmatpush2.bf16.msra.mxu0 0
        %2872 = vmatprep.subr.bf16.mxu0 0
        %2873 = vmatpush2.bf16.msra.mxu0 0
        %2874 = vmatprep.subr.bf16.mxu0 0
        %2875 = vmatpush2.bf16.msra.mxu0 0
        %2876 = vmatprep.subr.bf16.mxu0 0
        %2877 = vmatpush2.bf16.msra.mxu0 0
        %2878 = vmatprep.subr.bf16.mxu0 0
        %2879 = vmatpush2.bf16.msra.mxu0 0
        %2880 = vmatprep.mubr.bf16.mxu0 0
        %2881 = vmatmul.mubr.bf16.gmra.mxu0 %v1161
        %v2882 = vpop.f32.mrf.mxu0
        %v2883 = vadd.f32 0.0, %v2882
        %v2884 = vpop.f32.mrf.mxu0
        %v2885 = vadd.f32 0.0, %v2884
        %v2886 = vpop.f32.mrf.mxu0
        %v2887 = vadd.f32 0.0, %v2886
        %v2888 = vpop.f32.mrf.mxu0
        %v2889 = vadd.f32 0.0, %v2888
        %2890 = vdwg.mxu0
        %2891 = vmatprep.subr.bf16.mxu0 0
        %2892 = vmatpush1.bf16.msra.mxu0 0
        %2893 = vmatprep.subr.bf16.mxu0 0
        %2894 = vmatpush1.bf16.msra.mxu0 0
        %2895 = vmatprep.subr.bf16.mxu0 0
        %2896 = vmatpush1.bf16.msra.mxu0 0
        %2897 = vmatprep.subr.bf16.mxu0 0
        %2898 = vmatpush1.bf16.msra.mxu0 0
        %2899 = vmatprep.subr.bf16.mxu0 0
        %2900 = vmatpush1.bf16.msra.mxu0 0
        %2901 = vmatprep.subr.bf16.mxu0 0
        %2902 = vmatpush1.bf16.msra.mxu0 0
        %2903 = vmatprep.subr.bf16.mxu0 0
        %2904 = vmatpush1.bf16.msra.mxu0 0
        %2905 = vmatprep.subr.bf16.mxu0 %v2713
        %2906 = vmatpush1.bf16.msra.mxu0 %v2711
        %2907 = vmatprep.subr.bf16.mxu0 0
        %2908 = vmatpush2.bf16.msra.mxu0 0
        %2909 = vmatprep.subr.bf16.mxu0 0
        %2910 = vmatpush2.bf16.msra.mxu0 0
        %2911 = vmatprep.subr.bf16.mxu0 0
        %2912 = vmatpush2.bf16.msra.mxu0 0
        %2913 = vmatprep.subr.bf16.mxu0 0
        %2914 = vmatpush2.bf16.msra.mxu0 0
        %2915 = vmatprep.subr.bf16.mxu0 0
        %2916 = vmatpush2.bf16.msra.mxu0 0
        %2917 = vmatprep.subr.bf16.mxu0 0
        %2918 = vmatpush2.bf16.msra.mxu0 0
        %2919 = vmatprep.subr.bf16.mxu0 0
        %2920 = vmatpush2.bf16.msra.mxu0 0
        %2921 = vmatprep.subr.bf16.mxu0 0
        %2922 = vmatpush2.bf16.msra.mxu0 0
        %2923 = vmatprep.mubr.bf16.mxu0 0
        %2924 = vmatmul.mubr.bf16.gmra.mxu0 %v1161
        %v2925 = vpop.f32.mrf.mxu0
        %v2926 = vadd.f32 0.0, %v2925
        %v2927 = vpop.f32.mrf.mxu0
        %v2928 = vadd.f32 0.0, %v2927
        %v2929 = vpop.f32.mrf.mxu0
        %v2930 = vadd.f32 0.0, %v2929
        %v2931 = vpop.f32.mrf.mxu0
        %v2932 = vadd.f32 0.0, %v2931
        %2933 = vdwg.mxu0
        %2934 = vmatprep.subr.bf16.mxu0 0
        %2935 = vmatpush1.bf16.msra.mxu0 0
        %2936 = vmatprep.subr.bf16.mxu0 0
        %2937 = vmatpush1.bf16.msra.mxu0 0
        %2938 = vmatprep.subr.bf16.mxu0 0
        %2939 = vmatpush1.bf16.msra.mxu0 0
        %2940 = vmatprep.subr.bf16.mxu0 0
        %2941 = vmatpush1.bf16.msra.mxu0 0
        %2942 = vmatprep.subr.bf16.mxu0 0
        %2943 = vmatpush1.bf16.msra.mxu0 0
        %2944 = vmatprep.subr.bf16.mxu0 0
        %2945 = vmatpush1.bf16.msra.mxu0 0
        %2946 = vmatprep.subr.bf16.mxu0 0
        %2947 = vmatpush1.bf16.msra.mxu0 0
        %2948 = vmatprep.subr.bf16.mxu0 %v2717
        %2949 = vmatpush1.bf16.msra.mxu0 %v2715
        %2950 = vmatprep.subr.bf16.mxu0 0
        %2951 = vmatpush2.bf16.msra.mxu0 0
        %2952 = vmatprep.subr.bf16.mxu0 0
        %2953 = vmatpush2.bf16.msra.mxu0 0
        %2954 = vmatprep.subr.bf16.mxu0 0
        %2955 = vmatpush2.bf16.msra.mxu0 0
        %2956 = vmatprep.subr.bf16.mxu0 0
        %2957 = vmatpush2.bf16.msra.mxu0 0
        %2958 = vmatprep.subr.bf16.mxu0 0
        %2959 = vmatpush2.bf16.msra.mxu0 0
        %2960 = vmatprep.subr.bf16.mxu0 0
        %2961 = vmatpush2.bf16.msra.mxu0 0
        %2962 = vmatprep.subr.bf16.mxu0 0
        %2963 = vmatpush2.bf16.msra.mxu0 0
        %2964 = vmatprep.subr.bf16.mxu0 0
        %2965 = vmatpush2.bf16.msra.mxu0 0
        %2966 = vmatprep.mubr.bf16.mxu0 0
        %2967 = vmatmul.mubr.bf16.gmra.mxu0 %v1161
        %v2968 = vpop.f32.mrf.mxu0
        %v2969 = vadd.f32 0.0, %v2968
        %v2970 = vpop.f32.mrf.mxu0
        %v2971 = vadd.f32 0.0, %v2970
        %v2972 = vpop.f32.mrf.mxu0
        %v2973 = vadd.f32 0.0, %v2972
        %v2974 = vpop.f32.mrf.mxu0
        %v2975 = vadd.f32 0.0, %v2974
        %2976 = vdwg.mxu0
        %v2977 = vadd.f32 %v2754, %v1449
        %v2978 = vadd.f32 %v2756, %v1449
        %v2979 = vadd.f32 %v2797, %v1449
        %v2980 = vadd.f32 %v2799, %v1449
        %v2981 = vadd.f32 %v2840, %v1449
        %v2982 = vadd.f32 %v2842, %v1449
        %v2983 = vadd.f32 %v2883, %v1449
        %v2984 = vadd.f32 %v2885, %v1449
        %v2985 = vadd.f32 %v2926, %v1449
        %v2986 = vadd.f32 %v2928, %v1449
        %v2987 = vadd.f32 %v2969, %v1449
        %v2988 = vadd.f32 %v2971, %v1449
        %v2989 = vxor.u32 %v2977, 2147483648
        %v2990 = vxor.u32 %v2978, 2147483648
        %v2991 = vxor.u32 %v2979, 2147483648
        %v2992 = vxor.u32 %v2980, 2147483648
        %v2993 = vxor.u32 %v2981, 2147483648
        %v2994 = vxor.u32 %v2982, 2147483648
        %v2995 = vxor.u32 %v2983, 2147483648
        %v2996 = vxor.u32 %v2984, 2147483648
        %v2997 = vxor.u32 %v2985, 2147483648
        %v2998 = vxor.u32 %v2986, 2147483648
        %v2999 = vxor.u32 %v2987, 2147483648
        %v3000 = vxor.u32 %v2988, 2147483648
        %v3001 = vmul.f32 %v2989, 1.442695
        %v3002 = vpow.pop %v3001
        %v3003 = vmul.f32 %v2990, 1.442695
        %v3004 = vpow.pop %v3003
        %v3005 = vmul.f32 %v2991, 1.442695
        %v3006 = vpow.pop %v3005
        %v3007 = vmul.f32 %v2992, 1.442695
        %v3008 = vpow.pop %v3007
        %v3009 = vmul.f32 %v2993, 1.442695
        %v3010 = vpow.pop %v3009
        %v3011 = vmul.f32 %v2994, 1.442695
        %v3012 = vpow.pop %v3011
        %v3013 = vmul.f32 %v2995, 1.442695
        %v3014 = vpow.pop %v3013
        %v3015 = vmul.f32 %v2996, 1.442695
        %v3016 = vpow.pop %v3015
        %v3017 = vmul.f32 %v2997, 1.442695
        %v3018 = vpow.pop %v3017
        %v3019 = vmul.f32 %v2998, 1.442695
        %v3020 = vpow.pop %v3019
        %v3021 = vmul.f32 %v2999, 1.442695
        %v3022 = vpow.pop %v3021
        %v3023 = vmul.f32 %v3000, 1.442695
        %v3024 = vpow.pop %v3023
        %v3025 = vadd.f32 %v3002, 1.0
        %v3026 = vadd.f32 %v3004, 1.0
        %v3027 = vadd.f32 %v3006, 1.0
        %v3028 = vadd.f32 %v3008, 1.0
        %v3029 = vadd.f32 %v3010, 1.0
        %v3030 = vadd.f32 %v3012, 1.0
        %v3031 = vadd.f32 %v3014, 1.0
        %v3032 = vadd.f32 %v3016, 1.0
        %v3033 = vadd.f32 %v3018, 1.0
        %v3034 = vadd.f32 %v3020, 1.0
        %v3035 = vadd.f32 %v3022, 1.0
        %v3036 = vadd.f32 %v3024, 1.0
        %v3037 = vrcp.pop %v3025
        %v3038 = vmul.f32 1.0, %v3037
        %v3039 = vrcp.pop %v3026
        %v3040 = vmul.f32 1.0, %v3039
        %v3041 = vrcp.pop %v3027
        %v3042 = vmul.f32 1.0, %v3041
        %v3043 = vrcp.pop %v3028
        %v3044 = vmul.f32 1.0, %v3043
        %v3045 = vrcp.pop %v3029
        %v3046 = vmul.f32 1.0, %v3045
        %v3047 = vrcp.pop %v3030
        %v3048 = vmul.f32 1.0, %v3047
        %v3049 = vrcp.pop %v3031
        %v3050 = vmul.f32 1.0, %v3049
        %v3051 = vrcp.pop %v3032
        %v3052 = vmul.f32 1.0, %v3051
        %v3053 = vrcp.pop %v3033
        %v3054 = vmul.f32 1.0, %v3053
        %v3055 = vrcp.pop %v3034
        %v3056 = vmul.f32 1.0, %v3055
        %v3057 = vrcp.pop %v3035
        %v3058 = vmul.f32 1.0, %v3057
        %v3059 = vrcp.pop %v3036
        %v3060 = vmul.f32 1.0, %v3059
        %v3073 = vrot.slane %v1982, 4
        %v3074 = vrot.slane %v1983, 4
        %v3075 = vrot.slane %v1984, 4
        %v3076 = vrot.slane %v1985, 4
        %v3077 = vrot.slane %v1986, 4
        %v3078 = vrot.slane %v1987, 4
        %v3079 = vrot.slane %v1988, 4
        %v3080 = vrot.slane %v1989, 4
        %v3081 = vrot.slane %v1990, 4
        %v3082 = vrot.slane %v1991, 4
        %v3083 = vrot.slane %v1992, 4
        %v3084 = vrot.slane %v1993, 4
        %v3097 = vmul.f32 %v3038, %v3073
        %v3098 = vmul.f32 %v3040, %v3074
        %v3099 = vmul.f32 %v3042, %v3075
        %v3100 = vmul.f32 %v3044, %v3076
        %v3101 = vmul.f32 %v3046, %v3077
        %v3102 = vmul.f32 %v3048, %v3078
        %v3103 = vmul.f32 %v3050, %v3079
        %v3104 = vmul.f32 %v3052, %v3080
        %v3105 = vmul.f32 %v3054, %v3081
        %v3106 = vmul.f32 %v3056, %v3082
        %v3107 = vmul.f32 %v3058, %v3083
        %v3108 = vmul.f32 %v3060, %v3084
        %v3109 = vpack.c.bf16 %v3097, %v3097
        %v3110 = vpack.c.bf16 %v3098, %v3098
        %v3111 = vpack.c.bf16 %v3099, %v3099
        %v3112 = vpack.c.bf16 %v3100, %v3100
        %v3113 = vpack.c.bf16 %v3101, %v3101
        %v3114 = vpack.c.bf16 %v3102, %v3102
        %v3115 = vpack.c.bf16 %v3103, %v3103
        %v3116 = vpack.c.bf16 %v3104, %v3104
        %v3117 = vpack.c.bf16 %v3105, %v3105
        %v3118 = vpack.c.bf16 %v3106, %v3106
        %v3119 = vpack.c.bf16 %v3107, %v3107
        %v3120 = vpack.c.bf16 %v3108, %v3108
        %v3133 = vrot.slane %v3109, 2
        %v3134 = vrot.slane %v3110, 2
        %v3135 = vrot.slane %v3111, 2
        %v3136 = vrot.slane %v3112, 2
        %v3137 = vrot.slane %v3113, 2
        %v3138 = vrot.slane %v3114, 2
        %v3139 = vrot.slane %v3115, 2
        %v3140 = vrot.slane %v3116, 2
        %v3141 = vrot.slane %v3117, 2
        %v3142 = vrot.slane %v3118, 2
        %v3143 = vrot.slane %v3119, 2
        %v3144 = vrot.slane %v3120, 2
        %v3146 = vsel %vm453, %v3133, 0
        %v3149 = vsel %vm453, %v3134, 0
        %v3152 = vsel %vm453, %v3135, 0
        %v3155 = vsel %vm453, %v3136, 0
        %v3158 = vsel %vm453, %v3137, 0
        %v3161 = vsel %vm453, %v3138, 0
        %v3164 = vsel %vm453, %v3139, 0
        %v3167 = vsel %vm453, %v3140, 0
        %v3170 = vsel %vm453, %v3141, 0
        %v3173 = vsel %vm453, %v3142, 0
        %v3176 = vsel %vm453, %v3143, 0
        %v3179 = vsel %vm453, %v3144, 0
        %3181 = vmatprep.subr.bf16.mxu0 0
        %3182 = vmatpush1.bf16.msra.mxu0 0
        %3183 = vmatprep.subr.bf16.mxu0 0
        %3184 = vmatpush1.bf16.msra.mxu0 0
        %3185 = vmatprep.subr.bf16.mxu0 0
        %3186 = vmatpush1.bf16.msra.mxu0 0
        %3187 = vmatprep.subr.bf16.mxu0 0
        %3188 = vmatpush1.bf16.msra.mxu0 0
        %3189 = vmatprep.subr.bf16.mxu0 0
        %3190 = vmatpush1.bf16.msra.mxu0 0
        %3191 = vmatprep.subr.bf16.mxu0 0
        %3192 = vmatpush1.bf16.msra.mxu0 0
        %3193 = vmatprep.subr.bf16.mxu0 0
        %3194 = vmatpush1.bf16.msra.mxu0 0
        %3195 = vmatprep.subr.bf16.mxu0 %v3149
        %3196 = vmatpush1.bf16.msra.mxu0 %v3146
        %3197 = vmatprep.subr.bf16.mxu0 0
        %3198 = vmatpush2.bf16.msra.mxu0 0
        %3199 = vmatprep.subr.bf16.mxu0 0
        %3200 = vmatpush2.bf16.msra.mxu0 0
        %3201 = vmatprep.subr.bf16.mxu0 0
        %3202 = vmatpush2.bf16.msra.mxu0 0
        %3203 = vmatprep.subr.bf16.mxu0 0
        %3204 = vmatpush2.bf16.msra.mxu0 0
        %3205 = vmatprep.subr.bf16.mxu0 0
        %3206 = vmatpush2.bf16.msra.mxu0 0
        %3207 = vmatprep.subr.bf16.mxu0 0
        %3208 = vmatpush2.bf16.msra.mxu0 0
        %3209 = vmatprep.subr.bf16.mxu0 0
        %3210 = vmatpush2.bf16.msra.mxu0 0
        %3211 = vmatprep.subr.bf16.mxu0 0
        %3212 = vmatpush2.bf16.msra.mxu0 0
        %3213 = vmatprep.mubr.bf16.mxu0 0
        %3214 = vmatmul.mubr.bf16.gmra.mxu0 %v1596
        %v3215 = vpop.f32.mrf.mxu0
        %v3216 = vadd.f32 0.0, %v3215
        %v3217 = vpop.f32.mrf.mxu0
        %v3218 = vadd.f32 0.0, %v3217
        %v3219 = vpop.f32.mrf.mxu0
        %v3220 = vpop.f32.mrf.mxu0
        %3221 = vdwg.mxu0
        %3222 = vmatprep.subr.bf16.mxu0 0
        %3223 = vmatpush1.bf16.msra.mxu0 0
        %3224 = vmatprep.subr.bf16.mxu0 0
        %3225 = vmatpush1.bf16.msra.mxu0 0
        %3226 = vmatprep.subr.bf16.mxu0 0
        %3227 = vmatpush1.bf16.msra.mxu0 0
        %3228 = vmatprep.subr.bf16.mxu0 0
        %3229 = vmatpush1.bf16.msra.mxu0 0
        %3230 = vmatprep.subr.bf16.mxu0 0
        %3231 = vmatpush1.bf16.msra.mxu0 0
        %3232 = vmatprep.subr.bf16.mxu0 0
        %3233 = vmatpush1.bf16.msra.mxu0 0
        %3234 = vmatprep.subr.bf16.mxu0 0
        %3235 = vmatpush1.bf16.msra.mxu0 0
        %3236 = vmatprep.subr.bf16.mxu0 %v3155
        %3237 = vmatpush1.bf16.msra.mxu0 %v3152
        %3238 = vmatprep.subr.bf16.mxu0 0
        %3239 = vmatpush2.bf16.msra.mxu0 0
        %3240 = vmatprep.subr.bf16.mxu0 0
        %3241 = vmatpush2.bf16.msra.mxu0 0
        %3242 = vmatprep.subr.bf16.mxu0 0
        %3243 = vmatpush2.bf16.msra.mxu0 0
        %3244 = vmatprep.subr.bf16.mxu0 0
        %3245 = vmatpush2.bf16.msra.mxu0 0
        %3246 = vmatprep.subr.bf16.mxu0 0
        %3247 = vmatpush2.bf16.msra.mxu0 0
        %3248 = vmatprep.subr.bf16.mxu0 0
        %3249 = vmatpush2.bf16.msra.mxu0 0
        %3250 = vmatprep.subr.bf16.mxu0 0
        %3251 = vmatpush2.bf16.msra.mxu0 0
        %3252 = vmatprep.subr.bf16.mxu0 0
        %3253 = vmatpush2.bf16.msra.mxu0 0
        %3254 = vmatprep.mubr.bf16.mxu0 0
        %3255 = vmatmul.mubr.bf16.gmra.mxu0 %v1596
        %v3256 = vpop.f32.mrf.mxu0
        %v3257 = vadd.f32 0.0, %v3256
        %v3258 = vpop.f32.mrf.mxu0
        %v3259 = vadd.f32 0.0, %v3258
        %v3260 = vpop.f32.mrf.mxu0
        %v3261 = vpop.f32.mrf.mxu0
        %3262 = vdwg.mxu0
        %3263 = vmatprep.subr.bf16.mxu0 0
        %3264 = vmatpush1.bf16.msra.mxu0 0
        %3265 = vmatprep.subr.bf16.mxu0 0
        %3266 = vmatpush1.bf16.msra.mxu0 0
        %3267 = vmatprep.subr.bf16.mxu0 0
        %3268 = vmatpush1.bf16.msra.mxu0 0
        %3269 = vmatprep.subr.bf16.mxu0 0
        %3270 = vmatpush1.bf16.msra.mxu0 0
        %3271 = vmatprep.subr.bf16.mxu0 0
        %3272 = vmatpush1.bf16.msra.mxu0 0
        %3273 = vmatprep.subr.bf16.mxu0 0
        %3274 = vmatpush1.bf16.msra.mxu0 0
        %3275 = vmatprep.subr.bf16.mxu0 0
        %3276 = vmatpush1.bf16.msra.mxu0 0
        %3277 = vmatprep.subr.bf16.mxu0 %v3161
        %3278 = vmatpush1.bf16.msra.mxu0 %v3158
        %3279 = vmatprep.subr.bf16.mxu0 0
        %3280 = vmatpush2.bf16.msra.mxu0 0
        %3281 = vmatprep.subr.bf16.mxu0 0
        %3282 = vmatpush2.bf16.msra.mxu0 0
        %3283 = vmatprep.subr.bf16.mxu0 0
        %3284 = vmatpush2.bf16.msra.mxu0 0
        %3285 = vmatprep.subr.bf16.mxu0 0
        %3286 = vmatpush2.bf16.msra.mxu0 0
        %3287 = vmatprep.subr.bf16.mxu0 0
        %3288 = vmatpush2.bf16.msra.mxu0 0
        %3289 = vmatprep.subr.bf16.mxu0 0
        %3290 = vmatpush2.bf16.msra.mxu0 0
        %3291 = vmatprep.subr.bf16.mxu0 0
        %3292 = vmatpush2.bf16.msra.mxu0 0
        %3293 = vmatprep.subr.bf16.mxu0 0
        %3294 = vmatpush2.bf16.msra.mxu0 0
        %3295 = vmatprep.mubr.bf16.mxu0 0
        %3296 = vmatmul.mubr.bf16.gmra.mxu0 %v1596
        %v3297 = vpop.f32.mrf.mxu0
        %v3298 = vadd.f32 0.0, %v3297
        %v3299 = vpop.f32.mrf.mxu0
        %v3300 = vadd.f32 0.0, %v3299
        %v3301 = vpop.f32.mrf.mxu0
        %v3302 = vpop.f32.mrf.mxu0
        %3303 = vdwg.mxu0
        %3304 = vmatprep.subr.bf16.mxu0 0
        %3305 = vmatpush1.bf16.msra.mxu0 0
        %3306 = vmatprep.subr.bf16.mxu0 0
        %3307 = vmatpush1.bf16.msra.mxu0 0
        %3308 = vmatprep.subr.bf16.mxu0 0
        %3309 = vmatpush1.bf16.msra.mxu0 0
        %3310 = vmatprep.subr.bf16.mxu0 0
        %3311 = vmatpush1.bf16.msra.mxu0 0
        %3312 = vmatprep.subr.bf16.mxu0 0
        %3313 = vmatpush1.bf16.msra.mxu0 0
        %3314 = vmatprep.subr.bf16.mxu0 0
        %3315 = vmatpush1.bf16.msra.mxu0 0
        %3316 = vmatprep.subr.bf16.mxu0 0
        %3317 = vmatpush1.bf16.msra.mxu0 0
        %3318 = vmatprep.subr.bf16.mxu0 %v3167
        %3319 = vmatpush1.bf16.msra.mxu0 %v3164
        %3320 = vmatprep.subr.bf16.mxu0 0
        %3321 = vmatpush2.bf16.msra.mxu0 0
        %3322 = vmatprep.subr.bf16.mxu0 0
        %3323 = vmatpush2.bf16.msra.mxu0 0
        %3324 = vmatprep.subr.bf16.mxu0 0
        %3325 = vmatpush2.bf16.msra.mxu0 0
        %3326 = vmatprep.subr.bf16.mxu0 0
        %3327 = vmatpush2.bf16.msra.mxu0 0
        %3328 = vmatprep.subr.bf16.mxu0 0
        %3329 = vmatpush2.bf16.msra.mxu0 0
        %3330 = vmatprep.subr.bf16.mxu0 0
        %3331 = vmatpush2.bf16.msra.mxu0 0
        %3332 = vmatprep.subr.bf16.mxu0 0
        %3333 = vmatpush2.bf16.msra.mxu0 0
        %3334 = vmatprep.subr.bf16.mxu0 0
        %3335 = vmatpush2.bf16.msra.mxu0 0
        %3336 = vmatprep.mubr.bf16.mxu0 0
        %3337 = vmatmul.mubr.bf16.gmra.mxu0 %v1596
        %v3338 = vpop.f32.mrf.mxu0
        %v3339 = vadd.f32 0.0, %v3338
        %v3340 = vpop.f32.mrf.mxu0
        %v3341 = vadd.f32 0.0, %v3340
        %v3342 = vpop.f32.mrf.mxu0
        %v3343 = vpop.f32.mrf.mxu0
        %3344 = vdwg.mxu0
        %3345 = vmatprep.subr.bf16.mxu0 0
        %3346 = vmatpush1.bf16.msra.mxu0 0
        %3347 = vmatprep.subr.bf16.mxu0 0
        %3348 = vmatpush1.bf16.msra.mxu0 0
        %3349 = vmatprep.subr.bf16.mxu0 0
        %3350 = vmatpush1.bf16.msra.mxu0 0
        %3351 = vmatprep.subr.bf16.mxu0 0
        %3352 = vmatpush1.bf16.msra.mxu0 0
        %3353 = vmatprep.subr.bf16.mxu0 0
        %3354 = vmatpush1.bf16.msra.mxu0 0
        %3355 = vmatprep.subr.bf16.mxu0 0
        %3356 = vmatpush1.bf16.msra.mxu0 0
        %3357 = vmatprep.subr.bf16.mxu0 0
        %3358 = vmatpush1.bf16.msra.mxu0 0
        %3359 = vmatprep.subr.bf16.mxu0 %v3173
        %3360 = vmatpush1.bf16.msra.mxu0 %v3170
        %3361 = vmatprep.subr.bf16.mxu0 0
        %3362 = vmatpush2.bf16.msra.mxu0 0
        %3363 = vmatprep.subr.bf16.mxu0 0
        %3364 = vmatpush2.bf16.msra.mxu0 0
        %3365 = vmatprep.subr.bf16.mxu0 0
        %3366 = vmatpush2.bf16.msra.mxu0 0
        %3367 = vmatprep.subr.bf16.mxu0 0
        %3368 = vmatpush2.bf16.msra.mxu0 0
        %3369 = vmatprep.subr.bf16.mxu0 0
        %3370 = vmatpush2.bf16.msra.mxu0 0
        %3371 = vmatprep.subr.bf16.mxu0 0
        %3372 = vmatpush2.bf16.msra.mxu0 0
        %3373 = vmatprep.subr.bf16.mxu0 0
        %3374 = vmatpush2.bf16.msra.mxu0 0
        %3375 = vmatprep.subr.bf16.mxu0 0
        %3376 = vmatpush2.bf16.msra.mxu0 0
        %3377 = vmatprep.mubr.bf16.mxu0 0
        %3378 = vmatmul.mubr.bf16.gmra.mxu0 %v1596
        %v3379 = vpop.f32.mrf.mxu0
        %v3380 = vadd.f32 0.0, %v3379
        %v3381 = vpop.f32.mrf.mxu0
        %v3382 = vadd.f32 0.0, %v3381
        %v3383 = vpop.f32.mrf.mxu0
        %v3384 = vpop.f32.mrf.mxu0
        %3385 = vdwg.mxu0
        %3386 = vmatprep.subr.bf16.mxu0 0
        %3387 = vmatpush1.bf16.msra.mxu0 0
        %3388 = vmatprep.subr.bf16.mxu0 0
        %3389 = vmatpush1.bf16.msra.mxu0 0
        %3390 = vmatprep.subr.bf16.mxu0 0
        %3391 = vmatpush1.bf16.msra.mxu0 0
        %3392 = vmatprep.subr.bf16.mxu0 0
        %3393 = vmatpush1.bf16.msra.mxu0 0
        %3394 = vmatprep.subr.bf16.mxu0 0
        %3395 = vmatpush1.bf16.msra.mxu0 0
        %3396 = vmatprep.subr.bf16.mxu0 0
        %3397 = vmatpush1.bf16.msra.mxu0 0
        %3398 = vmatprep.subr.bf16.mxu0 0
        %3399 = vmatpush1.bf16.msra.mxu0 0
        %3400 = vmatprep.subr.bf16.mxu0 %v3179
        %3401 = vmatpush1.bf16.msra.mxu0 %v3176
        %3402 = vmatprep.subr.bf16.mxu0 0
        %3403 = vmatpush2.bf16.msra.mxu0 0
        %3404 = vmatprep.subr.bf16.mxu0 0
        %3405 = vmatpush2.bf16.msra.mxu0 0
        %3406 = vmatprep.subr.bf16.mxu0 0
        %3407 = vmatpush2.bf16.msra.mxu0 0
        %3408 = vmatprep.subr.bf16.mxu0 0
        %3409 = vmatpush2.bf16.msra.mxu0 0
        %3410 = vmatprep.subr.bf16.mxu0 0
        %3411 = vmatpush2.bf16.msra.mxu0 0
        %3412 = vmatprep.subr.bf16.mxu0 0
        %3413 = vmatpush2.bf16.msra.mxu0 0
        %3414 = vmatprep.subr.bf16.mxu0 0
        %3415 = vmatpush2.bf16.msra.mxu0 0
        %3416 = vmatprep.subr.bf16.mxu0 0
        %3417 = vmatpush2.bf16.msra.mxu0 0
        %3418 = vmatprep.mubr.bf16.mxu0 0
        %3419 = vmatmul.mubr.bf16.gmra.mxu0 %v1596
        %v3420 = vpop.f32.mrf.mxu0
        %v3421 = vadd.f32 0.0, %v3420
        %v3422 = vpop.f32.mrf.mxu0
        %v3423 = vadd.f32 0.0, %v3422
        %v3424 = vpop.f32.mrf.mxu0
        %v3425 = vpop.f32.mrf.mxu0
        %3426 = vdwg.mxu0
        %v3427 = vadd.f32 %v2758, %v3216
        %v3428 = vadd.f32 %v2760, %v3218
        %v3429 = vadd.f32 %v2801, %v3257
        %v3430 = vadd.f32 %v2803, %v3259
        %v3431 = vadd.f32 %v2844, %v3298
        %v3432 = vadd.f32 %v2846, %v3300
        %v3433 = vadd.f32 %v2887, %v3339
        %v3434 = vadd.f32 %v2889, %v3341
        %v3435 = vadd.f32 %v2930, %v3380
        %v3436 = vadd.f32 %v2932, %v3382
        %v3437 = vadd.f32 %v2973, %v3421
        %v3438 = vadd.f32 %v2975, %v3423
        %v3439 = vadd.f32 %v3427, %v1895
        %v3440 = vadd.f32 %v3428, %v1895
        %v3441 = vadd.f32 %v3429, %v1895
        %v3442 = vadd.f32 %v3430, %v1895
        %v3443 = vadd.f32 %v3431, %v1895
        %v3444 = vadd.f32 %v3432, %v1895
        %v3445 = vadd.f32 %v3433, %v1895
        %v3446 = vadd.f32 %v3434, %v1895
        %v3447 = vadd.f32 %v3435, %v1895
        %v3448 = vadd.f32 %v3436, %v1895
        %v3449 = vadd.f32 %v3437, %v1895
        %v3450 = vadd.f32 %v3438, %v1895
        %v3451 = vtanh.pop %v3439
        %v3452 = vtanh.pop %v3440
        %v3453 = vtanh.pop %v3441
        %v3454 = vtanh.pop %v3442
        %v3455 = vtanh.pop %v3443
        %v3456 = vtanh.pop %v3444
        %v3457 = vtanh.pop %v3445
        %v3458 = vtanh.pop %v3446
        %v3459 = vtanh.pop %v3447
        %v3460 = vtanh.pop %v3448
        %v3461 = vtanh.pop %v3449
        %v3462 = vtanh.pop %v3450
        %v3463 = vsub.f32 1.0, %v3038
        %v3464 = vsub.f32 1.0, %v3040
        %v3465 = vsub.f32 1.0, %v3042
        %v3466 = vsub.f32 1.0, %v3044
        %v3467 = vsub.f32 1.0, %v3046
        %v3468 = vsub.f32 1.0, %v3048
        %v3469 = vsub.f32 1.0, %v3050
        %v3470 = vsub.f32 1.0, %v3052
        %v3471 = vsub.f32 1.0, %v3054
        %v3472 = vsub.f32 1.0, %v3056
        %v3473 = vsub.f32 1.0, %v3058
        %v3474 = vsub.f32 1.0, %v3060
        %v3475 = vmul.f32 %v3463, %v1982
        %v3476 = vmul.f32 %v3464, %v1983
        %v3477 = vmul.f32 %v3465, %v1984
        %v3478 = vmul.f32 %v3466, %v1985
        %v3479 = vmul.f32 %v3467, %v1986
        %v3480 = vmul.f32 %v3468, %v1987
        %v3481 = vmul.f32 %v3469, %v1988
        %v3482 = vmul.f32 %v3470, %v1989
        %v3483 = vmul.f32 %v3471, %v1990
        %v3484 = vmul.f32 %v3472, %v1991
        %v3485 = vmul.f32 %v3473, %v1992
        %v3486 = vmul.f32 %v3474, %v1993
        %v3487 = vmul.f32 %v3038, %v3451
        %v3488 = vmul.f32 %v3040, %v3452
        %v3489 = vmul.f32 %v3042, %v3453
        %v3490 = vmul.f32 %v3044, %v3454
        %v3491 = vmul.f32 %v3046, %v3455
        %v3492 = vmul.f32 %v3048, %v3456
        %v3493 = vmul.f32 %v3050, %v3457
        %v3494 = vmul.f32 %v3052, %v3458
        %v3495 = vmul.f32 %v3054, %v3459
        %v3496 = vmul.f32 %v3056, %v3460
        %v3497 = vmul.f32 %v3058, %v3461
        %v3498 = vmul.f32 %v3060, %v3462
        %v3499 = vadd.f32 %v3475, %v3487
        %v3500 = vadd.f32 %v3476, %v3488
        %v3501 = vadd.f32 %v3477, %v3489
        %v3502 = vadd.f32 %v3478, %v3490
        %v3503 = vadd.f32 %v3479, %v3491
        %v3504 = vadd.f32 %v3480, %v3492
        %v3505 = vadd.f32 %v3481, %v3493
        %v3506 = vadd.f32 %v3482, %v3494
        %v3507 = vadd.f32 %v3483, %v3495
        %v3508 = vadd.f32 %v3484, %v3496
        %v3509 = vadd.f32 %v3485, %v3497
        %v3510 = vadd.f32 %v3486, %v3498
        %v3511 = vmul.f32 %v3499, %v1969
        %v3512 = vmul.f32 %v3500, %v1969
        %v3513 = vmul.f32 %v3501, %v1969
        %v3514 = vmul.f32 %v3502, %v1969
        %v3515 = vmul.f32 %v3503, %v1969
        %v3516 = vmul.f32 %v3504, %v1969
        %v3517 = vmul.f32 %v3505, %v1969
        %v3518 = vmul.f32 %v3506, %v1969
        %v3519 = vmul.f32 %v3507, %v1969
        %v3520 = vmul.f32 %v3508, %v1969
        %v3521 = vmul.f32 %v3509, %v1969
        %v3522 = vmul.f32 %v3510, %v1969
        %v3523 = vadd.f32 %v3511, %v1982
        %v3524 = vadd.f32 %v3512, %v1983
        %v3525 = vadd.f32 %v3513, %v1984
        %v3526 = vadd.f32 %v3514, %v1985
        %v3527 = vadd.f32 %v3515, %v1986
        %v3528 = vadd.f32 %v3516, %v1987
        %v3529 = vadd.f32 %v3517, %v1988
        %v3530 = vadd.f32 %v3518, %v1989
        %v3531 = vadd.f32 %v3519, %v1990
        %v3532 = vadd.f32 %v3520, %v1991
        %v3533 = vadd.f32 %v3521, %v1992
        %v3534 = vadd.f32 %v3522, %v1993
        %v3547 = vcombine.low %v3523, %v3524
        %v3548 = vcombine.low %v3525, %v3526
        %v3549 = vcombine.low %v3527, %v3528
        %v3550 = vcombine.low %v3529, %v3530
        %v3551 = vcombine.low %v3531, %v3532
        %v3552 = vcombine.low %v3533, %v3534
        %3559 = vst [vmem:[%s404] sm:$0xff] %v3547
        %3560 = vst [vmem:[%s404 + $0x8] sm:$0xff] %v3548
        %3561 = vst [vmem:[%s404 + $0x10] sm:$0xff] %v3549
        %3562 = vst [vmem:[%s404 + $0x18] sm:$0xff] %v3550
        %3563 = vst [vmem:[%s404 + $0x20] sm:$0xff] %v3551
        %3564 = vst [vmem:[%s404 + $0x28] sm:$0xff] %v3552
        %p3565 = scmp.lt.s32.totalorder %s20, 1
        %s3566 = scalar_select %p3565, %s20, 1
        %s3567 = smul.addr %s3566, 12
        %s3568 = smul.addr %s3567, 4
        %s3569 = scalar_lea.vmem %s8, %s3568
        // Predicated region
        $region57: #{graph_reasoning_forward.3} parent=51 // pred_check
          %p3570 = pneg %p236
        $region58: #{graph_reasoning_forward.3} parent=51 // pred_check_branch
          %3572 = sbr.rel (%p3570) target = $region60
        $region59: #{graph_reasoning_forward.3} parent=51 // pred_region
          _
        $region60: #{graph_reasoning_forward.3} parent=51 // pred_fallthru
          _
      $region52: #{graph_reasoning_forward.3} parent=5 // pred_fallthru
        _
      %p3573 = scmp.le.s32.totalorder 2, %s15
      // Predicated region
      $region61: #{graph_reasoning_forward.3} parent=5 // pred_check
        %p3574 = pneg %p3573
      $region62: #{graph_reasoning_forward.3} parent=5 // pred_check_branch
        %3576 = sbr.rel (%p3574) target = $region64
      $region63: #{graph_reasoning_forward.3} parent=5 // pred_region
        %s3577 = ssub.s32 %s15, 2
        // Predicated region
        $region65: #{graph_reasoning_forward.3} parent=63 // pred_check
          %p3578 = pneg %p242
        $region66: #{graph_reasoning_forward.3} parent=63 // pred_check_branch
          %3580 = sbr.rel (%p3578) target = $region68
        $region67: #{graph_reasoning_forward.3} parent=63 // pred_region
          %p3581 = scmp.lt.s32.totalorder %s21, 1
          %s3582 = scalar_select %p3581, %s21, 1
          %s3583 = smul.addr %s3582, 12
          %s3584 = smul.addr %s3583, 4
          %s3585 = scalar_lea.vmem %s8, %s3584
        $region68: #{graph_reasoning_forward.3} parent=63 // pred_fallthru
          _
      $region64: #{graph_reasoning_forward.3} parent=5 // pred_fallthru
        _
    $region6: #{graph_reasoning_forward.3} parent=1 // loop_footer
      %s19 = sadd.s32 1, %s15
    $region7: #{graph_reasoning_forward.3} parent=1 // loop_footer_branch
      %14 = sbr.rel target = $region3
    $region8: #{graph_reasoning_forward.3} parent=1 // loop_exit
      _
    %3586 = vsyncpa [#allocation4], 1
    %s3587 = scalar_lea.sflag [#allocation4], 1
    %3588 = vsyncpa %s3587, 1

</llo_original>
